<compile_context>
chip_gen: v5e
topology: v5e:2x2
jax: 0.10.0
libtpu: 0.0.40
codegen_flags: <defaults>
</compile_context>

<pallas_src>
import functools

import jax
import jax.numpy as jnp
from jax import lax
from jax.experimental import pallas as pl
from jax.experimental.pallas import tpu as pltpu

LANES = 128
# Set to jnp.bfloat16 on v6e/v7x for the fast MXU path (keep f32 accumulation via
# preferred_element_type); float32 kept here for parity with the PyTorch reference.
MXU_DTYPE = jnp.float32

# conv1: 32x32x3 --5x5--> 28x28x6 --pool2--> 14x14x6
H1, W1, CIN1, COUT1 = 32, 32, 3, 6
KH, KW = 5, 5
HO1, WO1 = H1 - KH + 1, W1 - KW + 1            # 28, 28
HP1, WP1 = HO1 // 2, WO1 // 2                  # 14, 14
K1, K1_PAD = KH * KW * CIN1, 128               # 75 -> 128
# conv2: 14x14x6 --5x5--> 10x10x16 --pool2--> 5x5x16
H2, W2, CIN2, COUT2 = HP1, WP1, COUT1, 16
HO2, WO2 = H2 - KH + 1, W2 - KW + 1            # 10, 10
HP2, WP2 = HO2 // 2, WO2 // 2                  # 5, 5
K2, K2_PAD = KH * KW * CIN2, 256               # 150 -> 256
# fc
FC_IN, FC_IN_PAD = COUT2 * HP2 * WP2, 512      # 400 -> 512


# ----------------------------------------------------------------------------
# Kernel 1/2: packed-K conv (single MXU sweep) + bias + ReLU + 2x2/2 max-pool
# ----------------------------------------------------------------------------
def _conv_pool_kernel(x_ref, w_ref, b_ref, o_ref, acc_ref, vmax_ref, *, BT, HO, WO):
    """
    x_ref   : (BT*HO*WO, K_PAD)   im2col patches, K = (tap, cin) packed, zero tail.
    w_ref   : (K_PAD, 128)        packed conv weights (cout in lanes, zero padded).
    b_ref   : (1, 128)            bias (zero padded).
    o_ref   : (BT, HP*WP, 128)    pooled feature map (row = hp*WP + wp).
    acc_ref : (BT*HO*WO, 128) f32 pre-pool conv output scratch.
    vmax_ref: (HP*WO, 128)    f32 vertical-max staging scratch (one image).
    """
    HP, WP = HO // 2, WO // 2

    # conv: one MXU sweep for all BT images (batch folded into M)
    acc_ref[...] = jnp.dot(x_ref[...], w_ref[...],
                           preferred_element_type=jnp.float32)

    bias = b_ref[...]                                     # (1, 128)
    for b in range(BT):
        base = b * HO * WO
        # vertical 2:1 max on contiguous full-width row slabs
        for hp in range(HP):
            top = acc_ref[pl.ds(base + (2 * hp) * WO, WO), :]
            bot = acc_ref[pl.ds(base + (2 * hp + 1) * WO, WO), :]
            vmax_ref[pl.ds(hp * WO, WO), :] = jnp.maximum(top, bot)
        # horizontal 2:1 max: one pair of stride-2 sublane reads for the whole image
        even = vmax_ref[pl.ds(0, HP * WP, stride=2), :]
        odd = vmax_ref[pl.ds(1, HP * WP, stride=2), :]
        pooled = jnp.maximum(even, odd)                   # (HP*WP, 128)
        # bias + ReLU commute with the max; single lane-dense store per image
        o_ref[b, :, :] = jnp.maximum(pooled + bias, 0.0)


def conv_pool(patches, w, b, *, BT, HO, WO):
    """patches: (BP*HO*WO, K_PAD) -> (BP, HP*WP, 128)."""
    M, KPAD = patches.shape
    BP = M // (HO * WO)
    HP, WP = HO // 2, WO // 2
    kernel = functools.partial(_conv_pool_kernel, BT=BT, HO=HO, WO=WO)
    return pl.pallas_call(
        kernel,
        out_shape=jax.ShapeDtypeStruct((BP, HP * WP, LANES), jnp.float32),
        grid_spec=pltpu.PrefetchScalarGridSpec(
            num_scalar_prefetch=0,
            grid=(BP // BT,),
            in_specs=[
                pl.BlockSpec((BT * HO * WO, KPAD), lambda i: (i, 0)),
                pl.BlockSpec((KPAD, LANES), lambda i: (0, 0)),
                pl.BlockSpec((1, LANES), lambda i: (0, 0)),
            ],
            out_specs=pl.BlockSpec((BT, HP * WP, LANES), lambda i: (i, 0, 0)),
            scratch_shapes=[
                pltpu.VMEM((BT * HO * WO, LANES), jnp.float32),
                pltpu.VMEM((HP * WO, LANES), jnp.float32),
            ],
        ),
        compiler_params=pltpu.CompilerParams(
            dimension_semantics=("parallel",),
            vmem_limit_bytes=32 * 1024 * 1024,
        ),
    )(patches, w, b)


# ----------------------------------------------------------------------------
# Kernel 3: fused fc1 -> relu -> fc2 -> relu -> fc3 (single K=512 dot for fc1)
# ----------------------------------------------------------------------------
def _fc_kernel(a_ref, w1_ref, b1_ref, w2_ref, b2_ref, w3_ref, b3_ref, o_ref):
    y = jnp.dot(a_ref[...], w1_ref[...], preferred_element_type=jnp.float32)
    y = jnp.maximum(y + b1_ref[...], 0.0)
    y = jnp.dot(y.astype(MXU_DTYPE), w2_ref[...], preferred_element_type=jnp.float32)
    y = jnp.maximum(y + b2_ref[...], 0.0)
    y = jnp.dot(y.astype(MXU_DTYPE), w3_ref[...], preferred_element_type=jnp.float32)
    o_ref[...] = (y + b3_ref[...]).astype(o_ref.dtype)


def fc_stack(a, w1, b1, w2, b2, w3, b3, *, BT):
    BP = a.shape[0]
    return pl.pallas_call(
        _fc_kernel,
        out_shape=jax.ShapeDtypeStruct((BP, LANES), jnp.float32),
        grid_spec=pltpu.PrefetchScalarGridSpec(
            num_scalar_prefetch=0,
            grid=(BP // BT,),
            in_specs=[
                pl.BlockSpec((BT, FC_IN_PAD), lambda i: (i, 0)),
                pl.BlockSpec((FC_IN_PAD, LANES), lambda i: (0, 0)),
                pl.BlockSpec((1, LANES), lambda i: (0, 0)),
                pl.BlockSpec((LANES, LANES), lambda i: (0, 0)),
                pl.BlockSpec((1, LANES), lambda i: (0, 0)),
                pl.BlockSpec((LANES, LANES), lambda i: (0, 0)),
                pl.BlockSpec((1, LANES), lambda i: (0, 0)),
            ],
            out_specs=pl.BlockSpec((BT, LANES), lambda i: (i, 0)),
        ),
        compiler_params=pltpu.CompilerParams(
            dimension_semantics=("parallel",)),
    )(a, w1, b1, w2, b2, w3, b3)


# ----------------------------------------------------------------------------
# Parameter packing (one-time, at init) and wrapper-side im2col (data movement only)
# ----------------------------------------------------------------------------
def _pad_to(x, shape):
    return jnp.pad(x, [(0, t - s) for s, t in zip(x.shape, shape)])


def prepare_params(raw):
    def pack_conv(w, kpad):
        # (Cout, Cin, KH, KW) -> (kpad, 128), row index = (i*KW + j)*Cin + cin
        cout, cin, kh, kw = w.shape
        wm = jnp.transpose(w, (2, 3, 1, 0)).reshape(kh * kw * cin, cout)
        return _pad_to(wm, (kpad, LANES)).astype(MXU_DTYPE)

    p = {}
    p["conv1_w"] = pack_conv(raw["conv1_w"], K1_PAD)
    p["conv2_w"] = pack_conv(raw["conv2_w"], K2_PAD)
    p["conv1_b"] = _pad_to(raw["conv1_b"].reshape(1, -1), (1, LANES))
    p["conv2_b"] = _pad_to(raw["conv2_b"].reshape(1, -1), (1, LANES))
    # fc1: torch flatten of (16,5,5) is c*25 + s ; the kernel's flatten is s*16 + c.
    w1 = jnp.transpose(raw["fc1_w"].reshape(120, COUT2, HP2 * WP2), (2, 1, 0))
    p["fc1_w"] = _pad_to(w1.reshape(FC_IN, 120), (FC_IN_PAD, LANES)).astype(MXU_DTYPE)
    p["fc1_b"] = _pad_to(raw["fc1_b"].reshape(1, -1), (1, LANES))
    p["fc2_w"] = _pad_to(raw["fc2_w"].T, (LANES, LANES)).astype(MXU_DTYPE)
    p["fc2_b"] = _pad_to(raw["fc2_b"].reshape(1, -1), (1, LANES))
    p["fc3_w"] = _pad_to(raw["fc3_w"].T, (LANES, LANES)).astype(MXU_DTYPE)
    p["fc3_b"] = _pad_to(raw["fc3_b"].reshape(1, -1), (1, LANES))
    return p


def init_params(key):
    def uniform(k, shape, fan_in):
        bound = 1.0 / jnp.sqrt(jnp.array(fan_in, jnp.float32))
        return jax.random.uniform(k, shape, jnp.float32, -bound, bound)

    ks = jax.random.split(key, 10)
    raw = {
        "conv1_w": uniform(ks[0], (6, 3, 5, 5), 3 * 5 * 5),
        "conv1_b": uniform(ks[1], (6,), 3 * 5 * 5),
        "conv2_w": uniform(ks[2], (16, 6, 5, 5), 6 * 5 * 5),
        "conv2_b": uniform(ks[3], (16,), 6 * 5 * 5),
        "fc1_w": uniform(ks[4], (120, 16 * 5 * 5), 16 * 5 * 5),
        "fc1_b": uniform(ks[5], (120,), 16 * 5 * 5),
        "fc2_w": uniform(ks[6], (84, 120), 120),
        "fc2_b": uniform(ks[7], (84,), 120),
        "fc3_w": uniform(ks[8], (10, 84), 84),
        "fc3_b": uniform(ks[9], (10,), 84),
    }
    return raw, prepare_params(raw)


def _im2col(x_nhwc, kh, kw, kpad):
    """(B,H,W,C) -> (B*Ho*Wo, kpad) with patch index = (i*kw + j)*C + c."""
    B, H, W, C = x_nhwc.shape
    ho, wo = H - kh + 1, W - kw + 1
    cols = [x_nhwc[:, i:i + ho, j:j + wo, :] for i in range(kh) for j in range(kw)]
    p = jnp.concatenate(cols, axis=-1)                     # (B, ho, wo, kh*kw*C)
    p = jnp.pad(p, ((0, 0), (0, 0), (0, 0), (0, kpad - kh * kw * C)))
    return p.reshape(B * ho * wo, kpad).astype(MXU_DTYPE)


# ----------------------------------------------------------------------------
# Forward pass (matches PyTorch Net.forward semantics)
# ----------------------------------------------------------------------------
def net_forward(p, x):
    # x: (B, 3, 32, 32) NCHW
    B = x.shape[0]
    BT = min(8, B + (B % 2))                      # even batch tile, <= 8 images/step
    BP = ((B + BT - 1) // BT) * BT
    xp = jnp.pad(x, ((0, BP - B), (0, 0), (0, 0), (0, 0)))
    x_nhwc = jnp.transpose(xp, (0, 2, 3, 1))

    # conv1 + relu + pool : 32x32x3 -> 14x14x6
    p1 = _im2col(x_nhwc, KH, KW, K1_PAD)                            # (BP*784, 128)
    a1 = conv_pool(p1, p["conv1_w"], p["conv1_b"], BT=BT, HO=HO1, WO=WO1)

    # conv2 + relu + pool : 14x14x6 -> 5x5x16
    a1_img = a1[:, :, :CIN2].reshape(BP, H2, W2, CIN2)
    p2 = _im2col(a1_img, KH, KW, K2_PAD)                            # (BP*100, 256)
    a2 = conv_pool(p2, p["conv2_w"], p["conv2_b"], BT=BT, HO=HO2, WO=WO2)

    # flatten (s*16 + c order, matching the fc1_w packing) + fc1/fc2/fc3
    flat = a2[:, :, :COUT2].reshape(BP, FC_IN)
    flat = jnp.pad(flat, ((0, 0), (0, FC_IN_PAD - FC_IN))).astype(MXU_DTYPE)
    logits = fc_stack(flat, p["fc1_w"], p["fc1_b"], p["fc2_w"], p["fc2_b"],
                      p["fc3_w"], p["fc3_b"], BT=BT)
    return logits[:B, :10]


# ----------------------------------------------------------------------------
# Pure-JAX reference (for a correctness sanity check)
# ----------------------------------------------------------------------------
def net_forward_reference(raw, x):
    hp = lax.Precision.HIGHEST

    def conv(y, w, b):
        y = lax.conv_general_dilated(y, w, (1, 1), "VALID",
                                     dimension_numbers=("NCHW", "OIHW", "NCHW"),
                                     precision=hp)
        return y + b.reshape(1, -1, 1, 1)

    def pool(y):
        return lax.reduce_window(y, -jnp.inf, lax.max, (1, 1, 2, 2), (1, 1, 2, 2),
                                 "VALID")

    y = pool(jax.nn.relu(conv(x, raw["conv1_w"], raw["conv1_b"])))
    y = pool(jax.nn.relu(conv(y, raw["conv2_w"], raw["conv2_b"])))
    y = y.reshape(x.shape[0], -1)
    y = jax.nn.relu(jnp.dot(y, raw["fc1_w"].T, precision=hp) + raw["fc1_b"])
    y = jax.nn.relu(jnp.dot(y, raw["fc2_w"].T, precision=hp) + raw["fc2_b"])
    return jnp.dot(y, raw["fc3_w"].T, precision=hp) + raw["fc3_b"]


if __name__ == "__main__":
    key = jax.random.PRNGKey(0)
    k_param, k_x = jax.random.split(key)
    raw, params = init_params(k_param)
    x = jax.random.normal(k_x, (2, 3, 32, 32), jnp.float32)

    fwd = jax.jit(net_forward)
    out = jax.block_until_ready(fwd(params, x))
    assert out.shape == (2, 10) and out.dtype == jnp.float32

    ref = jax.block_until_ready(jax.jit(net_forward_reference)(raw, x))
    assert jnp.allclose(out, ref, atol=2e-2, rtol=1e-2), (out, ref)

    print("KERNEL_OK")
</pallas_src>

<mosaic_0001>
module attributes {stable_mosaic.version = 11 : i64} {
  func.func @_conv_pool_kernel(%arg0: i32, %arg1: memref<1568x128xf32, #tpu.memory_space<vmem>>, %arg2: memref<128x128xf32, #tpu.memory_space<vmem>>, %arg3: memref<1x128xf32, #tpu.memory_space<vmem>>, %arg4: memref<2x196x128xf32, #tpu.memory_space<vmem>>, %arg5: memref<1568x128xf32, #tpu.memory_space<vmem>>, %arg6: memref<392x128xf32, #tpu.memory_space<vmem>>) attributes {dimension_semantics = [#tpu.dimension_semantics<parallel>], iteration_bounds = array<i64: 1>, scalar_prefetch = 0 : i64, scratch_operands = 2 : i64, tpu.core_type = #tpu.core_type<tc>, window_params = [{transform_indices = @transform_0, window_bounds = array<i64: 1568, 128>}, {pipeline_mode = #tpu.pipeline_mode<synchronous>, transform_indices = @transform_1, window_bounds = array<i64: 128, 128>}, {pipeline_mode = #tpu.pipeline_mode<synchronous>, transform_indices = @transform_2, window_bounds = array<i64: 1, 128>}, {transform_indices = @transform_3, window_bounds = array<i64: 2, 196, 128>}]} {
    %c0 = arith.constant 0 : index
    %c0_0 = arith.constant 0 : index
    %0 = vector.load %arg1[%c0, %c0_0] : memref<1568x128xf32, #tpu.memory_space<vmem>>, vector<1568x128xf32>
    %c0_1 = arith.constant 0 : index
    %c0_2 = arith.constant 0 : index
    %1 = vector.load %arg2[%c0_1, %c0_2] : memref<128x128xf32, #tpu.memory_space<vmem>>, vector<128x128xf32>
    %cst = arith.constant dense<0.000000e+00> : vector<1568x128xf32>
    %2 = tpu.matmul %0, %1, %cst {dimension_numbers = #tpu.dot_dimension_numbers<[1], [0], [0], [1], [0, 0, 1, 1], [], []>} : vector<1568x128xf32>, vector<128x128xf32>, vector<1568x128xf32> -> vector<1568x128xf32>
    %c0_3 = arith.constant 0 : index
    %c0_4 = arith.constant 0 : index
    %3 = vector.load %arg5[%c0_3, %c0_4] : memref<1568x128xf32, #tpu.memory_space<vmem>>, vector<1568x128xf32>
    tpu.vector_store %arg5[%c0_3, %c0_4], %2 {strides = array<i32>} : memref<1568x128xf32, #tpu.memory_space<vmem>>, vector<1568x128xf32>,
    %c0_5 = arith.constant 0 : index
    %c0_6 = arith.constant 0 : index
    %4 = vector.load %arg3[%c0_5, %c0_6] : memref<1x128xf32, #tpu.memory_space<vmem>>, vector<1x128xf32>
    %c0_7 = arith.constant 0 : index
    %c0_8 = arith.constant 0 : index
    %5 = vector.load %arg5[%c0_7, %c0_8] : memref<1568x128xf32, #tpu.memory_space<vmem>>, vector<28x128xf32>
    %c28 = arith.constant 28 : index
    %c0_9 = arith.constant 0 : index
    %6 = vector.load %arg5[%c28, %c0_9] : memref<1568x128xf32, #tpu.memory_space<vmem>>, vector<28x128xf32>
    %7 = arith.maximumf %5, %6 : vector<28x128xf32>
    %c0_10 = arith.constant 0 : index
    %c0_11 = arith.constant 0 : index
    %8 = vector.load %arg6[%c0_10, %c0_11] : memref<392x128xf32, #tpu.memory_space<vmem>>, vector<28x128xf32>
    tpu.vector_store %arg6[%c0_10, %c0_11], %7 {strides = array<i32>} : memref<392x128xf32, #tpu.memory_space<vmem>>, vector<28x128xf32>,
    %c56 = arith.constant 56 : index
    %c0_12 = arith.constant 0 : index
    %9 = vector.load %arg5[%c56, %c0_12] : memref<1568x128xf32, #tpu.memory_space<vmem>>, vector<28x128xf32>
    %c84 = arith.constant 84 : index
    %c0_13 = arith.constant 0 : index
    %10 = vector.load %arg5[%c84, %c0_13] : memref<1568x128xf32, #tpu.memory_space<vmem>>, vector<28x128xf32>
    %11 = arith.maximumf %9, %10 : vector<28x128xf32>
    %c28_14 = arith.constant 28 : index
    %c0_15 = arith.constant 0 : index
    %12 = vector.load %arg6[%c28_14, %c0_15] : memref<392x128xf32, #tpu.memory_space<vmem>>, vector<28x128xf32>
    tpu.vector_store %arg6[%c28_14, %c0_15], %11 {strides = array<i32>} : memref<392x128xf32, #tpu.memory_space<vmem>>, vector<28x128xf32>,
    %c112 = arith.constant 112 : index
    %c0_16 = arith.constant 0 : index
    %13 = vector.load %arg5[%c112, %c0_16] : memref<1568x128xf32, #tpu.memory_space<vmem>>, vector<28x128xf32>
    %c140 = arith.constant 140 : index
    %c0_17 = arith.constant 0 : index
    %14 = vector.load %arg5[%c140, %c0_17] : memref<1568x128xf32, #tpu.memory_space<vmem>>, vector<28x128xf32>
    %15 = arith.maximumf %13, %14 : vector<28x128xf32>
    %c56_18 = arith.constant 56 : index
    %c0_19 = arith.constant 0 : index
    %16 = vector.load %arg6[%c56_18, %c0_19] : memref<392x128xf32, #tpu.memory_space<vmem>>, vector<28x128xf32>
    tpu.vector_store %arg6[%c56_18, %c0_19], %15 {strides = array<i32>} : memref<392x128xf32, #tpu.memory_space<vmem>>, vector<28x128xf32>,
    %c168 = arith.constant 168 : index
    %c0_20 = arith.constant 0 : index
    %17 = vector.load %arg5[%c168, %c0_20] : memref<1568x128xf32, #tpu.memory_space<vmem>>, vector<28x128xf32>
    %c196 = arith.constant 196 : index
    %c0_21 = arith.constant 0 : index
    %18 = vector.load %arg5[%c196, %c0_21] : memref<1568x128xf32, #tpu.memory_space<vmem>>, vector<28x128xf32>
    %19 = arith.maximumf %17, %18 : vector<28x128xf32>
    %c84_22 = arith.constant 84 : index
    %c0_23 = arith.constant 0 : index
    %20 = vector.load %arg6[%c84_22, %c0_23] : memref<392x128xf32, #tpu.memory_space<vmem>>, vector<28x128xf32>
    tpu.vector_store %arg6[%c84_22, %c0_23], %19 {strides = array<i32>} : memref<392x128xf32, #tpu.memory_space<vmem>>, vector<28x128xf32>,
    %c224 = arith.constant 224 : index
    %c0_24 = arith.constant 0 : index
    %21 = vector.load %arg5[%c224, %c0_24] : memref<1568x128xf32, #tpu.memory_space<vmem>>, vector<28x128xf32>
    %c252 = arith.constant 252 : index
    %c0_25 = arith.constant 0 : index
    %22 = vector.load %arg5[%c252, %c0_25] : memref<1568x128xf32, #tpu.memory_space<vmem>>, vector<28x128xf32>
    %23 = arith.maximumf %21, %22 : vector<28x128xf32>
    %c112_26 = arith.constant 112 : index
    %c0_27 = arith.constant 0 : index
    %24 = vector.load %arg6[%c112_26, %c0_27] : memref<392x128xf32, #tpu.memory_space<vmem>>, vector<28x128xf32>
    tpu.vector_store %arg6[%c112_26, %c0_27], %23 {strides = array<i32>} : memref<392x128xf32, #tpu.memory_space<vmem>>, vector<28x128xf32>,
    %c280 = arith.constant 280 : index
    %c0_28 = arith.constant 0 : index
    %25 = vector.load %arg5[%c280, %c0_28] : memref<1568x128xf32, #tpu.memory_space<vmem>>, vector<28x128xf32>
    %c308 = arith.constant 308 : index
    %c0_29 = arith.constant 0 : index
    %26 = vector.load %arg5[%c308, %c0_29] : memref<1568x128xf32, #tpu.memory_space<vmem>>, vector<28x128xf32>
    %27 = arith.maximumf %25, %26 : vector<28x128xf32>
    %c140_30 = arith.constant 140 : index
    %c0_31 = arith.constant 0 : index
    %28 = vector.load %arg6[%c140_30, %c0_31] : memref<392x128xf32, #tpu.memory_space<vmem>>, vector<28x128xf32>
    tpu.vector_store %arg6[%c140_30, %c0_31], %27 {strides = array<i32>} : memref<392x128xf32, #tpu.memory_space<vmem>>, vector<28x128xf32>,
    %c336 = arith.constant 336 : index
    %c0_32 = arith.constant 0 : index
    %29 = vector.load %arg5[%c336, %c0_32] : memref<1568x128xf32, #tpu.memory_space<vmem>>, vector<28x128xf32>
    %c364 = arith.constant 364 : index
    %c0_33 = arith.constant 0 : index
    %30 = vector.load %arg5[%c364, %c0_33] : memref<1568x128xf32, #tpu.memory_space<vmem>>, vector<28x128xf32>
    %31 = arith.maximumf %29, %30 : vector<28x128xf32>
    %c168_34 = arith.constant 168 : index
    %c0_35 = arith.constant 0 : index
    %32 = vector.load %arg6[%c168_34, %c0_35] : memref<392x128xf32, #tpu.memory_space<vmem>>, vector<28x128xf32>
    tpu.vector_store %arg6[%c168_34, %c0_35], %31 {strides = array<i32>} : memref<392x128xf32, #tpu.memory_space<vmem>>, vector<28x128xf32>,
    %c392 = arith.constant 392 : index
    %c0_36 = arith.constant 0 : index
    %33 = vector.load %arg5[%c392, %c0_36] : memref<1568x128xf32, #tpu.memory_space<vmem>>, vector<28x128xf32>
    %c420 = arith.constant 420 : index
    %c0_37 = arith.constant 0 : index
    %34 = vector.load %arg5[%c420, %c0_37] : memref<1568x128xf32, #tpu.memory_space<vmem>>, vector<28x128xf32>
    %35 = arith.maximumf %33, %34 : vector<28x128xf32>
    %c196_38 = arith.constant 196 : index
    %c0_39 = arith.constant 0 : index
    %36 = vector.load %arg6[%c196_38, %c0_39] : memref<392x128xf32, #tpu.memory_space<vmem>>, vector<28x128xf32>
    tpu.vector_store %arg6[%c196_38, %c0_39], %35 {strides = array<i32>} : memref<392x128xf32, #tpu.memory_space<vmem>>, vector<28x128xf32>,
    %c448 = arith.constant 448 : index
    %c0_40 = arith.constant 0 : index
    %37 = vector.load %arg5[%c448, %c0_40] : memref<1568x128xf32, #tpu.memory_space<vmem>>, vector<28x128xf32>
    %c476 = arith.constant 476 : index
    %c0_41 = arith.constant 0 : index
    %38 = vector.load %arg5[%c476, %c0_41] : memref<1568x128xf32, #tpu.memory_space<vmem>>, vector<28x128xf32>
    %39 = arith.maximumf %37, %38 : vector<28x128xf32>
    %c224_42 = arith.constant 224 : index
    %c0_43 = arith.constant 0 : index
    %40 = vector.load %arg6[%c224_42, %c0_43] : memref<392x128xf32, #tpu.memory_space<vmem>>, vector<28x128xf32>
    tpu.vector_store %arg6[%c224_42, %c0_43], %39 {strides = array<i32>} : memref<392x128xf32, #tpu.memory_space<vmem>>, vector<28x128xf32>,
    %c504 = arith.constant 504 : index
    %c0_44 = arith.constant 0 : index
    %41 = vector.load %arg5[%c504, %c0_44] : memref<1568x128xf32, #tpu.memory_space<vmem>>, vector<28x128xf32>
    %c532 = arith.constant 532 : index
    %c0_45 = arith.constant 0 : index
    %42 = vector.load %arg5[%c532, %c0_45] : memref<1568x128xf32, #tpu.memory_space<vmem>>, vector<28x128xf32>
    %43 = arith.maximumf %41, %42 : vector<28x128xf32>
    %c252_46 = arith.constant 252 : index
    %c0_47 = arith.constant 0 : index
    %44 = vector.load %arg6[%c252_46, %c0_47] : memref<392x128xf32, #tpu.memory_space<vmem>>, vector<28x128xf32>
    tpu.vector_store %arg6[%c252_46, %c0_47], %43 {strides = array<i32>} : memref<392x128xf32, #tpu.memory_space<vmem>>, vector<28x128xf32>,
    %c560 = arith.constant 560 : index
    %c0_48 = arith.constant 0 : index
    %45 = vector.load %arg5[%c560, %c0_48] : memref<1568x128xf32, #tpu.memory_space<vmem>>, vector<28x128xf32>
    %c588 = arith.constant 588 : index
    %c0_49 = arith.constant 0 : index
    %46 = vector.load %arg5[%c588, %c0_49] : memref<1568x128xf32, #tpu.memory_space<vmem>>, vector<28x128xf32>
    %47 = arith.maximumf %45, %46 : vector<28x128xf32>
    %c280_50 = arith.constant 280 : index
    %c0_51 = arith.constant 0 : index
    %48 = vector.load %arg6[%c280_50, %c0_51] : memref<392x128xf32, #tpu.memory_space<vmem>>, vector<28x128xf32>
    tpu.vector_store %arg6[%c280_50, %c0_51], %47 {strides = array<i32>} : memref<392x128xf32, #tpu.memory_space<vmem>>, vector<28x128xf32>,
    %c616 = arith.constant 616 : index
    %c0_52 = arith.constant 0 : index
    %49 = vector.load %arg5[%c616, %c0_52] : memref<1568x128xf32, #tpu.memory_space<vmem>>, vector<28x128xf32>
    %c644 = arith.constant 644 : index
    %c0_53 = arith.constant 0 : index
    %50 = vector.load %arg5[%c644, %c0_53] : memref<1568x128xf32, #tpu.memory_space<vmem>>, vector<28x128xf32>
    %51 = arith.maximumf %49, %50 : vector<28x128xf32>
    %c308_54 = arith.constant 308 : index
    %c0_55 = arith.constant 0 : index
    %52 = vector.load %arg6[%c308_54, %c0_55] : memref<392x128xf32, #tpu.memory_space<vmem>>, vector<28x128xf32>
    tpu.vector_store %arg6[%c308_54, %c0_55], %51 {strides = array<i32>} : memref<392x128xf32, #tpu.memory_space<vmem>>, vector<28x128xf32>,
    %c672 = arith.constant 672 : index
    %c0_56 = arith.constant 0 : index
    %53 = vector.load %arg5[%c672, %c0_56] : memref<1568x128xf32, #tpu.memory_space<vmem>>, vector<28x128xf32>
    %c700 = arith.constant 700 : index
    %c0_57 = arith.constant 0 : index
    %54 = vector.load %arg5[%c700, %c0_57] : memref<1568x128xf32, #tpu.memory_space<vmem>>, vector<28x128xf32>
    %55 = arith.maximumf %53, %54 : vector<28x128xf32>
    %c336_58 = arith.constant 336 : index
    %c0_59 = arith.constant 0 : index
    %56 = vector.load %arg6[%c336_58, %c0_59] : memref<392x128xf32, #tpu.memory_space<vmem>>, vector<28x128xf32>
    tpu.vector_store %arg6[%c336_58, %c0_59], %55 {strides = array<i32>} : memref<392x128xf32, #tpu.memory_space<vmem>>, vector<28x128xf32>,
    %c728 = arith.constant 728 : index
    %c0_60 = arith.constant 0 : index
    %57 = vector.load %arg5[%c728, %c0_60] : memref<1568x128xf32, #tpu.memory_space<vmem>>, vector<28x128xf32>
    %c756 = arith.constant 756 : index
    %c0_61 = arith.constant 0 : index
    %58 = vector.load %arg5[%c756, %c0_61] : memref<1568x128xf32, #tpu.memory_space<vmem>>, vector<28x128xf32>
    %59 = arith.maximumf %57, %58 : vector<28x128xf32>
    %c364_62 = arith.constant 364 : index
    %c0_63 = arith.constant 0 : index
    %60 = vector.load %arg6[%c364_62, %c0_63] : memref<392x128xf32, #tpu.memory_space<vmem>>, vector<28x128xf32>
    tpu.vector_store %arg6[%c364_62, %c0_63], %59 {strides = array<i32>} : memref<392x128xf32, #tpu.memory_space<vmem>>, vector<28x128xf32>,
    %c0_64 = arith.constant 0 : index
    %c0_65 = arith.constant 0 : index
    %61 = tpu.strided_load %arg6[%c0_64, %c0_65] {strides = array<i32: 2, 1>} : memref<392x128xf32, #tpu.memory_space<vmem>>, vector<196x128xf32>
    %c1 = arith.constant 1 : index
    %c0_66 = arith.constant 0 : index
    %62 = tpu.strided_load %arg6[%c1, %c0_66] {strides = array<i32: 2, 1>} : memref<392x128xf32, #tpu.memory_space<vmem>>, vector<196x128xf32>
    %63 = arith.maximumf %61, %62 : vector<196x128xf32>
    %64 = vector.broadcast %4 : vector<1x128xf32> to vector<196x128xf32>
    %65 = arith.addf %63, %64 : vector<196x128xf32>
    %cst_67 = arith.constant 0.000000e+00 : f32
    %66 = vector.broadcast %cst_67 : f32 to vector<196x128xf32>
    %67 = arith.maximumf %65, %66 : vector<196x128xf32>
    %c0_68 = arith.constant 0 : index
    %c0_69 = arith.constant 0 : index
    %c0_70 = arith.constant 0 : index
    %68 = vector.load %arg4[%c0_68, %c0_69, %c0_70] : memref<2x196x128xf32, #tpu.memory_space<vmem>>, vector<1x196x128xf32>
    %69 = vector.shape_cast %68 : vector<1x196x128xf32> to vector<196x128xf32>
    %70 = vector.shape_cast %67 : vector<196x128xf32> to vector<1x196x128xf32>
    tpu.vector_store %arg4[%c0_68, %c0_69, %c0_70], %70 {strides = array<i32>} : memref<2x196x128xf32, #tpu.memory_space<vmem>>, vector<1x196x128xf32>,
    %c784 = arith.constant 784 : index
    %c0_71 = arith.constant 0 : index
    %71 = vector.load %arg5[%c784, %c0_71] : memref<1568x128xf32, #tpu.memory_space<vmem>>, vector<28x128xf32>
    %c812 = arith.constant 812 : index
    %c0_72 = arith.constant 0 : index
    %72 = vector.load %arg5[%c812, %c0_72] : memref<1568x128xf32, #tpu.memory_space<vmem>>, vector<28x128xf32>
    %73 = arith.maximumf %71, %72 : vector<28x128xf32>
    %c0_73 = arith.constant 0 : index
    %c0_74 = arith.constant 0 : index
    %74 = vector.load %arg6[%c0_73, %c0_74] : memref<392x128xf32, #tpu.memory_space<vmem>>, vector<28x128xf32>
    tpu.vector_store %arg6[%c0_73, %c0_74], %73 {strides = array<i32>} : memref<392x128xf32, #tpu.memory_space<vmem>>, vector<28x128xf32>,
    %c840 = arith.constant 840 : index
    %c0_75 = arith.constant 0 : index
    %75 = vector.load %arg5[%c840, %c0_75] : memref<1568x128xf32, #tpu.memory_space<vmem>>, vector<28x128xf32>
    %c868 = arith.constant 868 : index
    %c0_76 = arith.constant 0 : index
    %76 = vector.load %arg5[%c868, %c0_76] : memref<1568x128xf32, #tpu.memory_space<vmem>>, vector<28x128xf32>
    %77 = arith.maximumf %75, %76 : vector<28x128xf32>
    %c28_77 = arith.constant 28 : index
    %c0_78 = arith.constant 0 : index
    %78 = vector.load %arg6[%c28_77, %c0_78] : memref<392x128xf32, #tpu.memory_space<vmem>>, vector<28x128xf32>
    tpu.vector_store %arg6[%c28_77, %c0_78], %77 {strides = array<i32>} : memref<392x128xf32, #tpu.memory_space<vmem>>, vector<28x128xf32>,
    %c896 = arith.constant 896 : index
    %c0_79 = arith.constant 0 : index
    %79 = vector.load %arg5[%c896, %c0_79] : memref<1568x128xf32, #tpu.memory_space<vmem>>, vector<28x128xf32>
    %c924 = arith.constant 924 : index
    %c0_80 = arith.constant 0 : index
    %80 = vector.load %arg5[%c924, %c0_80] : memref<1568x128xf32, #tpu.memory_space<vmem>>, vector<28x128xf32>
    %81 = arith.maximumf %79, %80 : vector<28x128xf32>
    %c56_81 = arith.constant 56 : index
    %c0_82 = arith.constant 0 : index
    %82 = vector.load %arg6[%c56_81, %c0_82] : memref<392x128xf32, #tpu.memory_space<vmem>>, vector<28x128xf32>
    tpu.vector_store %arg6[%c56_81, %c0_82], %81 {strides = array<i32>} : memref<392x128xf32, #tpu.memory_space<vmem>>, vector<28x128xf32>,
    %c952 = arith.constant 952 : index
    %c0_83 = arith.constant 0 : index
    %83 = vector.load %arg5[%c952, %c0_83] : memref<1568x128xf32, #tpu.memory_space<vmem>>, vector<28x128xf32>
    %c980 = arith.constant 980 : index
    %c0_84 = arith.constant 0 : index
    %84 = vector.load %arg5[%c980, %c0_84] : memref<1568x128xf32, #tpu.memory_space<vmem>>, vector<28x128xf32>
    %85 = arith.maximumf %83, %84 : vector<28x128xf32>
    %c84_85 = arith.constant 84 : index
    %c0_86 = arith.constant 0 : index
    %86 = vector.load %arg6[%c84_85, %c0_86] : memref<392x128xf32, #tpu.memory_space<vmem>>, vector<28x128xf32>
    tpu.vector_store %arg6[%c84_85, %c0_86], %85 {strides = array<i32>} : memref<392x128xf32, #tpu.memory_space<vmem>>, vector<28x128xf32>,
    %c1008 = arith.constant 1008 : index
    %c0_87 = arith.constant 0 : index
    %87 = vector.load %arg5[%c1008, %c0_87] : memref<1568x128xf32, #tpu.memory_space<vmem>>, vector<28x128xf32>
    %c1036 = arith.constant 1036 : index
    %c0_88 = arith.constant 0 : index
    %88 = vector.load %arg5[%c1036, %c0_88] : memref<1568x128xf32, #tpu.memory_space<vmem>>, vector<28x128xf32>
    %89 = arith.maximumf %87, %88 : vector<28x128xf32>
    %c112_89 = arith.constant 112 : index
    %c0_90 = arith.constant 0 : index
    %90 = vector.load %arg6[%c112_89, %c0_90] : memref<392x128xf32, #tpu.memory_space<vmem>>, vector<28x128xf32>
    tpu.vector_store %arg6[%c112_89, %c0_90], %89 {strides = array<i32>} : memref<392x128xf32, #tpu.memory_space<vmem>>, vector<28x128xf32>,
    %c1064 = arith.constant 1064 : index
    %c0_91 = arith.constant 0 : index
    %91 = vector.load %arg5[%c1064, %c0_91] : memref<1568x128xf32, #tpu.memory_space<vmem>>, vector<28x128xf32>
    %c1092 = arith.constant 1092 : index
    %c0_92 = arith.constant 0 : index
    %92 = vector.load %arg5[%c1092, %c0_92] : memref<1568x128xf32, #tpu.memory_space<vmem>>, vector<28x128xf32>
    %93 = arith.maximumf %91, %92 : vector<28x128xf32>
    %c140_93 = arith.constant 140 : index
    %c0_94 = arith.constant 0 : index
    %94 = vector.load %arg6[%c140_93, %c0_94] : memref<392x128xf32, #tpu.memory_space<vmem>>, vector<28x128xf32>
    tpu.vector_store %arg6[%c140_93, %c0_94], %93 {strides = array<i32>} : memref<392x128xf32, #tpu.memory_space<vmem>>, vector<28x128xf32>,
    %c1120 = arith.constant 1120 : index
    %c0_95 = arith.constant 0 : index
    %95 = vector.load %arg5[%c1120, %c0_95] : memref<1568x128xf32, #tpu.memory_space<vmem>>, vector<28x128xf32>
    %c1148 = arith.constant 1148 : index
    %c0_96 = arith.constant 0 : index
    %96 = vector.load %arg5[%c1148, %c0_96] : memref<1568x128xf32, #tpu.memory_space<vmem>>, vector<28x128xf32>
    %97 = arith.maximumf %95, %96 : vector<28x128xf32>
    %c168_97 = arith.constant 168 : index
    %c0_98 = arith.constant 0 : index
    %98 = vector.load %arg6[%c168_97, %c0_98] : memref<392x128xf32, #tpu.memory_space<vmem>>, vector<28x128xf32>
    tpu.vector_store %arg6[%c168_97, %c0_98], %97 {strides = array<i32>} : memref<392x128xf32, #tpu.memory_space<vmem>>, vector<28x128xf32>,
    %c1176 = arith.constant 1176 : index
    %c0_99 = arith.constant 0 : index
    %99 = vector.load %arg5[%c1176, %c0_99] : memref<1568x128xf32, #tpu.memory_space<vmem>>, vector<28x128xf32>
    %c1204 = arith.constant 1204 : index
    %c0_100 = arith.constant 0 : index
    %100 = vector.load %arg5[%c1204, %c0_100] : memref<1568x128xf32, #tpu.memory_space<vmem>>, vector<28x128xf32>
    %101 = arith.maximumf %99, %100 : vector<28x128xf32>
    %c196_101 = arith.constant 196 : index
    %c0_102 = arith.constant 0 : index
    %102 = vector.load %arg6[%c196_101, %c0_102] : memref<392x128xf32, #tpu.memory_space<vmem>>, vector<28x128xf32>
    tpu.vector_store %arg6[%c196_101, %c0_102], %101 {strides = array<i32>} : memref<392x128xf32, #tpu.memory_space<vmem>>, vector<28x128xf32>,
    %c1232 = arith.constant 1232 : index
    %c0_103 = arith.constant 0 : index
    %103 = vector.load %arg5[%c1232, %c0_103] : memref<1568x128xf32, #tpu.memory_space<vmem>>, vector<28x128xf32>
    %c1260 = arith.constant 1260 : index
    %c0_104 = arith.constant 0 : index
    %104 = vector.load %arg5[%c1260, %c0_104] : memref<1568x128xf32, #tpu.memory_space<vmem>>, vector<28x128xf32>
    %105 = arith.maximumf %103, %104 : vector<28x128xf32>
    %c224_105 = arith.constant 224 : index
    %c0_106 = arith.constant 0 : index
    %106 = vector.load %arg6[%c224_105, %c0_106] : memref<392x128xf32, #tpu.memory_space<vmem>>, vector<28x128xf32>
    tpu.vector_store %arg6[%c224_105, %c0_106], %105 {strides = array<i32>} : memref<392x128xf32, #tpu.memory_space<vmem>>, vector<28x128xf32>,
    %c1288 = arith.constant 1288 : index
    %c0_107 = arith.constant 0 : index
    %107 = vector.load %arg5[%c1288, %c0_107] : memref<1568x128xf32, #tpu.memory_space<vmem>>, vector<28x128xf32>
    %c1316 = arith.constant 1316 : index
    %c0_108 = arith.constant 0 : index
    %108 = vector.load %arg5[%c1316, %c0_108] : memref<1568x128xf32, #tpu.memory_space<vmem>>, vector<28x128xf32>
    %109 = arith.maximumf %107, %108 : vector<28x128xf32>
    %c252_109 = arith.constant 252 : index
    %c0_110 = arith.constant 0 : index
    %110 = vector.load %arg6[%c252_109, %c0_110] : memref<392x128xf32, #tpu.memory_space<vmem>>, vector<28x128xf32>
    tpu.vector_store %arg6[%c252_109, %c0_110], %109 {strides = array<i32>} : memref<392x128xf32, #tpu.memory_space<vmem>>, vector<28x128xf32>,
    %c1344 = arith.constant 1344 : index
    %c0_111 = arith.constant 0 : index
    %111 = vector.load %arg5[%c1344, %c0_111] : memref<1568x128xf32, #tpu.memory_space<vmem>>, vector<28x128xf32>
    %c1372 = arith.constant 1372 : index
    %c0_112 = arith.constant 0 : index
    %112 = vector.load %arg5[%c1372, %c0_112] : memref<1568x128xf32, #tpu.memory_space<vmem>>, vector<28x128xf32>
    %113 = arith.maximumf %111, %112 : vector<28x128xf32>
    %c280_113 = arith.constant 280 : index
    %c0_114 = arith.constant 0 : index
    %114 = vector.load %arg6[%c280_113, %c0_114] : memref<392x128xf32, #tpu.memory_space<vmem>>, vector<28x128xf32>
    tpu.vector_store %arg6[%c280_113, %c0_114], %113 {strides = array<i32>} : memref<392x128xf32, #tpu.memory_space<vmem>>, vector<28x128xf32>,
    %c1400 = arith.constant 1400 : index
    %c0_115 = arith.constant 0 : index
    %115 = vector.load %arg5[%c1400, %c0_115] : memref<1568x128xf32, #tpu.memory_space<vmem>>, vector<28x128xf32>
    %c1428 = arith.constant 1428 : index
    %c0_116 = arith.constant 0 : index
    %116 = vector.load %arg5[%c1428, %c0_116] : memref<1568x128xf32, #tpu.memory_space<vmem>>, vector<28x128xf32>
    %117 = arith.maximumf %115, %116 : vector<28x128xf32>
    %c308_117 = arith.constant 308 : index
    %c0_118 = arith.constant 0 : index
    %118 = vector.load %arg6[%c308_117, %c0_118] : memref<392x128xf32, #tpu.memory_space<vmem>>, vector<28x128xf32>
    tpu.vector_store %arg6[%c308_117, %c0_118], %117 {strides = array<i32>} : memref<392x128xf32, #tpu.memory_space<vmem>>, vector<28x128xf32>,
    %c1456 = arith.constant 1456 : index
    %c0_119 = arith.constant 0 : index
    %119 = vector.load %arg5[%c1456, %c0_119] : memref<1568x128xf32, #tpu.memory_space<vmem>>, vector<28x128xf32>
    %c1484 = arith.constant 1484 : index
    %c0_120 = arith.constant 0 : index
    %120 = vector.load %arg5[%c1484, %c0_120] : memref<1568x128xf32, #tpu.memory_space<vmem>>, vector<28x128xf32>
    %121 = arith.maximumf %119, %120 : vector<28x128xf32>
    %c336_121 = arith.constant 336 : index
    %c0_122 = arith.constant 0 : index
    %122 = vector.load %arg6[%c336_121, %c0_122] : memref<392x128xf32, #tpu.memory_space<vmem>>, vector<28x128xf32>
    tpu.vector_store %arg6[%c336_121, %c0_122], %121 {strides = array<i32>} : memref<392x128xf32, #tpu.memory_space<vmem>>, vector<28x128xf32>,
    %c1512 = arith.constant 1512 : index
    %c0_123 = arith.constant 0 : index
    %123 = vector.load %arg5[%c1512, %c0_123] : memref<1568x128xf32, #tpu.memory_space<vmem>>, vector<28x128xf32>
    %c1540 = arith.constant 1540 : index
    %c0_124 = arith.constant 0 : index
    %124 = vector.load %arg5[%c1540, %c0_124] : memref<1568x128xf32, #tpu.memory_space<vmem>>, vector<28x128xf32>
    %125 = arith.maximumf %123, %124 : vector<28x128xf32>
    %c364_125 = arith.constant 364 : index
    %c0_126 = arith.constant 0 : index
    %126 = vector.load %arg6[%c364_125, %c0_126] : memref<392x128xf32, #tpu.memory_space<vmem>>, vector<28x128xf32>
    tpu.vector_store %arg6[%c364_125, %c0_126], %125 {strides = array<i32>} : memref<392x128xf32, #tpu.memory_space<vmem>>, vector<28x128xf32>,
    %c0_127 = arith.constant 0 : index
    %c0_128 = arith.constant 0 : index
    %127 = tpu.strided_load %arg6[%c0_127, %c0_128] {strides = array<i32: 2, 1>} : memref<392x128xf32, #tpu.memory_space<vmem>>, vector<196x128xf32>
    %c1_129 = arith.constant 1 : index
    %c0_130 = arith.constant 0 : index
    %128 = tpu.strided_load %arg6[%c1_129, %c0_130] {strides = array<i32: 2, 1>} : memref<392x128xf32, #tpu.memory_space<vmem>>, vector<196x128xf32>
    %129 = arith.maximumf %127, %128 : vector<196x128xf32>
    %130 = vector.broadcast %4 : vector<1x128xf32> to vector<196x128xf32>
    %131 = arith.addf %129, %130 : vector<196x128xf32>
    %cst_131 = arith.constant 0.000000e+00 : f32
    %132 = vector.broadcast %cst_131 : f32 to vector<196x128xf32>
    %133 = arith.maximumf %131, %132 : vector<196x128xf32>
    %c1_132 = arith.constant 1 : index
    %c0_133 = arith.constant 0 : index
    %c0_134 = arith.constant 0 : index
    %134 = vector.load %arg4[%c1_132, %c0_133, %c0_134] : memref<2x196x128xf32, #tpu.memory_space<vmem>>, vector<1x196x128xf32>
    %135 = vector.shape_cast %134 : vector<1x196x128xf32> to vector<196x128xf32>
    %136 = vector.shape_cast %133 : vector<196x128xf32> to vector<1x196x128xf32>
    tpu.vector_store %arg4[%c1_132, %c0_133, %c0_134], %136 {strides = array<i32>} : memref<2x196x128xf32, #tpu.memory_space<vmem>>, vector<1x196x128xf32>,
    return
  }
  func.func @transform_0(%arg0: i32) -> (i32, i32) {
    %c0_i32 = arith.constant 0 : i32
    %c0_i32_0 = arith.constant 0 : i32
    return %arg0, %c0_i32 : i32, i32
  }
  func.func @transform_1(%arg0: i32) -> (i32, i32) {
    %c0_i32 = arith.constant 0 : i32
    %c0_i32_0 = arith.constant 0 : i32
    %c0_i32_1 = arith.constant 0 : i32
    return %c0_i32, %c0_i32_0 : i32, i32
  }
  func.func @transform_2(%arg0: i32) -> (i32, i32) {
    %c0_i32 = arith.constant 0 : i32
    %c0_i32_0 = arith.constant 0 : i32
    %c0_i32_1 = arith.constant 0 : i32
    return %c0_i32, %c0_i32_0 : i32, i32
  }
  func.func @transform_3(%arg0: i32) -> (i32, i32, i32) {
    %c0_i32 = arith.constant 0 : i32
    %c0_i32_0 = arith.constant 0 : i32
    %c0_i32_1 = arith.constant 0 : i32
    return %arg0, %c0_i32, %c0_i32_0 : i32, i32, i32
  }
}

module attributes {stable_mosaic.version = 11 : i64} {
  func.func @_conv_pool_kernel(%arg0: i32, %arg1: memref<200x256xf32, #tpu.memory_space<vmem>>, %arg2: memref<256x128xf32, #tpu.memory_space<vmem>>, %arg3: memref<1x128xf32, #tpu.memory_space<vmem>>, %arg4: memref<2x25x128xf32, #tpu.memory_space<vmem>>, %arg5: memref<200x128xf32, #tpu.memory_space<vmem>>, %arg6: memref<50x128xf32, #tpu.memory_space<vmem>>) attributes {dimension_semantics = [#tpu.dimension_semantics<parallel>], iteration_bounds = array<i64: 1>, scalar_prefetch = 0 : i64, scratch_operands = 2 : i64, tpu.core_type = #tpu.core_type<tc>, window_params = [{transform_indices = @transform_0, window_bounds = array<i64: 200, 256>}, {pipeline_mode = #tpu.pipeline_mode<synchronous>, transform_indices = @transform_1, window_bounds = array<i64: 256, 128>}, {pipeline_mode = #tpu.pipeline_mode<synchronous>, transform_indices = @transform_2, window_bounds = array<i64: 1, 128>}, {transform_indices = @transform_3, window_bounds = array<i64: 2, 25, 128>}]} {
    %c0 = arith.constant 0 : index
    %c0_0 = arith.constant 0 : index
    %0 = vector.load %arg1[%c0, %c0_0] : memref<200x256xf32, #tpu.memory_space<vmem>>, vector<200x256xf32>
    %c0_1 = arith.constant 0 : index
    %c0_2 = arith.constant 0 : index
    %1 = vector.load %arg2[%c0_1, %c0_2] : memref<256x128xf32, #tpu.memory_space<vmem>>, vector<256x128xf32>
    %cst = arith.constant dense<0.000000e+00> : vector<200x128xf32>
    %2 = tpu.matmul %0, %1, %cst {dimension_numbers = #tpu.dot_dimension_numbers<[1], [0], [0], [1], [0, 0, 1, 1], [], []>} : vector<200x256xf32>, vector<256x128xf32>, vector<200x128xf32> -> vector<200x128xf32>
    %c0_3 = arith.constant 0 : index
    %c0_4 = arith.constant 0 : index
    %3 = vector.load %arg5[%c0_3, %c0_4] : memref<200x128xf32, #tpu.memory_space<vmem>>, vector<200x128xf32>
    tpu.vector_store %arg5[%c0_3, %c0_4], %2 {strides = array<i32>} : memref<200x128xf32, #tpu.memory_space<vmem>>, vector<200x128xf32>,
    %c0_5 = arith.constant 0 : index
    %c0_6 = arith.constant 0 : index
    %4 = vector.load %arg3[%c0_5, %c0_6] : memref<1x128xf32, #tpu.memory_space<vmem>>, vector<1x128xf32>
    %c0_7 = arith.constant 0 : index
    %c0_8 = arith.constant 0 : index
    %5 = vector.load %arg5[%c0_7, %c0_8] : memref<200x128xf32, #tpu.memory_space<vmem>>, vector<10x128xf32>
    %c10 = arith.constant 10 : index
    %c0_9 = arith.constant 0 : index
    %6 = vector.load %arg5[%c10, %c0_9] : memref<200x128xf32, #tpu.memory_space<vmem>>, vector<10x128xf32>
    %7 = arith.maximumf %5, %6 : vector<10x128xf32>
    %c0_10 = arith.constant 0 : index
    %c0_11 = arith.constant 0 : index
    %8 = vector.load %arg6[%c0_10, %c0_11] : memref<50x128xf32, #tpu.memory_space<vmem>>, vector<10x128xf32>
    tpu.vector_store %arg6[%c0_10, %c0_11], %7 {strides = array<i32>} : memref<50x128xf32, #tpu.memory_space<vmem>>, vector<10x128xf32>,
    %c20 = arith.constant 20 : index
    %c0_12 = arith.constant 0 : index
    %9 = vector.load %arg5[%c20, %c0_12] : memref<200x128xf32, #tpu.memory_space<vmem>>, vector<10x128xf32>
    %c30 = arith.constant 30 : index
    %c0_13 = arith.constant 0 : index
    %10 = vector.load %arg5[%c30, %c0_13] : memref<200x128xf32, #tpu.memory_space<vmem>>, vector<10x128xf32>
    %11 = arith.maximumf %9, %10 : vector<10x128xf32>
    %c10_14 = arith.constant 10 : index
    %c0_15 = arith.constant 0 : index
    %12 = vector.load %arg6[%c10_14, %c0_15] : memref<50x128xf32, #tpu.memory_space<vmem>>, vector<10x128xf32>
    tpu.vector_store %arg6[%c10_14, %c0_15], %11 {strides = array<i32>} : memref<50x128xf32, #tpu.memory_space<vmem>>, vector<10x128xf32>,
    %c40 = arith.constant 40 : index
    %c0_16 = arith.constant 0 : index
    %13 = vector.load %arg5[%c40, %c0_16] : memref<200x128xf32, #tpu.memory_space<vmem>>, vector<10x128xf32>
    %c50 = arith.constant 50 : index
    %c0_17 = arith.constant 0 : index
    %14 = vector.load %arg5[%c50, %c0_17] : memref<200x128xf32, #tpu.memory_space<vmem>>, vector<10x128xf32>
    %15 = arith.maximumf %13, %14 : vector<10x128xf32>
    %c20_18 = arith.constant 20 : index
    %c0_19 = arith.constant 0 : index
    %16 = vector.load %arg6[%c20_18, %c0_19] : memref<50x128xf32, #tpu.memory_space<vmem>>, vector<10x128xf32>
    tpu.vector_store %arg6[%c20_18, %c0_19], %15 {strides = array<i32>} : memref<50x128xf32, #tpu.memory_space<vmem>>, vector<10x128xf32>,
    %c60 = arith.constant 60 : index
    %c0_20 = arith.constant 0 : index
    %17 = vector.load %arg5[%c60, %c0_20] : memref<200x128xf32, #tpu.memory_space<vmem>>, vector<10x128xf32>
    %c70 = arith.constant 70 : index
    %c0_21 = arith.constant 0 : index
    %18 = vector.load %arg5[%c70, %c0_21] : memref<200x128xf32, #tpu.memory_space<vmem>>, vector<10x128xf32>
    %19 = arith.maximumf %17, %18 : vector<10x128xf32>
    %c30_22 = arith.constant 30 : index
    %c0_23 = arith.constant 0 : index
    %20 = vector.load %arg6[%c30_22, %c0_23] : memref<50x128xf32, #tpu.memory_space<vmem>>, vector<10x128xf32>
    tpu.vector_store %arg6[%c30_22, %c0_23], %19 {strides = array<i32>} : memref<50x128xf32, #tpu.memory_space<vmem>>, vector<10x128xf32>,
    %c80 = arith.constant 80 : index
    %c0_24 = arith.constant 0 : index
    %21 = vector.load %arg5[%c80, %c0_24] : memref<200x128xf32, #tpu.memory_space<vmem>>, vector<10x128xf32>
    %c90 = arith.constant 90 : index
    %c0_25 = arith.constant 0 : index
    %22 = vector.load %arg5[%c90, %c0_25] : memref<200x128xf32, #tpu.memory_space<vmem>>, vector<10x128xf32>
    %23 = arith.maximumf %21, %22 : vector<10x128xf32>
    %c40_26 = arith.constant 40 : index
    %c0_27 = arith.constant 0 : index
    %24 = vector.load %arg6[%c40_26, %c0_27] : memref<50x128xf32, #tpu.memory_space<vmem>>, vector<10x128xf32>
    tpu.vector_store %arg6[%c40_26, %c0_27], %23 {strides = array<i32>} : memref<50x128xf32, #tpu.memory_space<vmem>>, vector<10x128xf32>,
    %c0_28 = arith.constant 0 : index
    %c0_29 = arith.constant 0 : index
    %25 = tpu.strided_load %arg6[%c0_28, %c0_29] {strides = array<i32: 2, 1>} : memref<50x128xf32, #tpu.memory_space<vmem>>, vector<25x128xf32>
    %c1 = arith.constant 1 : index
    %c0_30 = arith.constant 0 : index
    %26 = tpu.strided_load %arg6[%c1, %c0_30] {strides = array<i32: 2, 1>} : memref<50x128xf32, #tpu.memory_space<vmem>>, vector<25x128xf32>
    %27 = arith.maximumf %25, %26 : vector<25x128xf32>
    %28 = vector.broadcast %4 : vector<1x128xf32> to vector<25x128xf32>
    %29 = arith.addf %27, %28 : vector<25x128xf32>
    %cst_31 = arith.constant 0.000000e+00 : f32
    %30 = vector.broadcast %cst_31 : f32 to vector<25x128xf32>
    %31 = arith.maximumf %29, %30 : vector<25x128xf32>
    %c0_32 = arith.constant 0 : index
    %c0_33 = arith.constant 0 : index
    %c0_34 = arith.constant 0 : index
    %32 = vector.load %arg4[%c0_32, %c0_33, %c0_34] : memref<2x25x128xf32, #tpu.memory_space<vmem>>, vector<1x25x128xf32>
    %33 = vector.shape_cast %32 : vector<1x25x128xf32> to vector<25x128xf32>
    %34 = vector.shape_cast %31 : vector<25x128xf32> to vector<1x25x128xf32>
    tpu.vector_store %arg4[%c0_32, %c0_33, %c0_34], %34 {strides = array<i32>} : memref<2x25x128xf32, #tpu.memory_space<vmem>>, vector<1x25x128xf32>,
    %c100 = arith.constant 100 : index
    %c0_35 = arith.constant 0 : index
    %35 = vector.load %arg5[%c100, %c0_35] : memref<200x128xf32, #tpu.memory_space<vmem>>, vector<10x128xf32>
    %c110 = arith.constant 110 : index
    %c0_36 = arith.constant 0 : index
    %36 = vector.load %arg5[%c110, %c0_36] : memref<200x128xf32, #tpu.memory_space<vmem>>, vector<10x128xf32>
    %37 = arith.maximumf %35, %36 : vector<10x128xf32>
    %c0_37 = arith.constant 0 : index
    %c0_38 = arith.constant 0 : index
    %38 = vector.load %arg6[%c0_37, %c0_38] : memref<50x128xf32, #tpu.memory_space<vmem>>, vector<10x128xf32>
    tpu.vector_store %arg6[%c0_37, %c0_38], %37 {strides = array<i32>} : memref<50x128xf32, #tpu.memory_space<vmem>>, vector<10x128xf32>,
    %c120 = arith.constant 120 : index
    %c0_39 = arith.constant 0 : index
    %39 = vector.load %arg5[%c120, %c0_39] : memref<200x128xf32, #tpu.memory_space<vmem>>, vector<10x128xf32>
    %c130 = arith.constant 130 : index
    %c0_40 = arith.constant 0 : index
    %40 = vector.load %arg5[%c130, %c0_40] : memref<200x128xf32, #tpu.memory_space<vmem>>, vector<10x128xf32>
    %41 = arith.maximumf %39, %40 : vector<10x128xf32>
    %c10_41 = arith.constant 10 : index
    %c0_42 = arith.constant 0 : index
    %42 = vector.load %arg6[%c10_41, %c0_42] : memref<50x128xf32, #tpu.memory_space<vmem>>, vector<10x128xf32>
    tpu.vector_store %arg6[%c10_41, %c0_42], %41 {strides = array<i32>} : memref<50x128xf32, #tpu.memory_space<vmem>>, vector<10x128xf32>,
    %c140 = arith.constant 140 : index
    %c0_43 = arith.constant 0 : index
    %43 = vector.load %arg5[%c140, %c0_43] : memref<200x128xf32, #tpu.memory_space<vmem>>, vector<10x128xf32>
    %c150 = arith.constant 150 : index
    %c0_44 = arith.constant 0 : index
    %44 = vector.load %arg5[%c150, %c0_44] : memref<200x128xf32, #tpu.memory_space<vmem>>, vector<10x128xf32>
    %45 = arith.maximumf %43, %44 : vector<10x128xf32>
    %c20_45 = arith.constant 20 : index
    %c0_46 = arith.constant 0 : index
    %46 = vector.load %arg6[%c20_45, %c0_46] : memref<50x128xf32, #tpu.memory_space<vmem>>, vector<10x128xf32>
    tpu.vector_store %arg6[%c20_45, %c0_46], %45 {strides = array<i32>} : memref<50x128xf32, #tpu.memory_space<vmem>>, vector<10x128xf32>,
    %c160 = arith.constant 160 : index
    %c0_47 = arith.constant 0 : index
    %47 = vector.load %arg5[%c160, %c0_47] : memref<200x128xf32, #tpu.memory_space<vmem>>, vector<10x128xf32>
    %c170 = arith.constant 170 : index
    %c0_48 = arith.constant 0 : index
    %48 = vector.load %arg5[%c170, %c0_48] : memref<200x128xf32, #tpu.memory_space<vmem>>, vector<10x128xf32>
    %49 = arith.maximumf %47, %48 : vector<10x128xf32>
    %c30_49 = arith.constant 30 : index
    %c0_50 = arith.constant 0 : index
    %50 = vector.load %arg6[%c30_49, %c0_50] : memref<50x128xf32, #tpu.memory_space<vmem>>, vector<10x128xf32>
    tpu.vector_store %arg6[%c30_49, %c0_50], %49 {strides = array<i32>} : memref<50x128xf32, #tpu.memory_space<vmem>>, vector<10x128xf32>,
    %c180 = arith.constant 180 : index
    %c0_51 = arith.constant 0 : index
    %51 = vector.load %arg5[%c180, %c0_51] : memref<200x128xf32, #tpu.memory_space<vmem>>, vector<10x128xf32>
    %c190 = arith.constant 190 : index
    %c0_52 = arith.constant 0 : index
    %52 = vector.load %arg5[%c190, %c0_52] : memref<200x128xf32, #tpu.memory_space<vmem>>, vector<10x128xf32>
    %53 = arith.maximumf %51, %52 : vector<10x128xf32>
    %c40_53 = arith.constant 40 : index
    %c0_54 = arith.constant 0 : index
    %54 = vector.load %arg6[%c40_53, %c0_54] : memref<50x128xf32, #tpu.memory_space<vmem>>, vector<10x128xf32>
    tpu.vector_store %arg6[%c40_53, %c0_54], %53 {strides = array<i32>} : memref<50x128xf32, #tpu.memory_space<vmem>>, vector<10x128xf32>,
    %c0_55 = arith.constant 0 : index
    %c0_56 = arith.constant 0 : index
    %55 = tpu.strided_load %arg6[%c0_55, %c0_56] {strides = array<i32: 2, 1>} : memref<50x128xf32, #tpu.memory_space<vmem>>, vector<25x128xf32>
    %c1_57 = arith.constant 1 : index
    %c0_58 = arith.constant 0 : index
    %56 = tpu.strided_load %arg6[%c1_57, %c0_58] {strides = array<i32: 2, 1>} : memref<50x128xf32, #tpu.memory_space<vmem>>, vector<25x128xf32>
    %57 = arith.maximumf %55, %56 : vector<25x128xf32>
    %58 = vector.broadcast %4 : vector<1x128xf32> to vector<25x128xf32>
    %59 = arith.addf %57, %58 : vector<25x128xf32>
    %cst_59 = arith.constant 0.000000e+00 : f32
    %60 = vector.broadcast %cst_59 : f32 to vector<25x128xf32>
    %61 = arith.maximumf %59, %60 : vector<25x128xf32>
    %c1_60 = arith.constant 1 : index
    %c0_61 = arith.constant 0 : index
    %c0_62 = arith.constant 0 : index
    %62 = vector.load %arg4[%c1_60, %c0_61, %c0_62] : memref<2x25x128xf32, #tpu.memory_space<vmem>>, vector<1x25x128xf32>
    %63 = vector.shape_cast %62 : vector<1x25x128xf32> to vector<25x128xf32>
    %64 = vector.shape_cast %61 : vector<25x128xf32> to vector<1x25x128xf32>
    tpu.vector_store %arg4[%c1_60, %c0_61, %c0_62], %64 {strides = array<i32>} : memref<2x25x128xf32, #tpu.memory_space<vmem>>, vector<1x25x128xf32>,
    return
  }
  func.func @transform_0(%arg0: i32) -> (i32, i32) {
    %c0_i32 = arith.constant 0 : i32
    %c0_i32_0 = arith.constant 0 : i32
    return %arg0, %c0_i32 : i32, i32
  }
  func.func @transform_1(%arg0: i32) -> (i32, i32) {
    %c0_i32 = arith.constant 0 : i32
    %c0_i32_0 = arith.constant 0 : i32
    %c0_i32_1 = arith.constant 0 : i32
    return %c0_i32, %c0_i32_0 : i32, i32
  }
  func.func @transform_2(%arg0: i32) -> (i32, i32) {
    %c0_i32 = arith.constant 0 : i32
    %c0_i32_0 = arith.constant 0 : i32
    %c0_i32_1 = arith.constant 0 : i32
    return %c0_i32, %c0_i32_0 : i32, i32
  }
  func.func @transform_3(%arg0: i32) -> (i32, i32, i32) {
    %c0_i32 = arith.constant 0 : i32
    %c0_i32_0 = arith.constant 0 : i32
    %c0_i32_1 = arith.constant 0 : i32
    return %arg0, %c0_i32, %c0_i32_0 : i32, i32, i32
  }
}

module attributes {stable_mosaic.version = 11 : i64} {
  func.func @_fc_kernel(%arg0: i32, %arg1: memref<2x512xf32, #tpu.memory_space<vmem>>, %arg2: memref<512x128xf32, #tpu.memory_space<vmem>>, %arg3: memref<1x128xf32, #tpu.memory_space<vmem>>, %arg4: memref<128x128xf32, #tpu.memory_space<vmem>>, %arg5: memref<1x128xf32, #tpu.memory_space<vmem>>, %arg6: memref<128x128xf32, #tpu.memory_space<vmem>>, %arg7: memref<1x128xf32, #tpu.memory_space<vmem>>, %arg8: memref<2x128xf32, #tpu.memory_space<vmem>>) attributes {dimension_semantics = [#tpu.dimension_semantics<parallel>], iteration_bounds = array<i64: 1>, scalar_prefetch = 0 : i64, scratch_operands = 0 : i64, tpu.core_type = #tpu.core_type<tc>, window_params = [{transform_indices = @transform_0, window_bounds = array<i64: 2, 512>}, {pipeline_mode = #tpu.pipeline_mode<synchronous>, transform_indices = @transform_1, window_bounds = array<i64: 512, 128>}, {pipeline_mode = #tpu.pipeline_mode<synchronous>, transform_indices = @transform_2, window_bounds = array<i64: 1, 128>}, {pipeline_mode = #tpu.pipeline_mode<synchronous>, transform_indices = @transform_3, window_bounds = array<i64: 128, 128>}, {pipeline_mode = #tpu.pipeline_mode<synchronous>, transform_indices = @transform_4, window_bounds = array<i64: 1, 128>}, {pipeline_mode = #tpu.pipeline_mode<synchronous>, transform_indices = @transform_5, window_bounds = array<i64: 128, 128>}, {pipeline_mode = #tpu.pipeline_mode<synchronous>, transform_indices = @transform_6, window_bounds = array<i64: 1, 128>}, {transform_indices = @transform_7, window_bounds = array<i64: 2, 128>}]} {
    %c0 = arith.constant 0 : index
    %c0_0 = arith.constant 0 : index
    %0 = vector.load %arg1[%c0, %c0_0] : memref<2x512xf32, #tpu.memory_space<vmem>>, vector<2x512xf32>
    %c0_1 = arith.constant 0 : index
    %c0_2 = arith.constant 0 : index
    %1 = vector.load %arg2[%c0_1, %c0_2] : memref<512x128xf32, #tpu.memory_space<vmem>>, vector<512x128xf32>
    %cst = arith.constant dense<0.000000e+00> : vector<2x128xf32>
    %2 = tpu.matmul %0, %1, %cst {dimension_numbers = #tpu.dot_dimension_numbers<[1], [0], [0], [1], [0, 0, 1, 1], [], []>} : vector<2x512xf32>, vector<512x128xf32>, vector<2x128xf32> -> vector<2x128xf32>
    %c0_3 = arith.constant 0 : index
    %c0_4 = arith.constant 0 : index
    %3 = vector.load %arg3[%c0_3, %c0_4] : memref<1x128xf32, #tpu.memory_space<vmem>>, vector<1x128xf32>
    %4 = vector.broadcast %3 : vector<1x128xf32> to vector<2x128xf32>
    %5 = arith.addf %2, %4 : vector<2x128xf32>
    %cst_5 = arith.constant 0.000000e+00 : f32
    %6 = vector.broadcast %cst_5 : f32 to vector<2x128xf32>
    %7 = arith.maximumf %5, %6 : vector<2x128xf32>
    %c0_6 = arith.constant 0 : index
    %c0_7 = arith.constant 0 : index
    %8 = vector.load %arg4[%c0_6, %c0_7] : memref<128x128xf32, #tpu.memory_space<vmem>>, vector<128x128xf32>
    %cst_8 = arith.constant dense<0.000000e+00> : vector<2x128xf32>
    %9 = tpu.matmul %7, %8, %cst_8 {dimension_numbers = #tpu.dot_dimension_numbers<[1], [0], [0], [1], [0, 0, 1, 1], [], []>} : vector<2x128xf32>, vector<128x128xf32>, vector<2x128xf32> -> vector<2x128xf32>
    %c0_9 = arith.constant 0 : index
    %c0_10 = arith.constant 0 : index
    %10 = vector.load %arg5[%c0_9, %c0_10] : memref<1x128xf32, #tpu.memory_space<vmem>>, vector<1x128xf32>
    %11 = vector.broadcast %10 : vector<1x128xf32> to vector<2x128xf32>
    %12 = arith.addf %9, %11 : vector<2x128xf32>
    %cst_11 = arith.constant 0.000000e+00 : f32
    %13 = vector.broadcast %cst_11 : f32 to vector<2x128xf32>
    %14 = arith.maximumf %12, %13 : vector<2x128xf32>
    %c0_12 = arith.constant 0 : index
    %c0_13 = arith.constant 0 : index
    %15 = vector.load %arg6[%c0_12, %c0_13] : memref<128x128xf32, #tpu.memory_space<vmem>>, vector<128x128xf32>
    %cst_14 = arith.constant dense<0.000000e+00> : vector<2x128xf32>
    %16 = tpu.matmul %14, %15, %cst_14 {dimension_numbers = #tpu.dot_dimension_numbers<[1], [0], [0], [1], [0, 0, 1, 1], [], []>} : vector<2x128xf32>, vector<128x128xf32>, vector<2x128xf32> -> vector<2x128xf32>
    %c0_15 = arith.constant 0 : index
    %c0_16 = arith.constant 0 : index
    %17 = vector.load %arg7[%c0_15, %c0_16] : memref<1x128xf32, #tpu.memory_space<vmem>>, vector<1x128xf32>
    %18 = vector.broadcast %17 : vector<1x128xf32> to vector<2x128xf32>
    %19 = arith.addf %16, %18 : vector<2x128xf32>
    %c0_17 = arith.constant 0 : index
    %c0_18 = arith.constant 0 : index
    %20 = vector.load %arg8[%c0_17, %c0_18] : memref<2x128xf32, #tpu.memory_space<vmem>>, vector<2x128xf32>
    tpu.vector_store %arg8[%c0_17, %c0_18], %19 {strides = array<i32>} : memref<2x128xf32, #tpu.memory_space<vmem>>, vector<2x128xf32>,
    return
  }
  func.func @transform_0(%arg0: i32) -> (i32, i32) {
    %c0_i32 = arith.constant 0 : i32
    %c0_i32_0 = arith.constant 0 : i32
    return %arg0, %c0_i32 : i32, i32
  }
  func.func @transform_1(%arg0: i32) -> (i32, i32) {
    %c0_i32 = arith.constant 0 : i32
    %c0_i32_0 = arith.constant 0 : i32
    %c0_i32_1 = arith.constant 0 : i32
    return %c0_i32, %c0_i32_0 : i32, i32
  }
  func.func @transform_2(%arg0: i32) -> (i32, i32) {
    %c0_i32 = arith.constant 0 : i32
    %c0_i32_0 = arith.constant 0 : i32
    %c0_i32_1 = arith.constant 0 : i32
    return %c0_i32, %c0_i32_0 : i32, i32
  }
  func.func @transform_3(%arg0: i32) -> (i32, i32) {
    %c0_i32 = arith.constant 0 : i32
    %c0_i32_0 = arith.constant 0 : i32
    %c0_i32_1 = arith.constant 0 : i32
    return %c0_i32, %c0_i32_0 : i32, i32
  }
  func.func @transform_4(%arg0: i32) -> (i32, i32) {
    %c0_i32 = arith.constant 0 : i32
    %c0_i32_0 = arith.constant 0 : i32
    %c0_i32_1 = arith.constant 0 : i32
    return %c0_i32, %c0_i32_0 : i32, i32
  }
  func.func @transform_5(%arg0: i32) -> (i32, i32) {
    %c0_i32 = arith.constant 0 : i32
    %c0_i32_0 = arith.constant 0 : i32
    %c0_i32_1 = arith.constant 0 : i32
    return %c0_i32, %c0_i32_0 : i32, i32
  }
  func.func @transform_6(%arg0: i32) -> (i32, i32) {
    %c0_i32 = arith.constant 0 : i32
    %c0_i32_0 = arith.constant 0 : i32
    %c0_i32_1 = arith.constant 0 : i32
    return %c0_i32, %c0_i32_0 : i32, i32
  }
  func.func @transform_7(%arg0: i32) -> (i32, i32) {
    %c0_i32 = arith.constant 0 : i32
    %c0_i32_0 = arith.constant 0 : i32
    return %arg0, %c0_i32 : i32, i32
  }
}

</mosaic_0001>

<llo_original>
// kernel: net_forward.3
$region0: #{net_forward.3}
  #allocation0 [shape = 'u32[]', space=smem, size = 0x4, offset = 0x4, fixed_abs, tag = 'smem constant byte address 0x4 - core index']
  #allocation1 [shape = 'u32[72,128]{1,0:T(1,128)}', space=vmem, size = 0x9000, scoped, tag = 'internal scratch']
  #allocation2 [shape = 'f32[1568,128]{1,0:T(8,128)}', space=vmem, size = 0xc4000, scoped, tag = 'scratch operand']
  #allocation3 [shape = 'f32[392,128]{1,0:T(8,128)}', space=vmem, size = 0x31000, scoped, tag = 'scratch operand']
  %s0 = inlined_call_operand.vmem [shape: f32[1568,128], index: 0, kind: input, shape index: {}]
  %s1 = inlined_call_operand.vmem [shape: f32[128,128], index: 1, kind: input, shape index: {}]
  %s2 = inlined_call_operand.vmem [shape: f32[1,128], index: 2, kind: input, shape index: {}]
  %s3 = inlined_call_operand.vmem [shape: f32[2,196,128], index: 3, kind: output, shape index: {}]
  %s4 = sld [smem:[#allocation0]]
  $region22: #{net_forward.3} parent=0
    _
  %s6 = ssub.s32 1, %s4
  %s7 = scalar_select 0, %s6, %s4
  // Predicated region
  $region2: #{net_forward.3} parent=0 // pred_check
    _
  $region3: #{net_forward.3} parent=0 // pred_check_branch
    %9 = sbr.rel (0) target = $region5
  $region4: #{net_forward.3} parent=0 // pred_region
    _
  $region5: #{net_forward.3} parent=0 // pred_fallthru
    _
  // Predicated region
  $region6: #{net_forward.3} parent=0 // pred_check
    _
  $region7: #{net_forward.3} parent=0 // pred_check_branch
    %11 = sbr.rel (0) target = $region9
  $region8: #{net_forward.3} parent=0 // pred_region
    _
  $region9: #{net_forward.3} parent=0 // pred_fallthru
    _
  // Predicated region
  $region10: #{net_forward.3} parent=0 // pred_check
    _
  $region11: #{net_forward.3} parent=0 // pred_check_branch
    %13 = sbr.rel (0) target = $region13
  $region12: #{net_forward.3} parent=0 // pred_region
    _
  $region13: #{net_forward.3} parent=0 // pred_fallthru
    _
  %v14 = vld [vmem:[%s0] sm:$0xff]
  %v15 = vld [vmem:[%s0 + $0x8] sm:$0xff]
  %v16 = vld [vmem:[%s0 + $0x10] sm:$0xff]
  %v17 = vld [vmem:[%s0 + $0x18] sm:$0xff]
  %v18 = vld [vmem:[%s0 + $0x20] sm:$0xff]
  %v19 = vld [vmem:[%s0 + $0x28] sm:$0xff]
  %v20 = vld [vmem:[%s0 + $0x30] sm:$0xff]
  %v21 = vld [vmem:[%s0 + $0x38] sm:$0xff]
  %v22 = vld [vmem:[%s0 + $0x40] sm:$0xff]
  %v23 = vld [vmem:[%s0 + $0x48] sm:$0xff]
  %v24 = vld [vmem:[%s0 + $0x50] sm:$0xff]
  %v25 = vld [vmem:[%s0 + $0x58] sm:$0xff]
  %v26 = vld [vmem:[%s0 + $0x60] sm:$0xff]
  %v27 = vld [vmem:[%s0 + $0x68] sm:$0xff]
  %v28 = vld [vmem:[%s0 + $0x70] sm:$0xff]
  %v29 = vld [vmem:[%s0 + $0x78] sm:$0xff]
  %v30 = vld [vmem:[%s0 + $0x80] sm:$0xff]
  %v31 = vld [vmem:[%s0 + $0x88] sm:$0xff]
  %v32 = vld [vmem:[%s0 + $0x90] sm:$0xff]
  %v33 = vld [vmem:[%s0 + $0x98] sm:$0xff]
  %v34 = vld [vmem:[%s0 + $0xa0] sm:$0xff]
  %v35 = vld [vmem:[%s0 + $0xa8] sm:$0xff]
  %v36 = vld [vmem:[%s0 + $0xb0] sm:$0xff]
  %v37 = vld [vmem:[%s0 + $0xb8] sm:$0xff]
  %v38 = vld [vmem:[%s0 + $0xc0] sm:$0xff]
  %v39 = vld [vmem:[%s0 + $0xc8] sm:$0xff]
  %v40 = vld [vmem:[%s0 + $0xd0] sm:$0xff]
  %v41 = vld [vmem:[%s0 + $0xd8] sm:$0xff]
  %v42 = vld [vmem:[%s0 + $0xe0] sm:$0xff]
  %v43 = vld [vmem:[%s0 + $0xe8] sm:$0xff]
  %v44 = vld [vmem:[%s0 + $0xf0] sm:$0xff]
  %v45 = vld [vmem:[%s0 + $0xf8] sm:$0xff]
  %v46 = vld [vmem:[%s0 + $0x100] sm:$0xff]
  %v47 = vld [vmem:[%s0 + $0x108] sm:$0xff]
  %v48 = vld [vmem:[%s0 + $0x110] sm:$0xff]
  %v49 = vld [vmem:[%s0 + $0x118] sm:$0xff]
  %v50 = vld [vmem:[%s0 + $0x120] sm:$0xff]
  %v51 = vld [vmem:[%s0 + $0x128] sm:$0xff]
  %v52 = vld [vmem:[%s0 + $0x130] sm:$0xff]
  %v53 = vld [vmem:[%s0 + $0x138] sm:$0xff]
  %v54 = vld [vmem:[%s0 + $0x140] sm:$0xff]
  %v55 = vld [vmem:[%s0 + $0x148] sm:$0xff]
  %v56 = vld [vmem:[%s0 + $0x150] sm:$0xff]
  %v57 = vld [vmem:[%s0 + $0x158] sm:$0xff]
  %v58 = vld [vmem:[%s0 + $0x160] sm:$0xff]
  %v59 = vld [vmem:[%s0 + $0x168] sm:$0xff]
  %v60 = vld [vmem:[%s0 + $0x170] sm:$0xff]
  %v61 = vld [vmem:[%s0 + $0x178] sm:$0xff]
  %v62 = vld [vmem:[%s0 + $0x180] sm:$0xff]
  %v63 = vld [vmem:[%s0 + $0x188] sm:$0xff]
  %v64 = vld [vmem:[%s0 + $0x190] sm:$0xff]
  %v65 = vld [vmem:[%s0 + $0x198] sm:$0xff]
  %v66 = vld [vmem:[%s0 + $0x1a0] sm:$0xff]
  %v67 = vld [vmem:[%s0 + $0x1a8] sm:$0xff]
  %v68 = vld [vmem:[%s0 + $0x1b0] sm:$0xff]
  %v69 = vld [vmem:[%s0 + $0x1b8] sm:$0xff]
  %v70 = vld [vmem:[%s0 + $0x1c0] sm:$0xff]
  %v71 = vld [vmem:[%s0 + $0x1c8] sm:$0xff]
  %v72 = vld [vmem:[%s0 + $0x1d0] sm:$0xff]
  %v73 = vld [vmem:[%s0 + $0x1d8] sm:$0xff]
  %v74 = vld [vmem:[%s0 + $0x1e0] sm:$0xff]
  %v75 = vld [vmem:[%s0 + $0x1e8] sm:$0xff]
  %v76 = vld [vmem:[%s0 + $0x1f0] sm:$0xff]
  %v77 = vld [vmem:[%s0 + $0x1f8] sm:$0xff]
  %v78 = vld [vmem:[%s0 + $0x200] sm:$0xff]
  %v79 = vld [vmem:[%s0 + $0x208] sm:$0xff]
  %v80 = vld [vmem:[%s0 + $0x210] sm:$0xff]
  %v81 = vld [vmem:[%s0 + $0x218] sm:$0xff]
  %v82 = vld [vmem:[%s0 + $0x220] sm:$0xff]
  %v83 = vld [vmem:[%s0 + $0x228] sm:$0xff]
  %v84 = vld [vmem:[%s0 + $0x230] sm:$0xff]
  %v85 = vld [vmem:[%s0 + $0x238] sm:$0xff]
  %v86 = vld [vmem:[%s0 + $0x240] sm:$0xff]
  %v87 = vld [vmem:[%s0 + $0x248] sm:$0xff]
  %v88 = vld [vmem:[%s0 + $0x250] sm:$0xff]
  %v89 = vld [vmem:[%s0 + $0x258] sm:$0xff]
  %v90 = vld [vmem:[%s0 + $0x260] sm:$0xff]
  %v91 = vld [vmem:[%s0 + $0x268] sm:$0xff]
  %v92 = vld [vmem:[%s0 + $0x270] sm:$0xff]
  %v93 = vld [vmem:[%s0 + $0x278] sm:$0xff]
  %v94 = vld [vmem:[%s0 + $0x280] sm:$0xff]
  %v95 = vld [vmem:[%s0 + $0x288] sm:$0xff]
  %v96 = vld [vmem:[%s0 + $0x290] sm:$0xff]
  %v97 = vld [vmem:[%s0 + $0x298] sm:$0xff]
  %v98 = vld [vmem:[%s0 + $0x2a0] sm:$0xff]
  %v99 = vld [vmem:[%s0 + $0x2a8] sm:$0xff]
  %v100 = vld [vmem:[%s0 + $0x2b0] sm:$0xff]
  %v101 = vld [vmem:[%s0 + $0x2b8] sm:$0xff]
  %v102 = vld [vmem:[%s0 + $0x2c0] sm:$0xff]
  %v103 = vld [vmem:[%s0 + $0x2c8] sm:$0xff]
  %v104 = vld [vmem:[%s0 + $0x2d0] sm:$0xff]
  %v105 = vld [vmem:[%s0 + $0x2d8] sm:$0xff]
  %v106 = vld [vmem:[%s0 + $0x2e0] sm:$0xff]
  %v107 = vld [vmem:[%s0 + $0x2e8] sm:$0xff]
  %v108 = vld [vmem:[%s0 + $0x2f0] sm:$0xff]
  %v109 = vld [vmem:[%s0 + $0x2f8] sm:$0xff]
  %v110 = vld [vmem:[%s0 + $0x300] sm:$0xff]
  %v111 = vld [vmem:[%s0 + $0x308] sm:$0xff]
  %v112 = vld [vmem:[%s0 + $0x310] sm:$0xff]
  %v113 = vld [vmem:[%s0 + $0x318] sm:$0xff]
  %v114 = vld [vmem:[%s0 + $0x320] sm:$0xff]
  %v115 = vld [vmem:[%s0 + $0x328] sm:$0xff]
  %v116 = vld [vmem:[%s0 + $0x330] sm:$0xff]
  %v117 = vld [vmem:[%s0 + $0x338] sm:$0xff]
  %v118 = vld [vmem:[%s0 + $0x340] sm:$0xff]
  %v119 = vld [vmem:[%s0 + $0x348] sm:$0xff]
  %v120 = vld [vmem:[%s0 + $0x350] sm:$0xff]
  %v121 = vld [vmem:[%s0 + $0x358] sm:$0xff]
  %v122 = vld [vmem:[%s0 + $0x360] sm:$0xff]
  %v123 = vld [vmem:[%s0 + $0x368] sm:$0xff]
  %v124 = vld [vmem:[%s0 + $0x370] sm:$0xff]
  %v125 = vld [vmem:[%s0 + $0x378] sm:$0xff]
  %v126 = vld [vmem:[%s0 + $0x380] sm:$0xff]
  %v127 = vld [vmem:[%s0 + $0x388] sm:$0xff]
  %v128 = vld [vmem:[%s0 + $0x390] sm:$0xff]
  %v129 = vld [vmem:[%s0 + $0x398] sm:$0xff]
  %v130 = vld [vmem:[%s0 + $0x3a0] sm:$0xff]
  %v131 = vld [vmem:[%s0 + $0x3a8] sm:$0xff]
  %v132 = vld [vmem:[%s0 + $0x3b0] sm:$0xff]
  %v133 = vld [vmem:[%s0 + $0x3b8] sm:$0xff]
  %v134 = vld [vmem:[%s0 + $0x3c0] sm:$0xff]
  %v135 = vld [vmem:[%s0 + $0x3c8] sm:$0xff]
  %v136 = vld [vmem:[%s0 + $0x3d0] sm:$0xff]
  %v137 = vld [vmem:[%s0 + $0x3d8] sm:$0xff]
  %v138 = vld [vmem:[%s0 + $0x3e0] sm:$0xff]
  %v139 = vld [vmem:[%s0 + $0x3e8] sm:$0xff]
  %v140 = vld [vmem:[%s0 + $0x3f0] sm:$0xff]
  %v141 = vld [vmem:[%s0 + $0x3f8] sm:$0xff]
  %v142 = vld [vmem:[%s0 + $0x400] sm:$0xff]
  %v143 = vld [vmem:[%s0 + $0x408] sm:$0xff]
  %v144 = vld [vmem:[%s0 + $0x410] sm:$0xff]
  %v145 = vld [vmem:[%s0 + $0x418] sm:$0xff]
  %v146 = vld [vmem:[%s0 + $0x420] sm:$0xff]
  %v147 = vld [vmem:[%s0 + $0x428] sm:$0xff]
  %v148 = vld [vmem:[%s0 + $0x430] sm:$0xff]
  %v149 = vld [vmem:[%s0 + $0x438] sm:$0xff]
  %v150 = vld [vmem:[%s0 + $0x440] sm:$0xff]
  %v151 = vld [vmem:[%s0 + $0x448] sm:$0xff]
  %v152 = vld [vmem:[%s0 + $0x450] sm:$0xff]
  %v153 = vld [vmem:[%s0 + $0x458] sm:$0xff]
  %v154 = vld [vmem:[%s0 + $0x460] sm:$0xff]
  %v155 = vld [vmem:[%s0 + $0x468] sm:$0xff]
  %v156 = vld [vmem:[%s0 + $0x470] sm:$0xff]
  %v157 = vld [vmem:[%s0 + $0x478] sm:$0xff]
  %v158 = vld [vmem:[%s0 + $0x480] sm:$0xff]
  %v159 = vld [vmem:[%s0 + $0x488] sm:$0xff]
  %v160 = vld [vmem:[%s0 + $0x490] sm:$0xff]
  %v161 = vld [vmem:[%s0 + $0x498] sm:$0xff]
  %v162 = vld [vmem:[%s0 + $0x4a0] sm:$0xff]
  %v163 = vld [vmem:[%s0 + $0x4a8] sm:$0xff]
  %v164 = vld [vmem:[%s0 + $0x4b0] sm:$0xff]
  %v165 = vld [vmem:[%s0 + $0x4b8] sm:$0xff]
  %v166 = vld [vmem:[%s0 + $0x4c0] sm:$0xff]
  %v167 = vld [vmem:[%s0 + $0x4c8] sm:$0xff]
  %v168 = vld [vmem:[%s0 + $0x4d0] sm:$0xff]
  %v169 = vld [vmem:[%s0 + $0x4d8] sm:$0xff]
  %v170 = vld [vmem:[%s0 + $0x4e0] sm:$0xff]
  %v171 = vld [vmem:[%s0 + $0x4e8] sm:$0xff]
  %v172 = vld [vmem:[%s0 + $0x4f0] sm:$0xff]
  %v173 = vld [vmem:[%s0 + $0x4f8] sm:$0xff]
  %v174 = vld [vmem:[%s0 + $0x500] sm:$0xff]
  %v175 = vld [vmem:[%s0 + $0x508] sm:$0xff]
  %v176 = vld [vmem:[%s0 + $0x510] sm:$0xff]
  %v177 = vld [vmem:[%s0 + $0x518] sm:$0xff]
  %v178 = vld [vmem:[%s0 + $0x520] sm:$0xff]
  %v179 = vld [vmem:[%s0 + $0x528] sm:$0xff]
  %v180 = vld [vmem:[%s0 + $0x530] sm:$0xff]
  %v181 = vld [vmem:[%s0 + $0x538] sm:$0xff]
  %v182 = vld [vmem:[%s0 + $0x540] sm:$0xff]
  %v183 = vld [vmem:[%s0 + $0x548] sm:$0xff]
  %v184 = vld [vmem:[%s0 + $0x550] sm:$0xff]
  %v185 = vld [vmem:[%s0 + $0x558] sm:$0xff]
  %v186 = vld [vmem:[%s0 + $0x560] sm:$0xff]
  %v187 = vld [vmem:[%s0 + $0x568] sm:$0xff]
  %v188 = vld [vmem:[%s0 + $0x570] sm:$0xff]
  %v189 = vld [vmem:[%s0 + $0x578] sm:$0xff]
  %v190 = vld [vmem:[%s0 + $0x580] sm:$0xff]
  %v191 = vld [vmem:[%s0 + $0x588] sm:$0xff]
  %v192 = vld [vmem:[%s0 + $0x590] sm:$0xff]
  %v193 = vld [vmem:[%s0 + $0x598] sm:$0xff]
  %v194 = vld [vmem:[%s0 + $0x5a0] sm:$0xff]
  %v195 = vld [vmem:[%s0 + $0x5a8] sm:$0xff]
  %v196 = vld [vmem:[%s0 + $0x5b0] sm:$0xff]
  %v197 = vld [vmem:[%s0 + $0x5b8] sm:$0xff]
  %v198 = vld [vmem:[%s0 + $0x5c0] sm:$0xff]
  %v199 = vld [vmem:[%s0 + $0x5c8] sm:$0xff]
  %v200 = vld [vmem:[%s0 + $0x5d0] sm:$0xff]
  %v201 = vld [vmem:[%s0 + $0x5d8] sm:$0xff]
  %v202 = vld [vmem:[%s0 + $0x5e0] sm:$0xff]
  %v203 = vld [vmem:[%s0 + $0x5e8] sm:$0xff]
  %v204 = vld [vmem:[%s0 + $0x5f0] sm:$0xff]
  %v205 = vld [vmem:[%s0 + $0x5f8] sm:$0xff]
  %v206 = vld [vmem:[%s0 + $0x600] sm:$0xff]
  %v207 = vld [vmem:[%s0 + $0x608] sm:$0xff]
  %v208 = vld [vmem:[%s0 + $0x610] sm:$0xff]
  %v209 = vld [vmem:[%s0 + $0x618] sm:$0xff]
  %v210 = vld [vmem:[%s1] sm:$0xff]
  %v211 = vld [vmem:[%s1 + $0x8] sm:$0xff]
  %v212 = vld [vmem:[%s1 + $0x10] sm:$0xff]
  %v213 = vld [vmem:[%s1 + $0x18] sm:$0xff]
  %v214 = vld [vmem:[%s1 + $0x20] sm:$0xff]
  %v215 = vld [vmem:[%s1 + $0x28] sm:$0xff]
  %v216 = vld [vmem:[%s1 + $0x30] sm:$0xff]
  %v217 = vld [vmem:[%s1 + $0x38] sm:$0xff]
  %v218 = vld [vmem:[%s1 + $0x40] sm:$0xff]
  %v219 = vld [vmem:[%s1 + $0x48] sm:$0xff]
  %v220 = vld [vmem:[%s1 + $0x50] sm:$0xff]
  %v221 = vld [vmem:[%s1 + $0x58] sm:$0xff]
  %v222 = vld [vmem:[%s1 + $0x60] sm:$0xff]
  %v223 = vld [vmem:[%s1 + $0x68] sm:$0xff]
  %v224 = vld [vmem:[%s1 + $0x70] sm:$0xff]
  %v225 = vld [vmem:[%s1 + $0x78] sm:$0xff]
  %226 = vmatpush.msra.mxu0 %v225
  %227 = vmatpush.msra.mxu0 %v224
  %228 = vmatpush.msra.mxu0 %v223
  %229 = vmatpush.msra.mxu0 %v222
  %230 = vmatpush.msra.mxu0 %v221
  %231 = vmatpush.msra.mxu0 %v220
  %232 = vmatpush.msra.mxu0 %v219
  %233 = vmatpush.msra.mxu0 %v218
  %234 = vmatpush.msra.mxu0 %v217
  %235 = vmatpush.msra.mxu0 %v216
  %236 = vmatpush.msra.mxu0 %v215
  %237 = vmatpush.msra.mxu0 %v214
  %238 = vmatpush.msra.mxu0 %v213
  %239 = vmatpush.msra.mxu0 %v212
  %240 = vmatpush.msra.mxu0 %v211
  %241 = vmatpush.msra.mxu0 %v210
  %242 = vmatmul.f32.gmra.mxu0 %v14
  %v243 = vpop.f32.mrf.mxu0
  %v244 = vadd.f32 0.0, %v243
  %245 = vmatmul.f32.gmra.mxu0 %v15
  %v246 = vpop.f32.mrf.mxu0
  %v247 = vadd.f32 0.0, %v246
  %248 = vmatmul.f32.gmra.mxu0 %v16
  %v249 = vpop.f32.mrf.mxu0
  %v250 = vadd.f32 0.0, %v249
  %251 = vmatmul.f32.gmra.mxu0 %v17
  %v252 = vpop.f32.mrf.mxu0
  %v253 = vadd.f32 0.0, %v252
  %254 = vmatmul.f32.gmra.mxu0 %v18
  %v255 = vpop.f32.mrf.mxu0
  %v256 = vadd.f32 0.0, %v255
  %257 = vmatmul.f32.gmra.mxu0 %v19
  %v258 = vpop.f32.mrf.mxu0
  %v259 = vadd.f32 0.0, %v258
  %260 = vmatmul.f32.gmra.mxu0 %v20
  %v261 = vpop.f32.mrf.mxu0
  %v262 = vadd.f32 0.0, %v261
  %263 = vmatmul.f32.gmra.mxu0 %v21
  %v264 = vpop.f32.mrf.mxu0
  %v265 = vadd.f32 0.0, %v264
  %266 = vmatmul.f32.gmra.mxu0 %v22
  %v267 = vpop.f32.mrf.mxu0
  %v268 = vadd.f32 0.0, %v267
  %269 = vmatmul.f32.gmra.mxu0 %v23
  %v270 = vpop.f32.mrf.mxu0
  %v271 = vadd.f32 0.0, %v270
  %272 = vmatmul.f32.gmra.mxu0 %v24
  %v273 = vpop.f32.mrf.mxu0
  %v274 = vadd.f32 0.0, %v273
  %275 = vmatmul.f32.gmra.mxu0 %v25
  %v276 = vpop.f32.mrf.mxu0
  %v277 = vadd.f32 0.0, %v276
  %278 = vmatmul.f32.gmra.mxu0 %v26
  %v279 = vpop.f32.mrf.mxu0
  %v280 = vadd.f32 0.0, %v279
  %281 = vmatmul.f32.gmra.mxu0 %v27
  %v282 = vpop.f32.mrf.mxu0
  %v283 = vadd.f32 0.0, %v282
  %284 = vmatmul.f32.gmra.mxu0 %v28
  %v285 = vpop.f32.mrf.mxu0
  %v286 = vadd.f32 0.0, %v285
  %287 = vmatmul.f32.gmra.mxu0 %v29
  %v288 = vpop.f32.mrf.mxu0
  %v289 = vadd.f32 0.0, %v288
  %290 = vmatmul.f32.gmra.mxu0 %v30
  %v291 = vpop.f32.mrf.mxu0
  %v292 = vadd.f32 0.0, %v291
  %293 = vmatmul.f32.gmra.mxu0 %v31
  %v294 = vpop.f32.mrf.mxu0
  %v295 = vadd.f32 0.0, %v294
  %296 = vmatmul.f32.gmra.mxu0 %v32
  %v297 = vpop.f32.mrf.mxu0
  %v298 = vadd.f32 0.0, %v297
  %299 = vmatmul.f32.gmra.mxu0 %v33
  %v300 = vpop.f32.mrf.mxu0
  %v301 = vadd.f32 0.0, %v300
  %302 = vmatmul.f32.gmra.mxu0 %v34
  %v303 = vpop.f32.mrf.mxu0
  %v304 = vadd.f32 0.0, %v303
  %305 = vmatmul.f32.gmra.mxu0 %v35
  %v306 = vpop.f32.mrf.mxu0
  %v307 = vadd.f32 0.0, %v306
  %308 = vmatmul.f32.gmra.mxu0 %v36
  %v309 = vpop.f32.mrf.mxu0
  %v310 = vadd.f32 0.0, %v309
  %311 = vmatmul.f32.gmra.mxu0 %v37
  %v312 = vpop.f32.mrf.mxu0
  %v313 = vadd.f32 0.0, %v312
  %314 = vmatmul.f32.gmra.mxu0 %v38
  %v315 = vpop.f32.mrf.mxu0
  %v316 = vadd.f32 0.0, %v315
  %317 = vmatmul.f32.gmra.mxu0 %v39
  %v318 = vpop.f32.mrf.mxu0
  %v319 = vadd.f32 0.0, %v318
  %320 = vmatmul.f32.gmra.mxu0 %v40
  %v321 = vpop.f32.mrf.mxu0
  %v322 = vadd.f32 0.0, %v321
  %323 = vmatmul.f32.gmra.mxu0 %v41
  %v324 = vpop.f32.mrf.mxu0
  %v325 = vadd.f32 0.0, %v324
  %326 = vmatmul.f32.gmra.mxu0 %v42
  %v327 = vpop.f32.mrf.mxu0
  %v328 = vadd.f32 0.0, %v327
  %329 = vmatmul.f32.gmra.mxu0 %v43
  %v330 = vpop.f32.mrf.mxu0
  %v331 = vadd.f32 0.0, %v330
  %332 = vmatmul.f32.gmra.mxu0 %v44
  %v333 = vpop.f32.mrf.mxu0
  %v334 = vadd.f32 0.0, %v333
  %335 = vmatmul.f32.gmra.mxu0 %v45
  %v336 = vpop.f32.mrf.mxu0
  %v337 = vadd.f32 0.0, %v336
  %338 = vmatmul.f32.gmra.mxu0 %v46
  %v339 = vpop.f32.mrf.mxu0
  %v340 = vadd.f32 0.0, %v339
  %341 = vmatmul.f32.gmra.mxu0 %v47
  %v342 = vpop.f32.mrf.mxu0
  %v343 = vadd.f32 0.0, %v342
  %344 = vmatmul.f32.gmra.mxu0 %v48
  %v345 = vpop.f32.mrf.mxu0
  %v346 = vadd.f32 0.0, %v345
  %347 = vmatmul.f32.gmra.mxu0 %v49
  %v348 = vpop.f32.mrf.mxu0
  %v349 = vadd.f32 0.0, %v348
  %350 = vmatmul.f32.gmra.mxu0 %v50
  %v351 = vpop.f32.mrf.mxu0
  %v352 = vadd.f32 0.0, %v351
  %353 = vmatmul.f32.gmra.mxu0 %v51
  %v354 = vpop.f32.mrf.mxu0
  %v355 = vadd.f32 0.0, %v354
  %356 = vmatmul.f32.gmra.mxu0 %v52
  %v357 = vpop.f32.mrf.mxu0
  %v358 = vadd.f32 0.0, %v357
  %359 = vmatmul.f32.gmra.mxu0 %v53
  %v360 = vpop.f32.mrf.mxu0
  %v361 = vadd.f32 0.0, %v360
  %362 = vmatmul.f32.gmra.mxu0 %v54
  %v363 = vpop.f32.mrf.mxu0
  %v364 = vadd.f32 0.0, %v363
  %365 = vmatmul.f32.gmra.mxu0 %v55
  %v366 = vpop.f32.mrf.mxu0
  %v367 = vadd.f32 0.0, %v366
  %368 = vmatmul.f32.gmra.mxu0 %v56
  %v369 = vpop.f32.mrf.mxu0
  %v370 = vadd.f32 0.0, %v369
  %371 = vmatmul.f32.gmra.mxu0 %v57
  %v372 = vpop.f32.mrf.mxu0
  %v373 = vadd.f32 0.0, %v372
  %374 = vmatmul.f32.gmra.mxu0 %v58
  %v375 = vpop.f32.mrf.mxu0
  %v376 = vadd.f32 0.0, %v375
  %377 = vmatmul.f32.gmra.mxu0 %v59
  %v378 = vpop.f32.mrf.mxu0
  %v379 = vadd.f32 0.0, %v378
  %380 = vmatmul.f32.gmra.mxu0 %v60
  %v381 = vpop.f32.mrf.mxu0
  %v382 = vadd.f32 0.0, %v381
  %383 = vmatmul.f32.gmra.mxu0 %v61
  %v384 = vpop.f32.mrf.mxu0
  %v385 = vadd.f32 0.0, %v384
  %386 = vmatmul.f32.gmra.mxu0 %v62
  %v387 = vpop.f32.mrf.mxu0
  %v388 = vadd.f32 0.0, %v387
  %389 = vmatmul.f32.gmra.mxu0 %v63
  %v390 = vpop.f32.mrf.mxu0
  %v391 = vadd.f32 0.0, %v390
  %392 = vmatmul.f32.gmra.mxu0 %v64
  %v393 = vpop.f32.mrf.mxu0
  %v394 = vadd.f32 0.0, %v393
  %395 = vmatmul.f32.gmra.mxu0 %v65
  %v396 = vpop.f32.mrf.mxu0
  %v397 = vadd.f32 0.0, %v396
  %398 = vmatmul.f32.gmra.mxu0 %v66
  %v399 = vpop.f32.mrf.mxu0
  %v400 = vadd.f32 0.0, %v399
  %401 = vmatmul.f32.gmra.mxu0 %v67
  %v402 = vpop.f32.mrf.mxu0
  %v403 = vadd.f32 0.0, %v402
  %404 = vmatmul.f32.gmra.mxu0 %v68
  %v405 = vpop.f32.mrf.mxu0
  %v406 = vadd.f32 0.0, %v405
  %407 = vmatmul.f32.gmra.mxu0 %v69
  %v408 = vpop.f32.mrf.mxu0
  %v409 = vadd.f32 0.0, %v408
  %410 = vmatmul.f32.gmra.mxu0 %v70
  %v411 = vpop.f32.mrf.mxu0
  %v412 = vadd.f32 0.0, %v411
  %413 = vmatmul.f32.gmra.mxu0 %v71
  %v414 = vpop.f32.mrf.mxu0
  %v415 = vadd.f32 0.0, %v414
  %416 = vmatmul.f32.gmra.mxu0 %v72
  %v417 = vpop.f32.mrf.mxu0
  %v418 = vadd.f32 0.0, %v417
  %419 = vmatmul.f32.gmra.mxu0 %v73
  %v420 = vpop.f32.mrf.mxu0
  %v421 = vadd.f32 0.0, %v420
  %422 = vmatmul.f32.gmra.mxu0 %v74
  %v423 = vpop.f32.mrf.mxu0
  %v424 = vadd.f32 0.0, %v423
  %425 = vmatmul.f32.gmra.mxu0 %v75
  %v426 = vpop.f32.mrf.mxu0
  %v427 = vadd.f32 0.0, %v426
  %428 = vmatmul.f32.gmra.mxu0 %v76
  %v429 = vpop.f32.mrf.mxu0
  %v430 = vadd.f32 0.0, %v429
  %431 = vmatmul.f32.gmra.mxu0 %v77
  %v432 = vpop.f32.mrf.mxu0
  %v433 = vadd.f32 0.0, %v432
  %434 = vmatmul.f32.gmra.mxu0 %v78
  %v435 = vpop.f32.mrf.mxu0
  %v436 = vadd.f32 0.0, %v435
  %437 = vmatmul.f32.gmra.mxu0 %v79
  %v438 = vpop.f32.mrf.mxu0
  %v439 = vadd.f32 0.0, %v438
  %440 = vmatmul.f32.gmra.mxu0 %v80
  %v441 = vpop.f32.mrf.mxu0
  %v442 = vadd.f32 0.0, %v441
  %443 = vmatmul.f32.gmra.mxu0 %v81
  %v444 = vpop.f32.mrf.mxu0
  %v445 = vadd.f32 0.0, %v444
  %446 = vmatmul.f32.gmra.mxu0 %v82
  %v447 = vpop.f32.mrf.mxu0
  %v448 = vadd.f32 0.0, %v447
  %449 = vmatmul.f32.gmra.mxu0 %v83
  %v450 = vpop.f32.mrf.mxu0
  %v451 = vadd.f32 0.0, %v450
  %452 = vmatmul.f32.gmra.mxu0 %v84
  %v453 = vpop.f32.mrf.mxu0
  %v454 = vadd.f32 0.0, %v453
  %455 = vmatmul.f32.gmra.mxu0 %v85
  %v456 = vpop.f32.mrf.mxu0
  %v457 = vadd.f32 0.0, %v456
  %458 = vmatmul.f32.gmra.mxu0 %v86
  %v459 = vpop.f32.mrf.mxu0
  %v460 = vadd.f32 0.0, %v459
  %461 = vmatmul.f32.gmra.mxu0 %v87
  %v462 = vpop.f32.mrf.mxu0
  %v463 = vadd.f32 0.0, %v462
  %464 = vmatmul.f32.gmra.mxu0 %v88
  %v465 = vpop.f32.mrf.mxu0
  %v466 = vadd.f32 0.0, %v465
  %467 = vmatmul.f32.gmra.mxu0 %v89
  %v468 = vpop.f32.mrf.mxu0
  %v469 = vadd.f32 0.0, %v468
  %470 = vmatmul.f32.gmra.mxu0 %v90
  %v471 = vpop.f32.mrf.mxu0
  %v472 = vadd.f32 0.0, %v471
  %473 = vmatmul.f32.gmra.mxu0 %v91
  %v474 = vpop.f32.mrf.mxu0
  %v475 = vadd.f32 0.0, %v474
  %476 = vmatmul.f32.gmra.mxu0 %v92
  %v477 = vpop.f32.mrf.mxu0
  %v478 = vadd.f32 0.0, %v477
  %479 = vmatmul.f32.gmra.mxu0 %v93
  %v480 = vpop.f32.mrf.mxu0
  %v481 = vadd.f32 0.0, %v480
  %482 = vmatmul.f32.gmra.mxu0 %v94
  %v483 = vpop.f32.mrf.mxu0
  %v484 = vadd.f32 0.0, %v483
  %485 = vmatmul.f32.gmra.mxu0 %v95
  %v486 = vpop.f32.mrf.mxu0
  %v487 = vadd.f32 0.0, %v486
  %488 = vmatmul.f32.gmra.mxu0 %v96
  %v489 = vpop.f32.mrf.mxu0
  %v490 = vadd.f32 0.0, %v489
  %491 = vmatmul.f32.gmra.mxu0 %v97
  %v492 = vpop.f32.mrf.mxu0
  %v493 = vadd.f32 0.0, %v492
  %494 = vmatmul.f32.gmra.mxu0 %v98
  %v495 = vpop.f32.mrf.mxu0
  %v496 = vadd.f32 0.0, %v495
  %497 = vmatmul.f32.gmra.mxu0 %v99
  %v498 = vpop.f32.mrf.mxu0
  %v499 = vadd.f32 0.0, %v498
  %500 = vmatmul.f32.gmra.mxu0 %v100
  %v501 = vpop.f32.mrf.mxu0
  %v502 = vadd.f32 0.0, %v501
  %503 = vmatmul.f32.gmra.mxu0 %v101
  %v504 = vpop.f32.mrf.mxu0
  %v505 = vadd.f32 0.0, %v504
  %506 = vmatmul.f32.gmra.mxu0 %v102
  %v507 = vpop.f32.mrf.mxu0
  %v508 = vadd.f32 0.0, %v507
  %509 = vmatmul.f32.gmra.mxu0 %v103
  %v510 = vpop.f32.mrf.mxu0
  %v511 = vadd.f32 0.0, %v510
  %512 = vmatmul.f32.gmra.mxu0 %v104
  %v513 = vpop.f32.mrf.mxu0
  %v514 = vadd.f32 0.0, %v513
  %515 = vmatmul.f32.gmra.mxu0 %v105
  %v516 = vpop.f32.mrf.mxu0
  %v517 = vadd.f32 0.0, %v516
  %518 = vmatmul.f32.gmra.mxu0 %v106
  %v519 = vpop.f32.mrf.mxu0
  %v520 = vadd.f32 0.0, %v519
  %521 = vmatmul.f32.gmra.mxu0 %v107
  %v522 = vpop.f32.mrf.mxu0
  %v523 = vadd.f32 0.0, %v522
  %524 = vmatmul.f32.gmra.mxu0 %v108
  %v525 = vpop.f32.mrf.mxu0
  %v526 = vadd.f32 0.0, %v525
  %527 = vmatmul.f32.gmra.mxu0 %v109
  %v528 = vpop.f32.mrf.mxu0
  %v529 = vadd.f32 0.0, %v528
  %530 = vmatmul.f32.gmra.mxu0 %v110
  %v531 = vpop.f32.mrf.mxu0
  %v532 = vadd.f32 0.0, %v531
  %533 = vmatmul.f32.gmra.mxu0 %v111
  %v534 = vpop.f32.mrf.mxu0
  %v535 = vadd.f32 0.0, %v534
  %536 = vmatmul.f32.gmra.mxu0 %v112
  %v537 = vpop.f32.mrf.mxu0
  %v538 = vadd.f32 0.0, %v537
  %539 = vmatmul.f32.gmra.mxu0 %v113
  %v540 = vpop.f32.mrf.mxu0
  %v541 = vadd.f32 0.0, %v540
  %542 = vmatmul.f32.gmra.mxu0 %v114
  %v543 = vpop.f32.mrf.mxu0
  %v544 = vadd.f32 0.0, %v543
  %545 = vmatmul.f32.gmra.mxu0 %v115
  %v546 = vpop.f32.mrf.mxu0
  %v547 = vadd.f32 0.0, %v546
  %548 = vmatmul.f32.gmra.mxu0 %v116
  %v549 = vpop.f32.mrf.mxu0
  %v550 = vadd.f32 0.0, %v549
  %551 = vmatmul.f32.gmra.mxu0 %v117
  %v552 = vpop.f32.mrf.mxu0
  %v553 = vadd.f32 0.0, %v552
  %554 = vmatmul.f32.gmra.mxu0 %v118
  %v555 = vpop.f32.mrf.mxu0
  %v556 = vadd.f32 0.0, %v555
  %557 = vmatmul.f32.gmra.mxu0 %v119
  %v558 = vpop.f32.mrf.mxu0
  %v559 = vadd.f32 0.0, %v558
  %560 = vmatmul.f32.gmra.mxu0 %v120
  %v561 = vpop.f32.mrf.mxu0
  %v562 = vadd.f32 0.0, %v561
  %563 = vmatmul.f32.gmra.mxu0 %v121
  %v564 = vpop.f32.mrf.mxu0
  %v565 = vadd.f32 0.0, %v564
  %566 = vmatmul.f32.gmra.mxu0 %v122
  %v567 = vpop.f32.mrf.mxu0
  %v568 = vadd.f32 0.0, %v567
  %569 = vmatmul.f32.gmra.mxu0 %v123
  %v570 = vpop.f32.mrf.mxu0
  %v571 = vadd.f32 0.0, %v570
  %572 = vmatmul.f32.gmra.mxu0 %v124
  %v573 = vpop.f32.mrf.mxu0
  %v574 = vadd.f32 0.0, %v573
  %575 = vmatmul.f32.gmra.mxu0 %v125
  %v576 = vpop.f32.mrf.mxu0
  %v577 = vadd.f32 0.0, %v576
  %578 = vmatmul.f32.gmra.mxu0 %v126
  %v579 = vpop.f32.mrf.mxu0
  %v580 = vadd.f32 0.0, %v579
  %581 = vmatmul.f32.gmra.mxu0 %v127
  %v582 = vpop.f32.mrf.mxu0
  %v583 = vadd.f32 0.0, %v582
  %584 = vmatmul.f32.gmra.mxu0 %v128
  %v585 = vpop.f32.mrf.mxu0
  %v586 = vadd.f32 0.0, %v585
  %587 = vmatmul.f32.gmra.mxu0 %v129
  %v588 = vpop.f32.mrf.mxu0
  %v589 = vadd.f32 0.0, %v588
  %590 = vmatmul.f32.gmra.mxu0 %v130
  %v591 = vpop.f32.mrf.mxu0
  %v592 = vadd.f32 0.0, %v591
  %593 = vmatmul.f32.gmra.mxu0 %v131
  %v594 = vpop.f32.mrf.mxu0
  %v595 = vadd.f32 0.0, %v594
  %596 = vmatmul.f32.gmra.mxu0 %v132
  %v597 = vpop.f32.mrf.mxu0
  %v598 = vadd.f32 0.0, %v597
  %599 = vmatmul.f32.gmra.mxu0 %v133
  %v600 = vpop.f32.mrf.mxu0
  %v601 = vadd.f32 0.0, %v600
  %602 = vmatmul.f32.gmra.mxu0 %v134
  %v603 = vpop.f32.mrf.mxu0
  %v604 = vadd.f32 0.0, %v603
  %605 = vmatmul.f32.gmra.mxu0 %v135
  %v606 = vpop.f32.mrf.mxu0
  %v607 = vadd.f32 0.0, %v606
  %608 = vmatmul.f32.gmra.mxu0 %v136
  %v609 = vpop.f32.mrf.mxu0
  %v610 = vadd.f32 0.0, %v609
  %611 = vmatmul.f32.gmra.mxu0 %v137
  %v612 = vpop.f32.mrf.mxu0
  %v613 = vadd.f32 0.0, %v612
  %614 = vmatmul.f32.gmra.mxu0 %v138
  %v615 = vpop.f32.mrf.mxu0
  %v616 = vadd.f32 0.0, %v615
  %617 = vmatmul.f32.gmra.mxu0 %v139
  %v618 = vpop.f32.mrf.mxu0
  %v619 = vadd.f32 0.0, %v618
  %620 = vmatmul.f32.gmra.mxu0 %v140
  %v621 = vpop.f32.mrf.mxu0
  %v622 = vadd.f32 0.0, %v621
  %623 = vmatmul.f32.gmra.mxu0 %v141
  %v624 = vpop.f32.mrf.mxu0
  %v625 = vadd.f32 0.0, %v624
  %626 = vmatmul.f32.gmra.mxu0 %v142
  %v627 = vpop.f32.mrf.mxu0
  %v628 = vadd.f32 0.0, %v627
  %629 = vmatmul.f32.gmra.mxu0 %v143
  %v630 = vpop.f32.mrf.mxu0
  %v631 = vadd.f32 0.0, %v630
  %632 = vmatmul.f32.gmra.mxu0 %v144
  %v633 = vpop.f32.mrf.mxu0
  %v634 = vadd.f32 0.0, %v633
  %635 = vmatmul.f32.gmra.mxu0 %v145
  %v636 = vpop.f32.mrf.mxu0
  %v637 = vadd.f32 0.0, %v636
  %638 = vmatmul.f32.gmra.mxu0 %v146
  %v639 = vpop.f32.mrf.mxu0
  %v640 = vadd.f32 0.0, %v639
  %641 = vmatmul.f32.gmra.mxu0 %v147
  %v642 = vpop.f32.mrf.mxu0
  %v643 = vadd.f32 0.0, %v642
  %644 = vmatmul.f32.gmra.mxu0 %v148
  %v645 = vpop.f32.mrf.mxu0
  %v646 = vadd.f32 0.0, %v645
  %647 = vmatmul.f32.gmra.mxu0 %v149
  %v648 = vpop.f32.mrf.mxu0
  %v649 = vadd.f32 0.0, %v648
  %650 = vmatmul.f32.gmra.mxu0 %v150
  %v651 = vpop.f32.mrf.mxu0
  %v652 = vadd.f32 0.0, %v651
  %653 = vmatmul.f32.gmra.mxu0 %v151
  %v654 = vpop.f32.mrf.mxu0
  %v655 = vadd.f32 0.0, %v654
  %656 = vmatmul.f32.gmra.mxu0 %v152
  %v657 = vpop.f32.mrf.mxu0
  %v658 = vadd.f32 0.0, %v657
  %659 = vmatmul.f32.gmra.mxu0 %v153
  %v660 = vpop.f32.mrf.mxu0
  %v661 = vadd.f32 0.0, %v660
  %662 = vmatmul.f32.gmra.mxu0 %v154
  %v663 = vpop.f32.mrf.mxu0
  %v664 = vadd.f32 0.0, %v663
  %665 = vmatmul.f32.gmra.mxu0 %v155
  %v666 = vpop.f32.mrf.mxu0
  %v667 = vadd.f32 0.0, %v666
  %668 = vmatmul.f32.gmra.mxu0 %v156
  %v669 = vpop.f32.mrf.mxu0
  %v670 = vadd.f32 0.0, %v669
  %671 = vmatmul.f32.gmra.mxu0 %v157
  %v672 = vpop.f32.mrf.mxu0
  %v673 = vadd.f32 0.0, %v672
  %674 = vmatmul.f32.gmra.mxu0 %v158
  %v675 = vpop.f32.mrf.mxu0
  %v676 = vadd.f32 0.0, %v675
  %677 = vmatmul.f32.gmra.mxu0 %v159
  %v678 = vpop.f32.mrf.mxu0
  %v679 = vadd.f32 0.0, %v678
  %680 = vmatmul.f32.gmra.mxu0 %v160
  %v681 = vpop.f32.mrf.mxu0
  %v682 = vadd.f32 0.0, %v681
  %683 = vmatmul.f32.gmra.mxu0 %v161
  %v684 = vpop.f32.mrf.mxu0
  %v685 = vadd.f32 0.0, %v684
  %686 = vmatmul.f32.gmra.mxu0 %v162
  %v687 = vpop.f32.mrf.mxu0
  %v688 = vadd.f32 0.0, %v687
  %689 = vmatmul.f32.gmra.mxu0 %v163
  %v690 = vpop.f32.mrf.mxu0
  %v691 = vadd.f32 0.0, %v690
  %692 = vmatmul.f32.gmra.mxu0 %v164
  %v693 = vpop.f32.mrf.mxu0
  %v694 = vadd.f32 0.0, %v693
  %695 = vmatmul.f32.gmra.mxu0 %v165
  %v696 = vpop.f32.mrf.mxu0
  %v697 = vadd.f32 0.0, %v696
  %698 = vmatmul.f32.gmra.mxu0 %v166
  %v699 = vpop.f32.mrf.mxu0
  %v700 = vadd.f32 0.0, %v699
  %701 = vmatmul.f32.gmra.mxu0 %v167
  %v702 = vpop.f32.mrf.mxu0
  %v703 = vadd.f32 0.0, %v702
  %704 = vmatmul.f32.gmra.mxu0 %v168
  %v705 = vpop.f32.mrf.mxu0
  %v706 = vadd.f32 0.0, %v705
  %707 = vmatmul.f32.gmra.mxu0 %v169
  %v708 = vpop.f32.mrf.mxu0
  %v709 = vadd.f32 0.0, %v708
  %710 = vmatmul.f32.gmra.mxu0 %v170
  %v711 = vpop.f32.mrf.mxu0
  %v712 = vadd.f32 0.0, %v711
  %713 = vmatmul.f32.gmra.mxu0 %v171
  %v714 = vpop.f32.mrf.mxu0
  %v715 = vadd.f32 0.0, %v714
  %716 = vmatmul.f32.gmra.mxu0 %v172
  %v717 = vpop.f32.mrf.mxu0
  %v718 = vadd.f32 0.0, %v717
  %719 = vmatmul.f32.gmra.mxu0 %v173
  %v720 = vpop.f32.mrf.mxu0
  %v721 = vadd.f32 0.0, %v720
  %722 = vmatmul.f32.gmra.mxu0 %v174
  %v723 = vpop.f32.mrf.mxu0
  %v724 = vadd.f32 0.0, %v723
  %725 = vmatmul.f32.gmra.mxu0 %v175
  %v726 = vpop.f32.mrf.mxu0
  %v727 = vadd.f32 0.0, %v726
  %728 = vmatmul.f32.gmra.mxu0 %v176
  %v729 = vpop.f32.mrf.mxu0
  %v730 = vadd.f32 0.0, %v729
  %731 = vmatmul.f32.gmra.mxu0 %v177
  %v732 = vpop.f32.mrf.mxu0
  %v733 = vadd.f32 0.0, %v732
  %734 = vmatmul.f32.gmra.mxu0 %v178
  %v735 = vpop.f32.mrf.mxu0
  %v736 = vadd.f32 0.0, %v735
  %737 = vmatmul.f32.gmra.mxu0 %v179
  %v738 = vpop.f32.mrf.mxu0
  %v739 = vadd.f32 0.0, %v738
  %740 = vmatmul.f32.gmra.mxu0 %v180
  %v741 = vpop.f32.mrf.mxu0
  %v742 = vadd.f32 0.0, %v741
  %743 = vmatmul.f32.gmra.mxu0 %v181
  %v744 = vpop.f32.mrf.mxu0
  %v745 = vadd.f32 0.0, %v744
  %746 = vmatmul.f32.gmra.mxu0 %v182
  %v747 = vpop.f32.mrf.mxu0
  %v748 = vadd.f32 0.0, %v747
  %749 = vmatmul.f32.gmra.mxu0 %v183
  %v750 = vpop.f32.mrf.mxu0
  %v751 = vadd.f32 0.0, %v750
  %752 = vmatmul.f32.gmra.mxu0 %v184
  %v753 = vpop.f32.mrf.mxu0
  %v754 = vadd.f32 0.0, %v753
  %755 = vmatmul.f32.gmra.mxu0 %v185
  %v756 = vpop.f32.mrf.mxu0
  %v757 = vadd.f32 0.0, %v756
  %758 = vmatmul.f32.gmra.mxu0 %v186
  %v759 = vpop.f32.mrf.mxu0
  %v760 = vadd.f32 0.0, %v759
  %761 = vmatmul.f32.gmra.mxu0 %v187
  %v762 = vpop.f32.mrf.mxu0
  %v763 = vadd.f32 0.0, %v762
  %764 = vmatmul.f32.gmra.mxu0 %v188
  %v765 = vpop.f32.mrf.mxu0
  %v766 = vadd.f32 0.0, %v765
  %767 = vmatmul.f32.gmra.mxu0 %v189
  %v768 = vpop.f32.mrf.mxu0
  %v769 = vadd.f32 0.0, %v768
  %770 = vmatmul.f32.gmra.mxu0 %v190
  %v771 = vpop.f32.mrf.mxu0
  %v772 = vadd.f32 0.0, %v771
  %773 = vmatmul.f32.gmra.mxu0 %v191
  %v774 = vpop.f32.mrf.mxu0
  %v775 = vadd.f32 0.0, %v774
  %776 = vmatmul.f32.gmra.mxu0 %v192
  %v777 = vpop.f32.mrf.mxu0
  %v778 = vadd.f32 0.0, %v777
  %779 = vmatmul.f32.gmra.mxu0 %v193
  %v780 = vpop.f32.mrf.mxu0
  %v781 = vadd.f32 0.0, %v780
  %782 = vmatmul.f32.gmra.mxu0 %v194
  %v783 = vpop.f32.mrf.mxu0
  %v784 = vadd.f32 0.0, %v783
  %785 = vmatmul.f32.gmra.mxu0 %v195
  %v786 = vpop.f32.mrf.mxu0
  %v787 = vadd.f32 0.0, %v786
  %788 = vmatmul.f32.gmra.mxu0 %v196
  %v789 = vpop.f32.mrf.mxu0
  %v790 = vadd.f32 0.0, %v789
  %791 = vmatmul.f32.gmra.mxu0 %v197
  %v792 = vpop.f32.mrf.mxu0
  %v793 = vadd.f32 0.0, %v792
  %794 = vmatmul.f32.gmra.mxu0 %v198
  %v795 = vpop.f32.mrf.mxu0
  %v796 = vadd.f32 0.0, %v795
  %797 = vmatmul.f32.gmra.mxu0 %v199
  %v798 = vpop.f32.mrf.mxu0
  %v799 = vadd.f32 0.0, %v798
  %800 = vmatmul.f32.gmra.mxu0 %v200
  %v801 = vpop.f32.mrf.mxu0
  %v802 = vadd.f32 0.0, %v801
  %803 = vmatmul.f32.gmra.mxu0 %v201
  %v804 = vpop.f32.mrf.mxu0
  %v805 = vadd.f32 0.0, %v804
  %806 = vmatmul.f32.gmra.mxu0 %v202
  %v807 = vpop.f32.mrf.mxu0
  %v808 = vadd.f32 0.0, %v807
  %809 = vmatmul.f32.gmra.mxu0 %v203
  %v810 = vpop.f32.mrf.mxu0
  %v811 = vadd.f32 0.0, %v810
  %812 = vmatmul.f32.gmra.mxu0 %v204
  %v813 = vpop.f32.mrf.mxu0
  %v814 = vadd.f32 0.0, %v813
  %815 = vmatmul.f32.gmra.mxu0 %v205
  %v816 = vpop.f32.mrf.mxu0
  %v817 = vadd.f32 0.0, %v816
  %818 = vmatmul.f32.gmra.mxu0 %v206
  %v819 = vpop.f32.mrf.mxu0
  %v820 = vadd.f32 0.0, %v819
  %821 = vmatmul.f32.gmra.mxu0 %v207
  %v822 = vpop.f32.mrf.mxu0
  %v823 = vadd.f32 0.0, %v822
  %824 = vmatmul.f32.gmra.mxu0 %v208
  %v825 = vpop.f32.mrf.mxu0
  %v826 = vadd.f32 0.0, %v825
  %827 = vmatmul.f32.gmra.mxu0 %v209
  %v828 = vpop.f32.mrf.mxu0
  %v829 = vadd.f32 0.0, %v828
  %830 = vdwg.mxu0
  %831 = vst [vmem:[#allocation2] sm:$0xff] %v244
  %832 = vst [vmem:[#allocation2 + $0x8] sm:$0xff] %v247
  %833 = vst [vmem:[#allocation2 + $0x10] sm:$0xff] %v250
  %834 = vst [vmem:[#allocation2 + $0x18] sm:$0xff] %v253
  %835 = vst [vmem:[#allocation2 + $0x20] sm:$0xff] %v256
  %836 = vst [vmem:[#allocation2 + $0x28] sm:$0xff] %v259
  %837 = vst [vmem:[#allocation2 + $0x30] sm:$0xff] %v262
  %838 = vst [vmem:[#allocation2 + $0x38] sm:$0xff] %v265
  %839 = vst [vmem:[#allocation2 + $0x40] sm:$0xff] %v268
  %840 = vst [vmem:[#allocation2 + $0x48] sm:$0xff] %v271
  %841 = vst [vmem:[#allocation2 + $0x50] sm:$0xff] %v274
  %842 = vst [vmem:[#allocation2 + $0x58] sm:$0xff] %v277
  %843 = vst [vmem:[#allocation2 + $0x60] sm:$0xff] %v280
  %844 = vst [vmem:[#allocation2 + $0x68] sm:$0xff] %v283
  %845 = vst [vmem:[#allocation2 + $0x70] sm:$0xff] %v286
  %846 = vst [vmem:[#allocation2 + $0x78] sm:$0xff] %v289
  %847 = vst [vmem:[#allocation2 + $0x80] sm:$0xff] %v292
  %848 = vst [vmem:[#allocation2 + $0x88] sm:$0xff] %v295
  %849 = vst [vmem:[#allocation2 + $0x90] sm:$0xff] %v298
  %850 = vst [vmem:[#allocation2 + $0x98] sm:$0xff] %v301
  %851 = vst [vmem:[#allocation2 + $0xa0] sm:$0xff] %v304
  %852 = vst [vmem:[#allocation2 + $0xa8] sm:$0xff] %v307
  %853 = vst [vmem:[#allocation2 + $0xb0] sm:$0xff] %v310
  %854 = vst [vmem:[#allocation2 + $0xb8] sm:$0xff] %v313
  %855 = vst [vmem:[#allocation2 + $0xc0] sm:$0xff] %v316
  %856 = vst [vmem:[#allocation2 + $0xc8] sm:$0xff] %v319
  %857 = vst [vmem:[#allocation2 + $0xd0] sm:$0xff] %v322
  %858 = vst [vmem:[#allocation2 + $0xd8] sm:$0xff] %v325
  %859 = vst [vmem:[#allocation2 + $0xe0] sm:$0xff] %v328
  %860 = vst [vmem:[#allocation2 + $0xe8] sm:$0xff] %v331
  %861 = vst [vmem:[#allocation2 + $0xf0] sm:$0xff] %v334
  %862 = vst [vmem:[#allocation2 + $0xf8] sm:$0xff] %v337
  %863 = vst [vmem:[#allocation2 + $0x100] sm:$0xff] %v340
  %864 = vst [vmem:[#allocation2 + $0x108] sm:$0xff] %v343
  %865 = vst [vmem:[#allocation2 + $0x110] sm:$0xff] %v346
  %866 = vst [vmem:[#allocation2 + $0x118] sm:$0xff] %v349
  %867 = vst [vmem:[#allocation2 + $0x120] sm:$0xff] %v352
  %868 = vst [vmem:[#allocation2 + $0x128] sm:$0xff] %v355
  %869 = vst [vmem:[#allocation2 + $0x130] sm:$0xff] %v358
  %870 = vst [vmem:[#allocation2 + $0x138] sm:$0xff] %v361
  %871 = vst [vmem:[#allocation2 + $0x140] sm:$0xff] %v364
  %872 = vst [vmem:[#allocation2 + $0x148] sm:$0xff] %v367
  %873 = vst [vmem:[#allocation2 + $0x150] sm:$0xff] %v370
  %874 = vst [vmem:[#allocation2 + $0x158] sm:$0xff] %v373
  %875 = vst [vmem:[#allocation2 + $0x160] sm:$0xff] %v376
  %876 = vst [vmem:[#allocation2 + $0x168] sm:$0xff] %v379
  %877 = vst [vmem:[#allocation2 + $0x170] sm:$0xff] %v382
  %878 = vst [vmem:[#allocation2 + $0x178] sm:$0xff] %v385
  %879 = vst [vmem:[#allocation2 + $0x180] sm:$0xff] %v388
  %880 = vst [vmem:[#allocation2 + $0x188] sm:$0xff] %v391
  %881 = vst [vmem:[#allocation2 + $0x190] sm:$0xff] %v394
  %882 = vst [vmem:[#allocation2 + $0x198] sm:$0xff] %v397
  %883 = vst [vmem:[#allocation2 + $0x1a0] sm:$0xff] %v400
  %884 = vst [vmem:[#allocation2 + $0x1a8] sm:$0xff] %v403
  %885 = vst [vmem:[#allocation2 + $0x1b0] sm:$0xff] %v406
  %886 = vst [vmem:[#allocation2 + $0x1b8] sm:$0xff] %v409
  %887 = vst [vmem:[#allocation2 + $0x1c0] sm:$0xff] %v412
  %888 = vst [vmem:[#allocation2 + $0x1c8] sm:$0xff] %v415
  %889 = vst [vmem:[#allocation2 + $0x1d0] sm:$0xff] %v418
  %890 = vst [vmem:[#allocation2 + $0x1d8] sm:$0xff] %v421
  %891 = vst [vmem:[#allocation2 + $0x1e0] sm:$0xff] %v424
  %892 = vst [vmem:[#allocation2 + $0x1e8] sm:$0xff] %v427
  %893 = vst [vmem:[#allocation2 + $0x1f0] sm:$0xff] %v430
  %894 = vst [vmem:[#allocation2 + $0x1f8] sm:$0xff] %v433
  %895 = vst [vmem:[#allocation2 + $0x200] sm:$0xff] %v436
  %896 = vst [vmem:[#allocation2 + $0x208] sm:$0xff] %v439
  %897 = vst [vmem:[#allocation2 + $0x210] sm:$0xff] %v442
  %898 = vst [vmem:[#allocation2 + $0x218] sm:$0xff] %v445
  %899 = vst [vmem:[#allocation2 + $0x220] sm:$0xff] %v448
  %900 = vst [vmem:[#allocation2 + $0x228] sm:$0xff] %v451
  %901 = vst [vmem:[#allocation2 + $0x230] sm:$0xff] %v454
  %902 = vst [vmem:[#allocation2 + $0x238] sm:$0xff] %v457
  %903 = vst [vmem:[#allocation2 + $0x240] sm:$0xff] %v460
  %904 = vst [vmem:[#allocation2 + $0x248] sm:$0xff] %v463
  %905 = vst [vmem:[#allocation2 + $0x250] sm:$0xff] %v466
  %906 = vst [vmem:[#allocation2 + $0x258] sm:$0xff] %v469
  %907 = vst [vmem:[#allocation2 + $0x260] sm:$0xff] %v472
  %908 = vst [vmem:[#allocation2 + $0x268] sm:$0xff] %v475
  %909 = vst [vmem:[#allocation2 + $0x270] sm:$0xff] %v478
  %910 = vst [vmem:[#allocation2 + $0x278] sm:$0xff] %v481
  %911 = vst [vmem:[#allocation2 + $0x280] sm:$0xff] %v484
  %912 = vst [vmem:[#allocation2 + $0x288] sm:$0xff] %v487
  %913 = vst [vmem:[#allocation2 + $0x290] sm:$0xff] %v490
  %914 = vst [vmem:[#allocation2 + $0x298] sm:$0xff] %v493
  %915 = vst [vmem:[#allocation2 + $0x2a0] sm:$0xff] %v496
  %916 = vst [vmem:[#allocation2 + $0x2a8] sm:$0xff] %v499
  %917 = vst [vmem:[#allocation2 + $0x2b0] sm:$0xff] %v502
  %918 = vst [vmem:[#allocation2 + $0x2b8] sm:$0xff] %v505
  %919 = vst [vmem:[#allocation2 + $0x2c0] sm:$0xff] %v508
  %920 = vst [vmem:[#allocation2 + $0x2c8] sm:$0xff] %v511
  %921 = vst [vmem:[#allocation2 + $0x2d0] sm:$0xff] %v514
  %922 = vst [vmem:[#allocation2 + $0x2d8] sm:$0xff] %v517
  %923 = vst [vmem:[#allocation2 + $0x2e0] sm:$0xff] %v520
  %924 = vst [vmem:[#allocation2 + $0x2e8] sm:$0xff] %v523
  %925 = vst [vmem:[#allocation2 + $0x2f0] sm:$0xff] %v526
  %926 = vst [vmem:[#allocation2 + $0x2f8] sm:$0xff] %v529
  %927 = vst [vmem:[#allocation2 + $0x300] sm:$0xff] %v532
  %928 = vst [vmem:[#allocation2 + $0x308] sm:$0xff] %v535
  %929 = vst [vmem:[#allocation2 + $0x310] sm:$0xff] %v538
  %930 = vst [vmem:[#allocation2 + $0x318] sm:$0xff] %v541
  %931 = vst [vmem:[#allocation2 + $0x320] sm:$0xff] %v544
  %932 = vst [vmem:[#allocation2 + $0x328] sm:$0xff] %v547
  %933 = vst [vmem:[#allocation2 + $0x330] sm:$0xff] %v550
  %934 = vst [vmem:[#allocation2 + $0x338] sm:$0xff] %v553
  %935 = vst [vmem:[#allocation2 + $0x340] sm:$0xff] %v556
  %936 = vst [vmem:[#allocation2 + $0x348] sm:$0xff] %v559
  %937 = vst [vmem:[#allocation2 + $0x350] sm:$0xff] %v562
  %938 = vst [vmem:[#allocation2 + $0x358] sm:$0xff] %v565
  %939 = vst [vmem:[#allocation2 + $0x360] sm:$0xff] %v568
  %940 = vst [vmem:[#allocation2 + $0x368] sm:$0xff] %v571
  %941 = vst [vmem:[#allocation2 + $0x370] sm:$0xff] %v574
  %942 = vst [vmem:[#allocation2 + $0x378] sm:$0xff] %v577
  %943 = vst [vmem:[#allocation2 + $0x380] sm:$0xff] %v580
  %944 = vst [vmem:[#allocation2 + $0x388] sm:$0xff] %v583
  %945 = vst [vmem:[#allocation2 + $0x390] sm:$0xff] %v586
  %946 = vst [vmem:[#allocation2 + $0x398] sm:$0xff] %v589
  %947 = vst [vmem:[#allocation2 + $0x3a0] sm:$0xff] %v592
  %948 = vst [vmem:[#allocation2 + $0x3a8] sm:$0xff] %v595
  %949 = vst [vmem:[#allocation2 + $0x3b0] sm:$0xff] %v598
  %950 = vst [vmem:[#allocation2 + $0x3b8] sm:$0xff] %v601
  %951 = vst [vmem:[#allocation2 + $0x3c0] sm:$0xff] %v604
  %952 = vst [vmem:[#allocation2 + $0x3c8] sm:$0xff] %v607
  %953 = vst [vmem:[#allocation2 + $0x3d0] sm:$0xff] %v610
  %954 = vst [vmem:[#allocation2 + $0x3d8] sm:$0xff] %v613
  %955 = vst [vmem:[#allocation2 + $0x3e0] sm:$0xff] %v616
  %956 = vst [vmem:[#allocation2 + $0x3e8] sm:$0xff] %v619
  %957 = vst [vmem:[#allocation2 + $0x3f0] sm:$0xff] %v622
  %958 = vst [vmem:[#allocation2 + $0x3f8] sm:$0xff] %v625
  %959 = vst [vmem:[#allocation2 + $0x400] sm:$0xff] %v628
  %960 = vst [vmem:[#allocation2 + $0x408] sm:$0xff] %v631
  %961 = vst [vmem:[#allocation2 + $0x410] sm:$0xff] %v634
  %962 = vst [vmem:[#allocation2 + $0x418] sm:$0xff] %v637
  %963 = vst [vmem:[#allocation2 + $0x420] sm:$0xff] %v640
  %964 = vst [vmem:[#allocation2 + $0x428] sm:$0xff] %v643
  %965 = vst [vmem:[#allocation2 + $0x430] sm:$0xff] %v646
  %966 = vst [vmem:[#allocation2 + $0x438] sm:$0xff] %v649
  %967 = vst [vmem:[#allocation2 + $0x440] sm:$0xff] %v652
  %968 = vst [vmem:[#allocation2 + $0x448] sm:$0xff] %v655
  %969 = vst [vmem:[#allocation2 + $0x450] sm:$0xff] %v658
  %970 = vst [vmem:[#allocation2 + $0x458] sm:$0xff] %v661
  %971 = vst [vmem:[#allocation2 + $0x460] sm:$0xff] %v664
  %972 = vst [vmem:[#allocation2 + $0x468] sm:$0xff] %v667
  %973 = vst [vmem:[#allocation2 + $0x470] sm:$0xff] %v670
  %974 = vst [vmem:[#allocation2 + $0x478] sm:$0xff] %v673
  %975 = vst [vmem:[#allocation2 + $0x480] sm:$0xff] %v676
  %976 = vst [vmem:[#allocation2 + $0x488] sm:$0xff] %v679
  %977 = vst [vmem:[#allocation2 + $0x490] sm:$0xff] %v682
  %978 = vst [vmem:[#allocation2 + $0x498] sm:$0xff] %v685
  %979 = vst [vmem:[#allocation2 + $0x4a0] sm:$0xff] %v688
  %980 = vst [vmem:[#allocation2 + $0x4a8] sm:$0xff] %v691
  %981 = vst [vmem:[#allocation2 + $0x4b0] sm:$0xff] %v694
  %982 = vst [vmem:[#allocation2 + $0x4b8] sm:$0xff] %v697
  %983 = vst [vmem:[#allocation2 + $0x4c0] sm:$0xff] %v700
  %984 = vst [vmem:[#allocation2 + $0x4c8] sm:$0xff] %v703
  %985 = vst [vmem:[#allocation2 + $0x4d0] sm:$0xff] %v706
  %986 = vst [vmem:[#allocation2 + $0x4d8] sm:$0xff] %v709
  %987 = vst [vmem:[#allocation2 + $0x4e0] sm:$0xff] %v712
  %988 = vst [vmem:[#allocation2 + $0x4e8] sm:$0xff] %v715
  %989 = vst [vmem:[#allocation2 + $0x4f0] sm:$0xff] %v718
  %990 = vst [vmem:[#allocation2 + $0x4f8] sm:$0xff] %v721
  %991 = vst [vmem:[#allocation2 + $0x500] sm:$0xff] %v724
  %992 = vst [vmem:[#allocation2 + $0x508] sm:$0xff] %v727
  %993 = vst [vmem:[#allocation2 + $0x510] sm:$0xff] %v730
  %994 = vst [vmem:[#allocation2 + $0x518] sm:$0xff] %v733
  %995 = vst [vmem:[#allocation2 + $0x520] sm:$0xff] %v736
  %996 = vst [vmem:[#allocation2 + $0x528] sm:$0xff] %v739
  %997 = vst [vmem:[#allocation2 + $0x530] sm:$0xff] %v742
  %998 = vst [vmem:[#allocation2 + $0x538] sm:$0xff] %v745
  %999 = vst [vmem:[#allocation2 + $0x540] sm:$0xff] %v748
  %1000 = vst [vmem:[#allocation2 + $0x548] sm:$0xff] %v751
  %1001 = vst [vmem:[#allocation2 + $0x550] sm:$0xff] %v754
  %1002 = vst [vmem:[#allocation2 + $0x558] sm:$0xff] %v757
  %1003 = vst [vmem:[#allocation2 + $0x560] sm:$0xff] %v760
  %1004 = vst [vmem:[#allocation2 + $0x568] sm:$0xff] %v763
  %1005 = vst [vmem:[#allocation2 + $0x570] sm:$0xff] %v766
  %1006 = vst [vmem:[#allocation2 + $0x578] sm:$0xff] %v769
  %1007 = vst [vmem:[#allocation2 + $0x580] sm:$0xff] %v772
  %1008 = vst [vmem:[#allocation2 + $0x588] sm:$0xff] %v775
  %1009 = vst [vmem:[#allocation2 + $0x590] sm:$0xff] %v778
  %1010 = vst [vmem:[#allocation2 + $0x598] sm:$0xff] %v781
  %1011 = vst [vmem:[#allocation2 + $0x5a0] sm:$0xff] %v784
  %1012 = vst [vmem:[#allocation2 + $0x5a8] sm:$0xff] %v787
  %1013 = vst [vmem:[#allocation2 + $0x5b0] sm:$0xff] %v790
  %1014 = vst [vmem:[#allocation2 + $0x5b8] sm:$0xff] %v793
  %1015 = vst [vmem:[#allocation2 + $0x5c0] sm:$0xff] %v796
  %1016 = vst [vmem:[#allocation2 + $0x5c8] sm:$0xff] %v799
  %1017 = vst [vmem:[#allocation2 + $0x5d0] sm:$0xff] %v802
  %1018 = vst [vmem:[#allocation2 + $0x5d8] sm:$0xff] %v805
  %1019 = vst [vmem:[#allocation2 + $0x5e0] sm:$0xff] %v808
  %1020 = vst [vmem:[#allocation2 + $0x5e8] sm:$0xff] %v811
  %1021 = vst [vmem:[#allocation2 + $0x5f0] sm:$0xff] %v814
  %1022 = vst [vmem:[#allocation2 + $0x5f8] sm:$0xff] %v817
  %1023 = vst [vmem:[#allocation2 + $0x600] sm:$0xff] %v820
  %1024 = vst [vmem:[#allocation2 + $0x608] sm:$0xff] %v823
  %1025 = vst [vmem:[#allocation2 + $0x610] sm:$0xff] %v826
  %1026 = vst [vmem:[#allocation2 + $0x618] sm:$0xff] %v829
  %v1027 = vld [vmem:[%s2] sm:$0x1]
  %v1028 = vld [vmem:[#allocation2] sm:$0xff]
  %v1029 = vld [vmem:[#allocation2 + $0x8] sm:$0xff]
  %v1030 = vld [vmem:[#allocation2 + $0x10] sm:$0xff]
  %v1031 = vld [vmem:[#allocation2 + $0x18] sm:$0xf]
  %v1032 = vld [vmem:[#allocation2 + $0x1c] sm:$0xff]
  %v1033 = vld [vmem:[#allocation2 + $0x24] sm:$0xff]
  %v1034 = vld [vmem:[#allocation2 + $0x2c] sm:$0xff]
  %v1035 = vld [vmem:[#allocation2 + $0x34] sm:$0xf]
  %v1036 = vmax.f32 %v1028, %v1032
  %v1037 = vmax.f32 %v1029, %v1033
  %v1038 = vmax.f32 %v1030, %v1034
  %v1039 = vmax.f32 %v1031, %v1035
  %1040 = vst [vmem:[#allocation3] sm:$0xff] %v1036
  %1041 = vst [vmem:[#allocation3 + $0x8] sm:$0xff] %v1037
  %1042 = vst [vmem:[#allocation3 + $0x10] sm:$0xff] %v1038
  %1043 = vst [vmem:[#allocation3 + $0x18] sm:$0xf] %v1039
  %v1044 = vld [vmem:[#allocation2 + $0x38] sm:$0xff]
  %v1045 = vld [vmem:[#allocation2 + $0x40] sm:$0xff]
  %v1046 = vld [vmem:[#allocation2 + $0x48] sm:$0xff]
  %v1047 = vld [vmem:[#allocation2 + $0x50] sm:$0xf]
  %v1048 = vld [vmem:[#allocation2 + $0x54] sm:$0xff]
  %v1049 = vld [vmem:[#allocation2 + $0x5c] sm:$0xff]
  %v1050 = vld [vmem:[#allocation2 + $0x64] sm:$0xff]
  %v1051 = vld [vmem:[#allocation2 + $0x6c] sm:$0xf]
  %v1052 = vmax.f32 %v1044, %v1048
  %v1053 = vmax.f32 %v1045, %v1049
  %v1054 = vmax.f32 %v1046, %v1050
  %v1055 = vmax.f32 %v1047, %v1051
  %1056 = vst [vmem:[#allocation3 + $0x1c] sm:$0xff] %v1052
  %1057 = vst [vmem:[#allocation3 + $0x24] sm:$0xff] %v1053
  %1058 = vst [vmem:[#allocation3 + $0x2c] sm:$0xff] %v1054
  %1059 = vst [vmem:[#allocation3 + $0x34] sm:$0xf] %v1055
  %v1060 = vld [vmem:[#allocation2 + $0x70] sm:$0xff]
  %v1061 = vld [vmem:[#allocation2 + $0x78] sm:$0xff]
  %v1062 = vld [vmem:[#allocation2 + $0x80] sm:$0xff]
  %v1063 = vld [vmem:[#allocation2 + $0x88] sm:$0xf]
  %v1064 = vld [vmem:[#allocation2 + $0x8c] sm:$0xff]
  %v1065 = vld [vmem:[#allocation2 + $0x94] sm:$0xff]
  %v1066 = vld [vmem:[#allocation2 + $0x9c] sm:$0xff]
  %v1067 = vld [vmem:[#allocation2 + $0xa4] sm:$0xf]
  %v1068 = vmax.f32 %v1060, %v1064
  %v1069 = vmax.f32 %v1061, %v1065
  %v1070 = vmax.f32 %v1062, %v1066
  %v1071 = vmax.f32 %v1063, %v1067
  %1072 = vst [vmem:[#allocation3 + $0x38] sm:$0xff] %v1068
  %1073 = vst [vmem:[#allocation3 + $0x40] sm:$0xff] %v1069
  %1074 = vst [vmem:[#allocation3 + $0x48] sm:$0xff] %v1070
  %1075 = vst [vmem:[#allocation3 + $0x50] sm:$0xf] %v1071
  %v1076 = vld [vmem:[#allocation2 + $0xa8] sm:$0xff]
  %v1077 = vld [vmem:[#allocation2 + $0xb0] sm:$0xff]
  %v1078 = vld [vmem:[#allocation2 + $0xb8] sm:$0xff]
  %v1079 = vld [vmem:[#allocation2 + $0xc0] sm:$0xf]
  %v1080 = vld [vmem:[#allocation2 + $0xc4] sm:$0xff]
  %v1081 = vld [vmem:[#allocation2 + $0xcc] sm:$0xff]
  %v1082 = vld [vmem:[#allocation2 + $0xd4] sm:$0xff]
  %v1083 = vld [vmem:[#allocation2 + $0xdc] sm:$0xf]
  %v1084 = vmax.f32 %v1076, %v1080
  %v1085 = vmax.f32 %v1077, %v1081
  %v1086 = vmax.f32 %v1078, %v1082
  %v1087 = vmax.f32 %v1079, %v1083
  %1088 = vst [vmem:[#allocation3 + $0x54] sm:$0xff] %v1084
  %1089 = vst [vmem:[#allocation3 + $0x5c] sm:$0xff] %v1085
  %1090 = vst [vmem:[#allocation3 + $0x64] sm:$0xff] %v1086
  %1091 = vst [vmem:[#allocation3 + $0x6c] sm:$0xf] %v1087
  %v1092 = vld [vmem:[#allocation2 + $0xe0] sm:$0xff]
  %v1093 = vld [vmem:[#allocation2 + $0xe8] sm:$0xff]
  %v1094 = vld [vmem:[#allocation2 + $0xf0] sm:$0xff]
  %v1095 = vld [vmem:[#allocation2 + $0xf8] sm:$0xf]
  %v1096 = vld [vmem:[#allocation2 + $0xfc] sm:$0xff]
  %v1097 = vld [vmem:[#allocation2 + $0x104] sm:$0xff]
  %v1098 = vld [vmem:[#allocation2 + $0x10c] sm:$0xff]
  %v1099 = vld [vmem:[#allocation2 + $0x114] sm:$0xf]
  %v1100 = vmax.f32 %v1092, %v1096
  %v1101 = vmax.f32 %v1093, %v1097
  %v1102 = vmax.f32 %v1094, %v1098
  %v1103 = vmax.f32 %v1095, %v1099
  %1104 = vst [vmem:[#allocation3 + $0x70] sm:$0xff] %v1100
  %1105 = vst [vmem:[#allocation3 + $0x78] sm:$0xff] %v1101
  %1106 = vst [vmem:[#allocation3 + $0x80] sm:$0xff] %v1102
  %1107 = vst [vmem:[#allocation3 + $0x88] sm:$0xf] %v1103
  %v1108 = vld [vmem:[#allocation2 + $0x118] sm:$0xff]
  %v1109 = vld [vmem:[#allocation2 + $0x120] sm:$0xff]
  %v1110 = vld [vmem:[#allocation2 + $0x128] sm:$0xff]
  %v1111 = vld [vmem:[#allocation2 + $0x130] sm:$0xf]
  %v1112 = vld [vmem:[#allocation2 + $0x134] sm:$0xff]
  %v1113 = vld [vmem:[#allocation2 + $0x13c] sm:$0xff]
  %v1114 = vld [vmem:[#allocation2 + $0x144] sm:$0xff]
  %v1115 = vld [vmem:[#allocation2 + $0x14c] sm:$0xf]
  %v1116 = vmax.f32 %v1108, %v1112
  %v1117 = vmax.f32 %v1109, %v1113
  %v1118 = vmax.f32 %v1110, %v1114
  %v1119 = vmax.f32 %v1111, %v1115
  %1120 = vst [vmem:[#allocation3 + $0x8c] sm:$0xff] %v1116
  %1121 = vst [vmem:[#allocation3 + $0x94] sm:$0xff] %v1117
  %1122 = vst [vmem:[#allocation3 + $0x9c] sm:$0xff] %v1118
  %1123 = vst [vmem:[#allocation3 + $0xa4] sm:$0xf] %v1119
  %v1124 = vld [vmem:[#allocation2 + $0x150] sm:$0xff]
  %v1125 = vld [vmem:[#allocation2 + $0x158] sm:$0xff]
  %v1126 = vld [vmem:[#allocation2 + $0x160] sm:$0xff]
  %v1127 = vld [vmem:[#allocation2 + $0x168] sm:$0xf]
  %v1128 = vld [vmem:[#allocation2 + $0x16c] sm:$0xff]
  %v1129 = vld [vmem:[#allocation2 + $0x174] sm:$0xff]
  %v1130 = vld [vmem:[#allocation2 + $0x17c] sm:$0xff]
  %v1131 = vld [vmem:[#allocation2 + $0x184] sm:$0xf]
  %v1132 = vmax.f32 %v1124, %v1128
  %v1133 = vmax.f32 %v1125, %v1129
  %v1134 = vmax.f32 %v1126, %v1130
  %v1135 = vmax.f32 %v1127, %v1131
  %1136 = vst [vmem:[#allocation3 + $0xa8] sm:$0xff] %v1132
  %1137 = vst [vmem:[#allocation3 + $0xb0] sm:$0xff] %v1133
  %1138 = vst [vmem:[#allocation3 + $0xb8] sm:$0xff] %v1134
  %1139 = vst [vmem:[#allocation3 + $0xc0] sm:$0xf] %v1135
  %v1140 = vld [vmem:[#allocation2 + $0x188] sm:$0xff]
  %v1141 = vld [vmem:[#allocation2 + $0x190] sm:$0xff]
  %v1142 = vld [vmem:[#allocation2 + $0x198] sm:$0xff]
  %v1143 = vld [vmem:[#allocation2 + $0x1a0] sm:$0xf]
  %v1144 = vld [vmem:[#allocation2 + $0x1a4] sm:$0xff]
  %v1145 = vld [vmem:[#allocation2 + $0x1ac] sm:$0xff]
  %v1146 = vld [vmem:[#allocation2 + $0x1b4] sm:$0xff]
  %v1147 = vld [vmem:[#allocation2 + $0x1bc] sm:$0xf]
  %v1148 = vmax.f32 %v1140, %v1144
  %v1149 = vmax.f32 %v1141, %v1145
  %v1150 = vmax.f32 %v1142, %v1146
  %v1151 = vmax.f32 %v1143, %v1147
  %1152 = vst [vmem:[#allocation3 + $0xc4] sm:$0xff] %v1148
  %1153 = vst [vmem:[#allocation3 + $0xcc] sm:$0xff] %v1149
  %1154 = vst [vmem:[#allocation3 + $0xd4] sm:$0xff] %v1150
  %1155 = vst [vmem:[#allocation3 + $0xdc] sm:$0xf] %v1151
  %v1156 = vld [vmem:[#allocation2 + $0x1c0] sm:$0xff]
  %v1157 = vld [vmem:[#allocation2 + $0x1c8] sm:$0xff]
  %v1158 = vld [vmem:[#allocation2 + $0x1d0] sm:$0xff]
  %v1159 = vld [vmem:[#allocation2 + $0x1d8] sm:$0xf]
  %v1160 = vld [vmem:[#allocation2 + $0x1dc] sm:$0xff]
  %v1161 = vld [vmem:[#allocation2 + $0x1e4] sm:$0xff]
  %v1162 = vld [vmem:[#allocation2 + $0x1ec] sm:$0xff]
  %v1163 = vld [vmem:[#allocation2 + $0x1f4] sm:$0xf]
  %v1164 = vmax.f32 %v1156, %v1160
  %v1165 = vmax.f32 %v1157, %v1161
  %v1166 = vmax.f32 %v1158, %v1162
  %v1167 = vmax.f32 %v1159, %v1163
  %1168 = vst [vmem:[#allocation3 + $0xe0] sm:$0xff] %v1164
  %1169 = vst [vmem:[#allocation3 + $0xe8] sm:$0xff] %v1165
  %1170 = vst [vmem:[#allocation3 + $0xf0] sm:$0xff] %v1166
  %1171 = vst [vmem:[#allocation3 + $0xf8] sm:$0xf] %v1167
  %v1172 = vld [vmem:[#allocation2 + $0x1f8] sm:$0xff]
  %v1173 = vld [vmem:[#allocation2 + $0x200] sm:$0xff]
  %v1174 = vld [vmem:[#allocation2 + $0x208] sm:$0xff]
  %v1175 = vld [vmem:[#allocation2 + $0x210] sm:$0xf]
  %v1176 = vld [vmem:[#allocation2 + $0x214] sm:$0xff]
  %v1177 = vld [vmem:[#allocation2 + $0x21c] sm:$0xff]
  %v1178 = vld [vmem:[#allocation2 + $0x224] sm:$0xff]
  %v1179 = vld [vmem:[#allocation2 + $0x22c] sm:$0xf]
  %v1180 = vmax.f32 %v1172, %v1176
  %v1181 = vmax.f32 %v1173, %v1177
  %v1182 = vmax.f32 %v1174, %v1178
  %v1183 = vmax.f32 %v1175, %v1179
  %1184 = vst [vmem:[#allocation3 + $0xfc] sm:$0xff] %v1180
  %1185 = vst [vmem:[#allocation3 + $0x104] sm:$0xff] %v1181
  %1186 = vst [vmem:[#allocation3 + $0x10c] sm:$0xff] %v1182
  %1187 = vst [vmem:[#allocation3 + $0x114] sm:$0xf] %v1183
  %v1188 = vld [vmem:[#allocation2 + $0x230] sm:$0xff]
  %v1189 = vld [vmem:[#allocation2 + $0x238] sm:$0xff]
  %v1190 = vld [vmem:[#allocation2 + $0x240] sm:$0xff]
  %v1191 = vld [vmem:[#allocation2 + $0x248] sm:$0xf]
  %v1192 = vld [vmem:[#allocation2 + $0x24c] sm:$0xff]
  %v1193 = vld [vmem:[#allocation2 + $0x254] sm:$0xff]
  %v1194 = vld [vmem:[#allocation2 + $0x25c] sm:$0xff]
  %v1195 = vld [vmem:[#allocation2 + $0x264] sm:$0xf]
  %v1196 = vmax.f32 %v1188, %v1192
  %v1197 = vmax.f32 %v1189, %v1193
  %v1198 = vmax.f32 %v1190, %v1194
  %v1199 = vmax.f32 %v1191, %v1195
  %1200 = vst [vmem:[#allocation3 + $0x118] sm:$0xff] %v1196
  %1201 = vst [vmem:[#allocation3 + $0x120] sm:$0xff] %v1197
  %1202 = vst [vmem:[#allocation3 + $0x128] sm:$0xff] %v1198
  %1203 = vst [vmem:[#allocation3 + $0x130] sm:$0xf] %v1199
  %v1204 = vld [vmem:[#allocation2 + $0x268] sm:$0xff]
  %v1205 = vld [vmem:[#allocation2 + $0x270] sm:$0xff]
  %v1206 = vld [vmem:[#allocation2 + $0x278] sm:$0xff]
  %v1207 = vld [vmem:[#allocation2 + $0x280] sm:$0xf]
  %v1208 = vld [vmem:[#allocation2 + $0x284] sm:$0xff]
  %v1209 = vld [vmem:[#allocation2 + $0x28c] sm:$0xff]
  %v1210 = vld [vmem:[#allocation2 + $0x294] sm:$0xff]
  %v1211 = vld [vmem:[#allocation2 + $0x29c] sm:$0xf]
  %v1212 = vmax.f32 %v1204, %v1208
  %v1213 = vmax.f32 %v1205, %v1209
  %v1214 = vmax.f32 %v1206, %v1210
  %v1215 = vmax.f32 %v1207, %v1211
  %1216 = vst [vmem:[#allocation3 + $0x134] sm:$0xff] %v1212
  %1217 = vst [vmem:[#allocation3 + $0x13c] sm:$0xff] %v1213
  %1218 = vst [vmem:[#allocation3 + $0x144] sm:$0xff] %v1214
  %1219 = vst [vmem:[#allocation3 + $0x14c] sm:$0xf] %v1215
  %v1220 = vld [vmem:[#allocation2 + $0x2a0] sm:$0xff]
  %v1221 = vld [vmem:[#allocation2 + $0x2a8] sm:$0xff]
  %v1222 = vld [vmem:[#allocation2 + $0x2b0] sm:$0xff]
  %v1223 = vld [vmem:[#allocation2 + $0x2b8] sm:$0xf]
  %v1224 = vld [vmem:[#allocation2 + $0x2bc] sm:$0xff]
  %v1225 = vld [vmem:[#allocation2 + $0x2c4] sm:$0xff]
  %v1226 = vld [vmem:[#allocation2 + $0x2cc] sm:$0xff]
  %v1227 = vld [vmem:[#allocation2 + $0x2d4] sm:$0xf]
  %v1228 = vmax.f32 %v1220, %v1224
  %v1229 = vmax.f32 %v1221, %v1225
  %v1230 = vmax.f32 %v1222, %v1226
  %v1231 = vmax.f32 %v1223, %v1227
  %1232 = vst [vmem:[#allocation3 + $0x150] sm:$0xff] %v1228
  %1233 = vst [vmem:[#allocation3 + $0x158] sm:$0xff] %v1229
  %1234 = vst [vmem:[#allocation3 + $0x160] sm:$0xff] %v1230
  %1235 = vst [vmem:[#allocation3 + $0x168] sm:$0xf] %v1231
  %v1236 = vld [vmem:[#allocation2 + $0x2d8] sm:$0xff]
  %v1237 = vld [vmem:[#allocation2 + $0x2e0] sm:$0xff]
  %v1238 = vld [vmem:[#allocation2 + $0x2e8] sm:$0xff]
  %v1239 = vld [vmem:[#allocation2 + $0x2f0] sm:$0xf]
  %v1240 = vld [vmem:[#allocation2 + $0x2f4] sm:$0xff]
  %v1241 = vld [vmem:[#allocation2 + $0x2fc] sm:$0xff]
  %v1242 = vld [vmem:[#allocation2 + $0x304] sm:$0xff]
  %v1243 = vld [vmem:[#allocation2 + $0x30c] sm:$0xf]
  %v1244 = vmax.f32 %v1236, %v1240
  %v1245 = vmax.f32 %v1237, %v1241
  %v1246 = vmax.f32 %v1238, %v1242
  %v1247 = vmax.f32 %v1239, %v1243
  %1248 = vst [vmem:[#allocation3 + $0x16c] sm:$0xff] %v1244
  %1249 = vst [vmem:[#allocation3 + $0x174] sm:$0xff] %v1245
  %1250 = vst [vmem:[#allocation3 + $0x17c] sm:$0xff] %v1246
  %1251 = vst [vmem:[#allocation3 + $0x184] sm:$0xf] %v1247
  %v1252 = vld [vmem:[#allocation3] ss:$2 sm:$0xff]
  %s1253 = scalar_lea.vmem [#allocation3], 16
  %v1254 = vld [vmem:[%s1253] ss:$2 sm:$0xff]
  %s1255 = scalar_lea.vmem [#allocation3], 32
  %v1256 = vld [vmem:[%s1255] ss:$2 sm:$0xff]
  %s1257 = scalar_lea.vmem [#allocation3], 48
  %v1258 = vld [vmem:[%s1257] ss:$2 sm:$0xff]
  %s1259 = scalar_lea.vmem [#allocation3], 64
  %v1260 = vld [vmem:[%s1259] ss:$2 sm:$0xff]
  %s1261 = scalar_lea.vmem [#allocation3], 80
  %v1262 = vld [vmem:[%s1261] ss:$2 sm:$0xff]
  %s1263 = scalar_lea.vmem [#allocation3], 96
  %v1264 = vld [vmem:[%s1263] ss:$2 sm:$0xff]
  %s1265 = scalar_lea.vmem [#allocation3], 112
  %v1266 = vld [vmem:[%s1265] ss:$2 sm:$0xff]
  %s1267 = scalar_lea.vmem [#allocation3], 128
  %v1268 = vld [vmem:[%s1267] ss:$2 sm:$0xff]
  %s1269 = scalar_lea.vmem [#allocation3], 144
  %v1270 = vld [vmem:[%s1269] ss:$2 sm:$0xff]
  %s1271 = scalar_lea.vmem [#allocation3], 160
  %v1272 = vld [vmem:[%s1271] ss:$2 sm:$0xff]
  %s1273 = scalar_lea.vmem [#allocation3], 176
  %v1274 = vld [vmem:[%s1273] ss:$2 sm:$0xff]
  %s1275 = scalar_lea.vmem [#allocation3], 192
  %v1276 = vld [vmem:[%s1275] ss:$2 sm:$0xff]
  %s1277 = scalar_lea.vmem [#allocation3], 208
  %v1278 = vld [vmem:[%s1277] ss:$2 sm:$0xff]
  %s1279 = scalar_lea.vmem [#allocation3], 224
  %v1280 = vld [vmem:[%s1279] ss:$2 sm:$0xff]
  %s1281 = scalar_lea.vmem [#allocation3], 240
  %v1282 = vld [vmem:[%s1281] ss:$2 sm:$0xff]
  %s1283 = scalar_lea.vmem [#allocation3], 256
  %v1284 = vld [vmem:[%s1283] ss:$2 sm:$0xff]
  %s1285 = scalar_lea.vmem [#allocation3], 272
  %v1286 = vld [vmem:[%s1285] ss:$2 sm:$0xff]
  %s1287 = scalar_lea.vmem [#allocation3], 288
  %v1288 = vld [vmem:[%s1287] ss:$2 sm:$0xff]
  %s1289 = scalar_lea.vmem [#allocation3], 304
  %v1290 = vld [vmem:[%s1289] ss:$2 sm:$0xff]
  %s1291 = scalar_lea.vmem [#allocation3], 320
  %v1292 = vld [vmem:[%s1291] ss:$2 sm:$0xff]
  %s1293 = scalar_lea.vmem [#allocation3], 336
  %v1294 = vld [vmem:[%s1293] ss:$2 sm:$0xff]
  %s1295 = scalar_lea.vmem [#allocation3], 352
  %v1296 = vld [vmem:[%s1295] ss:$2 sm:$0xff]
  %s1297 = scalar_lea.vmem [#allocation3], 368
  %v1298 = vld [vmem:[%s1297] ss:$2 sm:$0xff]
  %s1299 = scalar_lea.vmem [#allocation3], 384
  %v1300 = vld [vmem:[%s1299] ss:$2 sm:$0xf]
  %s1301 = scalar_lea.vmem [#allocation3], 1
  %v1302 = vld [vmem:[%s1301] ss:$2 sm:$0xff]
  %s1303 = scalar_lea.vmem [#allocation3], 17
  %v1304 = vld [vmem:[%s1303] ss:$2 sm:$0xff]
  %s1305 = scalar_lea.vmem [#allocation3], 33
  %v1306 = vld [vmem:[%s1305] ss:$2 sm:$0xff]
  %s1307 = scalar_lea.vmem [#allocation3], 49
  %v1308 = vld [vmem:[%s1307] ss:$2 sm:$0xff]
  %s1309 = scalar_lea.vmem [#allocation3], 65
  %v1310 = vld [vmem:[%s1309] ss:$2 sm:$0xff]
  %s1311 = scalar_lea.vmem [#allocation3], 81
  %v1312 = vld [vmem:[%s1311] ss:$2 sm:$0xff]
  %s1313 = scalar_lea.vmem [#allocation3], 97
  %v1314 = vld [vmem:[%s1313] ss:$2 sm:$0xff]
  %s1315 = scalar_lea.vmem [#allocation3], 113
  %v1316 = vld [vmem:[%s1315] ss:$2 sm:$0xff]
  %s1317 = scalar_lea.vmem [#allocation3], 129
  %v1318 = vld [vmem:[%s1317] ss:$2 sm:$0xff]
  %s1319 = scalar_lea.vmem [#allocation3], 145
  %v1320 = vld [vmem:[%s1319] ss:$2 sm:$0xff]
  %s1321 = scalar_lea.vmem [#allocation3], 161
  %v1322 = vld [vmem:[%s1321] ss:$2 sm:$0xff]
  %s1323 = scalar_lea.vmem [#allocation3], 177
  %v1324 = vld [vmem:[%s1323] ss:$2 sm:$0xff]
  %s1325 = scalar_lea.vmem [#allocation3], 193
  %v1326 = vld [vmem:[%s1325] ss:$2 sm:$0xff]
  %s1327 = scalar_lea.vmem [#allocation3], 209
  %v1328 = vld [vmem:[%s1327] ss:$2 sm:$0xff]
  %s1329 = scalar_lea.vmem [#allocation3], 225
  %v1330 = vld [vmem:[%s1329] ss:$2 sm:$0xff]
  %s1331 = scalar_lea.vmem [#allocation3], 241
  %v1332 = vld [vmem:[%s1331] ss:$2 sm:$0xff]
  %s1333 = scalar_lea.vmem [#allocation3], 257
  %v1334 = vld [vmem:[%s1333] ss:$2 sm:$0xff]
  %s1335 = scalar_lea.vmem [#allocation3], 273
  %v1336 = vld [vmem:[%s1335] ss:$2 sm:$0xff]
  %s1337 = scalar_lea.vmem [#allocation3], 289
  %v1338 = vld [vmem:[%s1337] ss:$2 sm:$0xff]
  %s1339 = scalar_lea.vmem [#allocation3], 305
  %v1340 = vld [vmem:[%s1339] ss:$2 sm:$0xff]
  %s1341 = scalar_lea.vmem [#allocation3], 321
  %v1342 = vld [vmem:[%s1341] ss:$2 sm:$0xff]
  %s1343 = scalar_lea.vmem [#allocation3], 337
  %v1344 = vld [vmem:[%s1343] ss:$2 sm:$0xff]
  %s1345 = scalar_lea.vmem [#allocation3], 353
  %v1346 = vld [vmem:[%s1345] ss:$2 sm:$0xff]
  %s1347 = scalar_lea.vmem [#allocation3], 369
  %v1348 = vld [vmem:[%s1347] ss:$2 sm:$0xff]
  %s1349 = scalar_lea.vmem [#allocation3], 385
  %v1350 = vld [vmem:[%s1349] ss:$2 sm:$0xf]
  %v1351 = vmax.f32 %v1252, %v1302
  %v1352 = vmax.f32 %v1254, %v1304
  %v1353 = vmax.f32 %v1256, %v1306
  %v1354 = vmax.f32 %v1258, %v1308
  %v1355 = vmax.f32 %v1260, %v1310
  %v1356 = vmax.f32 %v1262, %v1312
  %v1357 = vmax.f32 %v1264, %v1314
  %v1358 = vmax.f32 %v1266, %v1316
  %v1359 = vmax.f32 %v1268, %v1318
  %v1360 = vmax.f32 %v1270, %v1320
  %v1361 = vmax.f32 %v1272, %v1322
  %v1362 = vmax.f32 %v1274, %v1324
  %v1363 = vmax.f32 %v1276, %v1326
  %v1364 = vmax.f32 %v1278, %v1328
  %v1365 = vmax.f32 %v1280, %v1330
  %v1366 = vmax.f32 %v1282, %v1332
  %v1367 = vmax.f32 %v1284, %v1334
  %v1368 = vmax.f32 %v1286, %v1336
  %v1369 = vmax.f32 %v1288, %v1338
  %v1370 = vmax.f32 %v1290, %v1340
  %v1371 = vmax.f32 %v1292, %v1342
  %v1372 = vmax.f32 %v1294, %v1344
  %v1373 = vmax.f32 %v1296, %v1346
  %v1374 = vmax.f32 %v1298, %v1348
  %v1375 = vmax.f32 %v1300, %v1350
  %v1377 = vperm.slane %v1027, 0
  %v1379 = vadd.f32 %v1351, %v1377
  %v1380 = vadd.f32 %v1352, %v1377
  %v1381 = vadd.f32 %v1353, %v1377
  %v1382 = vadd.f32 %v1354, %v1377
  %v1383 = vadd.f32 %v1355, %v1377
  %v1384 = vadd.f32 %v1356, %v1377
  %v1385 = vadd.f32 %v1357, %v1377
  %v1386 = vadd.f32 %v1358, %v1377
  %v1387 = vadd.f32 %v1359, %v1377
  %v1388 = vadd.f32 %v1360, %v1377
  %v1389 = vadd.f32 %v1361, %v1377
  %v1390 = vadd.f32 %v1362, %v1377
  %v1391 = vadd.f32 %v1363, %v1377
  %v1392 = vadd.f32 %v1364, %v1377
  %v1393 = vadd.f32 %v1365, %v1377
  %v1394 = vadd.f32 %v1366, %v1377
  %v1395 = vadd.f32 %v1367, %v1377
  %v1396 = vadd.f32 %v1368, %v1377
  %v1397 = vadd.f32 %v1369, %v1377
  %v1398 = vadd.f32 %v1370, %v1377
  %v1399 = vadd.f32 %v1371, %v1377
  %v1400 = vadd.f32 %v1372, %v1377
  %v1401 = vadd.f32 %v1373, %v1377
  %v1402 = vadd.f32 %v1374, %v1377
  %v1403 = vadd.f32 %v1375, %v1377
  %v1404 = vmax.f32 %v1379, 0.0
  %v1405 = vmax.f32 %v1380, 0.0
  %v1406 = vmax.f32 %v1381, 0.0
  %v1407 = vmax.f32 %v1382, 0.0
  %v1408 = vmax.f32 %v1383, 0.0
  %v1409 = vmax.f32 %v1384, 0.0
  %v1410 = vmax.f32 %v1385, 0.0
  %v1411 = vmax.f32 %v1386, 0.0
  %v1412 = vmax.f32 %v1387, 0.0
  %v1413 = vmax.f32 %v1388, 0.0
  %v1414 = vmax.f32 %v1389, 0.0
  %v1415 = vmax.f32 %v1390, 0.0
  %v1416 = vmax.f32 %v1391, 0.0
  %v1417 = vmax.f32 %v1392, 0.0
  %v1418 = vmax.f32 %v1393, 0.0
  %v1419 = vmax.f32 %v1394, 0.0
  %v1420 = vmax.f32 %v1395, 0.0
  %v1421 = vmax.f32 %v1396, 0.0
  %v1422 = vmax.f32 %v1397, 0.0
  %v1423 = vmax.f32 %v1398, 0.0
  %v1424 = vmax.f32 %v1399, 0.0
  %v1425 = vmax.f32 %v1400, 0.0
  %v1426 = vmax.f32 %v1401, 0.0
  %v1427 = vmax.f32 %v1402, 0.0
  %v1428 = vmax.f32 %v1403, 0.0
  %1429 = vst [vmem:[%s3] sm:$0xff] %v1404
  %1430 = vst [vmem:[%s3 + $0x8] sm:$0xff] %v1405
  %1431 = vst [vmem:[%s3 + $0x10] sm:$0xff] %v1406
  %1432 = vst [vmem:[%s3 + $0x18] sm:$0xff] %v1407
  %1433 = vst [vmem:[%s3 + $0x20] sm:$0xff] %v1408
  %1434 = vst [vmem:[%s3 + $0x28] sm:$0xff] %v1409
  %1435 = vst [vmem:[%s3 + $0x30] sm:$0xff] %v1410
  %1436 = vst [vmem:[%s3 + $0x38] sm:$0xff] %v1411
  %1437 = vst [vmem:[%s3 + $0x40] sm:$0xff] %v1412
  %1438 = vst [vmem:[%s3 + $0x48] sm:$0xff] %v1413
  %1439 = vst [vmem:[%s3 + $0x50] sm:$0xff] %v1414
  %1440 = vst [vmem:[%s3 + $0x58] sm:$0xff] %v1415
  %1441 = vst [vmem:[%s3 + $0x60] sm:$0xff] %v1416
  %1442 = vst [vmem:[%s3 + $0x68] sm:$0xff] %v1417
  %1443 = vst [vmem:[%s3 + $0x70] sm:$0xff] %v1418
  %1444 = vst [vmem:[%s3 + $0x78] sm:$0xff] %v1419
  %1445 = vst [vmem:[%s3 + $0x80] sm:$0xff] %v1420
  %1446 = vst [vmem:[%s3 + $0x88] sm:$0xff] %v1421
  %1447 = vst [vmem:[%s3 + $0x90] sm:$0xff] %v1422
  %1448 = vst [vmem:[%s3 + $0x98] sm:$0xff] %v1423
  %1449 = vst [vmem:[%s3 + $0xa0] sm:$0xff] %v1424
  %1450 = vst [vmem:[%s3 + $0xa8] sm:$0xff] %v1425
  %1451 = vst [vmem:[%s3 + $0xb0] sm:$0xff] %v1426
  %1452 = vst [vmem:[%s3 + $0xb8] sm:$0xff] %v1427
  %1453 = vst [vmem:[%s3 + $0xc0] sm:$0xf] %v1428
  %v1454 = vld [vmem:[#allocation2 + $0x310] sm:$0xff]
  %v1455 = vld [vmem:[#allocation2 + $0x318] sm:$0xff]
  %v1456 = vld [vmem:[#allocation2 + $0x320] sm:$0xff]
  %v1457 = vld [vmem:[#allocation2 + $0x328] sm:$0xf]
  %v1458 = vld [vmem:[#allocation2 + $0x32c] sm:$0xff]
  %v1459 = vld [vmem:[#allocation2 + $0x334] sm:$0xff]
  %v1460 = vld [vmem:[#allocation2 + $0x33c] sm:$0xff]
  %v1461 = vld [vmem:[#allocation2 + $0x344] sm:$0xf]
  %v1462 = vmax.f32 %v1454, %v1458
  %v1463 = vmax.f32 %v1455, %v1459
  %v1464 = vmax.f32 %v1456, %v1460
  %v1465 = vmax.f32 %v1457, %v1461
  %1466 = vst [vmem:[#allocation3] sm:$0xff] %v1462
  %1467 = vst [vmem:[#allocation3 + $0x8] sm:$0xff] %v1463
  %1468 = vst [vmem:[#allocation3 + $0x10] sm:$0xff] %v1464
  %1469 = vst [vmem:[#allocation3 + $0x18] sm:$0xf] %v1465
  %v1470 = vld [vmem:[#allocation2 + $0x348] sm:$0xff]
  %v1471 = vld [vmem:[#allocation2 + $0x350] sm:$0xff]
  %v1472 = vld [vmem:[#allocation2 + $0x358] sm:$0xff]
  %v1473 = vld [vmem:[#allocation2 + $0x360] sm:$0xf]
  %v1474 = vld [vmem:[#allocation2 + $0x364] sm:$0xff]
  %v1475 = vld [vmem:[#allocation2 + $0x36c] sm:$0xff]
  %v1476 = vld [vmem:[#allocation2 + $0x374] sm:$0xff]
  %v1477 = vld [vmem:[#allocation2 + $0x37c] sm:$0xf]
  %v1478 = vmax.f32 %v1470, %v1474
  %v1479 = vmax.f32 %v1471, %v1475
  %v1480 = vmax.f32 %v1472, %v1476
  %v1481 = vmax.f32 %v1473, %v1477
  %1482 = vst [vmem:[#allocation3 + $0x1c] sm:$0xff] %v1478
  %1483 = vst [vmem:[#allocation3 + $0x24] sm:$0xff] %v1479
  %1484 = vst [vmem:[#allocation3 + $0x2c] sm:$0xff] %v1480
  %1485 = vst [vmem:[#allocation3 + $0x34] sm:$0xf] %v1481
  %v1486 = vld [vmem:[#allocation2 + $0x380] sm:$0xff]
  %v1487 = vld [vmem:[#allocation2 + $0x388] sm:$0xff]
  %v1488 = vld [vmem:[#allocation2 + $0x390] sm:$0xff]
  %v1489 = vld [vmem:[#allocation2 + $0x398] sm:$0xf]
  %v1490 = vld [vmem:[#allocation2 + $0x39c] sm:$0xff]
  %v1491 = vld [vmem:[#allocation2 + $0x3a4] sm:$0xff]
  %v1492 = vld [vmem:[#allocation2 + $0x3ac] sm:$0xff]
  %v1493 = vld [vmem:[#allocation2 + $0x3b4] sm:$0xf]
  %v1494 = vmax.f32 %v1486, %v1490
  %v1495 = vmax.f32 %v1487, %v1491
  %v1496 = vmax.f32 %v1488, %v1492
  %v1497 = vmax.f32 %v1489, %v1493
  %1498 = vst [vmem:[#allocation3 + $0x38] sm:$0xff] %v1494
  %1499 = vst [vmem:[#allocation3 + $0x40] sm:$0xff] %v1495
  %1500 = vst [vmem:[#allocation3 + $0x48] sm:$0xff] %v1496
  %1501 = vst [vmem:[#allocation3 + $0x50] sm:$0xf] %v1497
  %v1502 = vld [vmem:[#allocation2 + $0x3b8] sm:$0xff]
  %v1503 = vld [vmem:[#allocation2 + $0x3c0] sm:$0xff]
  %v1504 = vld [vmem:[#allocation2 + $0x3c8] sm:$0xff]
  %v1505 = vld [vmem:[#allocation2 + $0x3d0] sm:$0xf]
  %v1506 = vld [vmem:[#allocation2 + $0x3d4] sm:$0xff]
  %v1507 = vld [vmem:[#allocation2 + $0x3dc] sm:$0xff]
  %v1508 = vld [vmem:[#allocation2 + $0x3e4] sm:$0xff]
  %v1509 = vld [vmem:[#allocation2 + $0x3ec] sm:$0xf]
  %v1510 = vmax.f32 %v1502, %v1506
  %v1511 = vmax.f32 %v1503, %v1507
  %v1512 = vmax.f32 %v1504, %v1508
  %v1513 = vmax.f32 %v1505, %v1509
  %1514 = vst [vmem:[#allocation3 + $0x54] sm:$0xff] %v1510
  %1515 = vst [vmem:[#allocation3 + $0x5c] sm:$0xff] %v1511
  %1516 = vst [vmem:[#allocation3 + $0x64] sm:$0xff] %v1512
  %1517 = vst [vmem:[#allocation3 + $0x6c] sm:$0xf] %v1513
  %v1518 = vld [vmem:[#allocation2 + $0x3f0] sm:$0xff]
  %v1519 = vld [vmem:[#allocation2 + $0x3f8] sm:$0xff]
  %v1520 = vld [vmem:[#allocation2 + $0x400] sm:$0xff]
  %v1521 = vld [vmem:[#allocation2 + $0x408] sm:$0xf]
  %v1522 = vld [vmem:[#allocation2 + $0x40c] sm:$0xff]
  %v1523 = vld [vmem:[#allocation2 + $0x414] sm:$0xff]
  %v1524 = vld [vmem:[#allocation2 + $0x41c] sm:$0xff]
  %v1525 = vld [vmem:[#allocation2 + $0x424] sm:$0xf]
  %v1526 = vmax.f32 %v1518, %v1522
  %v1527 = vmax.f32 %v1519, %v1523
  %v1528 = vmax.f32 %v1520, %v1524
  %v1529 = vmax.f32 %v1521, %v1525
  %1530 = vst [vmem:[#allocation3 + $0x70] sm:$0xff] %v1526
  %1531 = vst [vmem:[#allocation3 + $0x78] sm:$0xff] %v1527
  %1532 = vst [vmem:[#allocation3 + $0x80] sm:$0xff] %v1528
  %1533 = vst [vmem:[#allocation3 + $0x88] sm:$0xf] %v1529
  %v1534 = vld [vmem:[#allocation2 + $0x428] sm:$0xff]
  %v1535 = vld [vmem:[#allocation2 + $0x430] sm:$0xff]
  %v1536 = vld [vmem:[#allocation2 + $0x438] sm:$0xff]
  %v1537 = vld [vmem:[#allocation2 + $0x440] sm:$0xf]
  %v1538 = vld [vmem:[#allocation2 + $0x444] sm:$0xff]
  %v1539 = vld [vmem:[#allocation2 + $0x44c] sm:$0xff]
  %v1540 = vld [vmem:[#allocation2 + $0x454] sm:$0xff]
  %v1541 = vld [vmem:[#allocation2 + $0x45c] sm:$0xf]
  %v1542 = vmax.f32 %v1534, %v1538
  %v1543 = vmax.f32 %v1535, %v1539
  %v1544 = vmax.f32 %v1536, %v1540
  %v1545 = vmax.f32 %v1537, %v1541
  %1546 = vst [vmem:[#allocation3 + $0x8c] sm:$0xff] %v1542
  %1547 = vst [vmem:[#allocation3 + $0x94] sm:$0xff] %v1543
  %1548 = vst [vmem:[#allocation3 + $0x9c] sm:$0xff] %v1544
  %1549 = vst [vmem:[#allocation3 + $0xa4] sm:$0xf] %v1545
  %v1550 = vld [vmem:[#allocation2 + $0x460] sm:$0xff]
  %v1551 = vld [vmem:[#allocation2 + $0x468] sm:$0xff]
  %v1552 = vld [vmem:[#allocation2 + $0x470] sm:$0xff]
  %v1553 = vld [vmem:[#allocation2 + $0x478] sm:$0xf]
  %v1554 = vld [vmem:[#allocation2 + $0x47c] sm:$0xff]
  %v1555 = vld [vmem:[#allocation2 + $0x484] sm:$0xff]
  %v1556 = vld [vmem:[#allocation2 + $0x48c] sm:$0xff]
  %v1557 = vld [vmem:[#allocation2 + $0x494] sm:$0xf]
  %v1558 = vmax.f32 %v1550, %v1554
  %v1559 = vmax.f32 %v1551, %v1555
  %v1560 = vmax.f32 %v1552, %v1556
  %v1561 = vmax.f32 %v1553, %v1557
  %1562 = vst [vmem:[#allocation3 + $0xa8] sm:$0xff] %v1558
  %1563 = vst [vmem:[#allocation3 + $0xb0] sm:$0xff] %v1559
  %1564 = vst [vmem:[#allocation3 + $0xb8] sm:$0xff] %v1560
  %1565 = vst [vmem:[#allocation3 + $0xc0] sm:$0xf] %v1561
  %v1566 = vld [vmem:[#allocation2 + $0x498] sm:$0xff]
  %v1567 = vld [vmem:[#allocation2 + $0x4a0] sm:$0xff]
  %v1568 = vld [vmem:[#allocation2 + $0x4a8] sm:$0xff]
  %v1569 = vld [vmem:[#allocation2 + $0x4b0] sm:$0xf]
  %v1570 = vld [vmem:[#allocation2 + $0x4b4] sm:$0xff]
  %v1571 = vld [vmem:[#allocation2 + $0x4bc] sm:$0xff]
  %v1572 = vld [vmem:[#allocation2 + $0x4c4] sm:$0xff]
  %v1573 = vld [vmem:[#allocation2 + $0x4cc] sm:$0xf]
  %v1574 = vmax.f32 %v1566, %v1570
  %v1575 = vmax.f32 %v1567, %v1571
  %v1576 = vmax.f32 %v1568, %v1572
  %v1577 = vmax.f32 %v1569, %v1573
  %1578 = vst [vmem:[#allocation3 + $0xc4] sm:$0xff] %v1574
  %1579 = vst [vmem:[#allocation3 + $0xcc] sm:$0xff] %v1575
  %1580 = vst [vmem:[#allocation3 + $0xd4] sm:$0xff] %v1576
  %1581 = vst [vmem:[#allocation3 + $0xdc] sm:$0xf] %v1577
  %v1582 = vld [vmem:[#allocation2 + $0x4d0] sm:$0xff]
  %v1583 = vld [vmem:[#allocation2 + $0x4d8] sm:$0xff]
  %v1584 = vld [vmem:[#allocation2 + $0x4e0] sm:$0xff]
  %v1585 = vld [vmem:[#allocation2 + $0x4e8] sm:$0xf]
  %v1586 = vld [vmem:[#allocation2 + $0x4ec] sm:$0xff]
  %v1587 = vld [vmem:[#allocation2 + $0x4f4] sm:$0xff]
  %v1588 = vld [vmem:[#allocation2 + $0x4fc] sm:$0xff]
  %v1589 = vld [vmem:[#allocation2 + $0x504] sm:$0xf]
  %v1590 = vmax.f32 %v1582, %v1586
  %v1591 = vmax.f32 %v1583, %v1587
  %v1592 = vmax.f32 %v1584, %v1588
  %v1593 = vmax.f32 %v1585, %v1589
  %1594 = vst [vmem:[#allocation3 + $0xe0] sm:$0xff] %v1590
  %1595 = vst [vmem:[#allocation3 + $0xe8] sm:$0xff] %v1591
  %1596 = vst [vmem:[#allocation3 + $0xf0] sm:$0xff] %v1592
  %1597 = vst [vmem:[#allocation3 + $0xf8] sm:$0xf] %v1593
  %v1598 = vld [vmem:[#allocation2 + $0x508] sm:$0xff]
  %v1599 = vld [vmem:[#allocation2 + $0x510] sm:$0xff]
  %v1600 = vld [vmem:[#allocation2 + $0x518] sm:$0xff]
  %v1601 = vld [vmem:[#allocation2 + $0x520] sm:$0xf]
  %v1602 = vld [vmem:[#allocation2 + $0x524] sm:$0xff]
  %v1603 = vld [vmem:[#allocation2 + $0x52c] sm:$0xff]
  %v1604 = vld [vmem:[#allocation2 + $0x534] sm:$0xff]
  %v1605 = vld [vmem:[#allocation2 + $0x53c] sm:$0xf]
  %v1606 = vmax.f32 %v1598, %v1602
  %v1607 = vmax.f32 %v1599, %v1603
  %v1608 = vmax.f32 %v1600, %v1604
  %v1609 = vmax.f32 %v1601, %v1605
  %1610 = vst [vmem:[#allocation3 + $0xfc] sm:$0xff] %v1606
  %1611 = vst [vmem:[#allocation3 + $0x104] sm:$0xff] %v1607
  %1612 = vst [vmem:[#allocation3 + $0x10c] sm:$0xff] %v1608
  %1613 = vst [vmem:[#allocation3 + $0x114] sm:$0xf] %v1609
  %v1614 = vld [vmem:[#allocation2 + $0x540] sm:$0xff]
  %v1615 = vld [vmem:[#allocation2 + $0x548] sm:$0xff]
  %v1616 = vld [vmem:[#allocation2 + $0x550] sm:$0xff]
  %v1617 = vld [vmem:[#allocation2 + $0x558] sm:$0xf]
  %v1618 = vld [vmem:[#allocation2 + $0x55c] sm:$0xff]
  %v1619 = vld [vmem:[#allocation2 + $0x564] sm:$0xff]
  %v1620 = vld [vmem:[#allocation2 + $0x56c] sm:$0xff]
  %v1621 = vld [vmem:[#allocation2 + $0x574] sm:$0xf]
  %v1622 = vmax.f32 %v1614, %v1618
  %v1623 = vmax.f32 %v1615, %v1619
  %v1624 = vmax.f32 %v1616, %v1620
  %v1625 = vmax.f32 %v1617, %v1621
  %1626 = vst [vmem:[#allocation3 + $0x118] sm:$0xff] %v1622
  %1627 = vst [vmem:[#allocation3 + $0x120] sm:$0xff] %v1623
  %1628 = vst [vmem:[#allocation3 + $0x128] sm:$0xff] %v1624
  %1629 = vst [vmem:[#allocation3 + $0x130] sm:$0xf] %v1625
  %v1630 = vld [vmem:[#allocation2 + $0x578] sm:$0xff]
  %v1631 = vld [vmem:[#allocation2 + $0x580] sm:$0xff]
  %v1632 = vld [vmem:[#allocation2 + $0x588] sm:$0xff]
  %v1633 = vld [vmem:[#allocation2 + $0x590] sm:$0xf]
  %v1634 = vld [vmem:[#allocation2 + $0x594] sm:$0xff]
  %v1635 = vld [vmem:[#allocation2 + $0x59c] sm:$0xff]
  %v1636 = vld [vmem:[#allocation2 + $0x5a4] sm:$0xff]
  %v1637 = vld [vmem:[#allocation2 + $0x5ac] sm:$0xf]
  %v1638 = vmax.f32 %v1630, %v1634
  %v1639 = vmax.f32 %v1631, %v1635
  %v1640 = vmax.f32 %v1632, %v1636
  %v1641 = vmax.f32 %v1633, %v1637
  %1642 = vst [vmem:[#allocation3 + $0x134] sm:$0xff] %v1638
  %1643 = vst [vmem:[#allocation3 + $0x13c] sm:$0xff] %v1639
  %1644 = vst [vmem:[#allocation3 + $0x144] sm:$0xff] %v1640
  %1645 = vst [vmem:[#allocation3 + $0x14c] sm:$0xf] %v1641
  %v1646 = vld [vmem:[#allocation2 + $0x5b0] sm:$0xff]
  %v1647 = vld [vmem:[#allocation2 + $0x5b8] sm:$0xff]
  %v1648 = vld [vmem:[#allocation2 + $0x5c0] sm:$0xff]
  %v1649 = vld [vmem:[#allocation2 + $0x5c8] sm:$0xf]
  %v1650 = vld [vmem:[#allocation2 + $0x5cc] sm:$0xff]
  %v1651 = vld [vmem:[#allocation2 + $0x5d4] sm:$0xff]
  %v1652 = vld [vmem:[#allocation2 + $0x5dc] sm:$0xff]
  %v1653 = vld [vmem:[#allocation2 + $0x5e4] sm:$0xf]
  %v1654 = vmax.f32 %v1646, %v1650
  %v1655 = vmax.f32 %v1647, %v1651
  %v1656 = vmax.f32 %v1648, %v1652
  %v1657 = vmax.f32 %v1649, %v1653
  %1658 = vst [vmem:[#allocation3 + $0x150] sm:$0xff] %v1654
  %1659 = vst [vmem:[#allocation3 + $0x158] sm:$0xff] %v1655
  %1660 = vst [vmem:[#allocation3 + $0x160] sm:$0xff] %v1656
  %1661 = vst [vmem:[#allocation3 + $0x168] sm:$0xf] %v1657
  %v1662 = vld [vmem:[#allocation2 + $0x5e8] sm:$0xff]
  %v1663 = vld [vmem:[#allocation2 + $0x5f0] sm:$0xff]
  %v1664 = vld [vmem:[#allocation2 + $0x5f8] sm:$0xff]
  %v1665 = vld [vmem:[#allocation2 + $0x600] sm:$0xf]
  %v1666 = vld [vmem:[#allocation2 + $0x604] sm:$0xff]
  %v1667 = vld [vmem:[#allocation2 + $0x60c] sm:$0xff]
  %v1668 = vld [vmem:[#allocation2 + $0x614] sm:$0xff]
  %v1669 = vld [vmem:[#allocation2 + $0x61c] sm:$0xf]
  %v1670 = vmax.f32 %v1662, %v1666
  %v1671 = vmax.f32 %v1663, %v1667
  %v1672 = vmax.f32 %v1664, %v1668
  %v1673 = vmax.f32 %v1665, %v1669
  %1674 = vst [vmem:[#allocation3 + $0x16c] sm:$0xff] %v1670
  %1675 = vst [vmem:[#allocation3 + $0x174] sm:$0xff] %v1671
  %1676 = vst [vmem:[#allocation3 + $0x17c] sm:$0xff] %v1672
  %1677 = vst [vmem:[#allocation3 + $0x184] sm:$0xf] %v1673
  %v1678 = vld [vmem:[#allocation3] ss:$2 sm:$0xff]
  %v1679 = vld [vmem:[%s1253] ss:$2 sm:$0xff]
  %v1680 = vld [vmem:[%s1255] ss:$2 sm:$0xff]
  %v1681 = vld [vmem:[%s1257] ss:$2 sm:$0xff]
  %v1682 = vld [vmem:[%s1259] ss:$2 sm:$0xff]
  %v1683 = vld [vmem:[%s1261] ss:$2 sm:$0xff]
  %v1684 = vld [vmem:[%s1263] ss:$2 sm:$0xff]
  %v1685 = vld [vmem:[%s1265] ss:$2 sm:$0xff]
  %v1686 = vld [vmem:[%s1267] ss:$2 sm:$0xff]
  %v1687 = vld [vmem:[%s1269] ss:$2 sm:$0xff]
  %v1688 = vld [vmem:[%s1271] ss:$2 sm:$0xff]
  %v1689 = vld [vmem:[%s1273] ss:$2 sm:$0xff]
  %v1690 = vld [vmem:[%s1275] ss:$2 sm:$0xff]
  %v1691 = vld [vmem:[%s1277] ss:$2 sm:$0xff]
  %v1692 = vld [vmem:[%s1279] ss:$2 sm:$0xff]
  %v1693 = vld [vmem:[%s1281] ss:$2 sm:$0xff]
  %v1694 = vld [vmem:[%s1283] ss:$2 sm:$0xff]
  %v1695 = vld [vmem:[%s1285] ss:$2 sm:$0xff]
  %v1696 = vld [vmem:[%s1287] ss:$2 sm:$0xff]
  %v1697 = vld [vmem:[%s1289] ss:$2 sm:$0xff]
  %v1698 = vld [vmem:[%s1291] ss:$2 sm:$0xff]
  %v1699 = vld [vmem:[%s1293] ss:$2 sm:$0xff]
  %v1700 = vld [vmem:[%s1295] ss:$2 sm:$0xff]
  %v1701 = vld [vmem:[%s1297] ss:$2 sm:$0xff]
  %v1702 = vld [vmem:[%s1299] ss:$2 sm:$0xf]
  %v1703 = vld [vmem:[%s1301] ss:$2 sm:$0xff]
  %v1704 = vld [vmem:[%s1303] ss:$2 sm:$0xff]
  %v1705 = vld [vmem:[%s1305] ss:$2 sm:$0xff]
  %v1706 = vld [vmem:[%s1307] ss:$2 sm:$0xff]
  %v1707 = vld [vmem:[%s1309] ss:$2 sm:$0xff]
  %v1708 = vld [vmem:[%s1311] ss:$2 sm:$0xff]
  %v1709 = vld [vmem:[%s1313] ss:$2 sm:$0xff]
  %v1710 = vld [vmem:[%s1315] ss:$2 sm:$0xff]
  %v1711 = vld [vmem:[%s1317] ss:$2 sm:$0xff]
  %v1712 = vld [vmem:[%s1319] ss:$2 sm:$0xff]
  %v1713 = vld [vmem:[%s1321] ss:$2 sm:$0xff]
  %v1714 = vld [vmem:[%s1323] ss:$2 sm:$0xff]
  %v1715 = vld [vmem:[%s1325] ss:$2 sm:$0xff]
  %v1716 = vld [vmem:[%s1327] ss:$2 sm:$0xff]
  %v1717 = vld [vmem:[%s1329] ss:$2 sm:$0xff]
  %v1718 = vld [vmem:[%s1331] ss:$2 sm:$0xff]
  %v1719 = vld [vmem:[%s1333] ss:$2 sm:$0xff]
  %v1720 = vld [vmem:[%s1335] ss:$2 sm:$0xff]
  %v1721 = vld [vmem:[%s1337] ss:$2 sm:$0xff]
  %v1722 = vld [vmem:[%s1339] ss:$2 sm:$0xff]
  %v1723 = vld [vmem:[%s1341] ss:$2 sm:$0xff]
  %v1724 = vld [vmem:[%s1343] ss:$2 sm:$0xff]
  %v1725 = vld [vmem:[%s1345] ss:$2 sm:$0xff]
  %v1726 = vld [vmem:[%s1347] ss:$2 sm:$0xff]
  %v1727 = vld [vmem:[%s1349] ss:$2 sm:$0xf]
  %v1728 = vmax.f32 %v1678, %v1703
  %v1729 = vmax.f32 %v1679, %v1704
  %v1730 = vmax.f32 %v1680, %v1705
  %v1731 = vmax.f32 %v1681, %v1706
  %v1732 = vmax.f32 %v1682, %v1707
  %v1733 = vmax.f32 %v1683, %v1708
  %v1734 = vmax.f32 %v1684, %v1709
  %v1735 = vmax.f32 %v1685, %v1710
  %v1736 = vmax.f32 %v1686, %v1711
  %v1737 = vmax.f32 %v1687, %v1712
  %v1738 = vmax.f32 %v1688, %v1713
  %v1739 = vmax.f32 %v1689, %v1714
  %v1740 = vmax.f32 %v1690, %v1715
  %v1741 = vmax.f32 %v1691, %v1716
  %v1742 = vmax.f32 %v1692, %v1717
  %v1743 = vmax.f32 %v1693, %v1718
  %v1744 = vmax.f32 %v1694, %v1719
  %v1745 = vmax.f32 %v1695, %v1720
  %v1746 = vmax.f32 %v1696, %v1721
  %v1747 = vmax.f32 %v1697, %v1722
  %v1748 = vmax.f32 %v1698, %v1723
  %v1749 = vmax.f32 %v1699, %v1724
  %v1750 = vmax.f32 %v1700, %v1725
  %v1751 = vmax.f32 %v1701, %v1726
  %v1752 = vmax.f32 %v1702, %v1727
  %v1753 = vadd.f32 %v1728, %v1377
  %v1754 = vadd.f32 %v1729, %v1377
  %v1755 = vadd.f32 %v1730, %v1377
  %v1756 = vadd.f32 %v1731, %v1377
  %v1757 = vadd.f32 %v1732, %v1377
  %v1758 = vadd.f32 %v1733, %v1377
  %v1759 = vadd.f32 %v1734, %v1377
  %v1760 = vadd.f32 %v1735, %v1377
  %v1761 = vadd.f32 %v1736, %v1377
  %v1762 = vadd.f32 %v1737, %v1377
  %v1763 = vadd.f32 %v1738, %v1377
  %v1764 = vadd.f32 %v1739, %v1377
  %v1765 = vadd.f32 %v1740, %v1377
  %v1766 = vadd.f32 %v1741, %v1377
  %v1767 = vadd.f32 %v1742, %v1377
  %v1768 = vadd.f32 %v1743, %v1377
  %v1769 = vadd.f32 %v1744, %v1377
  %v1770 = vadd.f32 %v1745, %v1377
  %v1771 = vadd.f32 %v1746, %v1377
  %v1772 = vadd.f32 %v1747, %v1377
  %v1773 = vadd.f32 %v1748, %v1377
  %v1774 = vadd.f32 %v1749, %v1377
  %v1775 = vadd.f32 %v1750, %v1377
  %v1776 = vadd.f32 %v1751, %v1377
  %v1777 = vadd.f32 %v1752, %v1377
  %v1778 = vmax.f32 %v1753, 0.0
  %v1779 = vmax.f32 %v1754, 0.0
  %v1780 = vmax.f32 %v1755, 0.0
  %v1781 = vmax.f32 %v1756, 0.0
  %v1782 = vmax.f32 %v1757, 0.0
  %v1783 = vmax.f32 %v1758, 0.0
  %v1784 = vmax.f32 %v1759, 0.0
  %v1785 = vmax.f32 %v1760, 0.0
  %v1786 = vmax.f32 %v1761, 0.0
  %v1787 = vmax.f32 %v1762, 0.0
  %v1788 = vmax.f32 %v1763, 0.0
  %v1789 = vmax.f32 %v1764, 0.0
  %v1790 = vmax.f32 %v1765, 0.0
  %v1791 = vmax.f32 %v1766, 0.0
  %v1792 = vmax.f32 %v1767, 0.0
  %v1793 = vmax.f32 %v1768, 0.0
  %v1794 = vmax.f32 %v1769, 0.0
  %v1795 = vmax.f32 %v1770, 0.0
  %v1796 = vmax.f32 %v1771, 0.0
  %v1797 = vmax.f32 %v1772, 0.0
  %v1798 = vmax.f32 %v1773, 0.0
  %v1799 = vmax.f32 %v1774, 0.0
  %v1800 = vmax.f32 %v1775, 0.0
  %v1801 = vmax.f32 %v1776, 0.0
  %v1802 = vmax.f32 %v1777, 0.0
  %s1803 = scalar_lea.vmem %s3, 200
  %1804 = vst [vmem:[%s1803] sm:$0xff] %v1778
  %1805 = vst [vmem:[%s1803 + $0x8] sm:$0xff] %v1779
  %1806 = vst [vmem:[%s1803 + $0x10] sm:$0xff] %v1780
  %1807 = vst [vmem:[%s1803 + $0x18] sm:$0xff] %v1781
  %1808 = vst [vmem:[%s1803 + $0x20] sm:$0xff] %v1782
  %1809 = vst [vmem:[%s1803 + $0x28] sm:$0xff] %v1783
  %1810 = vst [vmem:[%s1803 + $0x30] sm:$0xff] %v1784
  %1811 = vst [vmem:[%s1803 + $0x38] sm:$0xff] %v1785
  %1812 = vst [vmem:[%s1803 + $0x40] sm:$0xff] %v1786
  %1813 = vst [vmem:[%s1803 + $0x48] sm:$0xff] %v1787
  %1814 = vst [vmem:[%s1803 + $0x50] sm:$0xff] %v1788
  %1815 = vst [vmem:[%s1803 + $0x58] sm:$0xff] %v1789
  %1816 = vst [vmem:[%s1803 + $0x60] sm:$0xff] %v1790
  %1817 = vst [vmem:[%s1803 + $0x68] sm:$0xff] %v1791
  %1818 = vst [vmem:[%s1803 + $0x70] sm:$0xff] %v1792
  %1819 = vst [vmem:[%s1803 + $0x78] sm:$0xff] %v1793
  %1820 = vst [vmem:[%s1803 + $0x80] sm:$0xff] %v1794
  %1821 = vst [vmem:[%s1803 + $0x88] sm:$0xff] %v1795
  %1822 = vst [vmem:[%s1803 + $0x90] sm:$0xff] %v1796
  %1823 = vst [vmem:[%s1803 + $0x98] sm:$0xff] %v1797
  %1824 = vst [vmem:[%s1803 + $0xa0] sm:$0xff] %v1798
  %1825 = vst [vmem:[%s1803 + $0xa8] sm:$0xff] %v1799
  %1826 = vst [vmem:[%s1803 + $0xb0] sm:$0xff] %v1800
  %1827 = vst [vmem:[%s1803 + $0xb8] sm:$0xff] %v1801
  %1828 = vst [vmem:[%s1803 + $0xc0] sm:$0xf] %v1802
  // Predicated region
  $region14: #{net_forward.3} parent=0 // pred_check
    _
  $region15: #{net_forward.3} parent=0 // pred_check_branch
    %1830 = sbr.rel (0) target = $region17
  $region16: #{net_forward.3} parent=0 // pred_region
    _
  $region17: #{net_forward.3} parent=0 // pred_fallthru
    _
  // Predicated region
  $region18: #{net_forward.3} parent=0 // pred_check
    _
  $region19: #{net_forward.3} parent=0 // pred_check_branch
    %1832 = sbr.rel (0) target = $region21
  $region20: #{net_forward.3} parent=0 // pred_region
    _
  $region21: #{net_forward.3} parent=0 // pred_fallthru
    _

// kernel: net_forward.4
$region0: #{net_forward.4}
  #allocation0 [shape = 'u32[]', space=smem, size = 0x4, offset = 0x4, fixed_abs, tag = 'smem constant byte address 0x4 - core index']
  #allocation1 [shape = 'u32[72,128]{1,0:T(1,128)}', space=vmem, size = 0x9000, scoped, tag = 'internal scratch']
  #allocation2 [shape = 'f32[200,128]{1,0:T(8,128)}', space=vmem, size = 0x19000, scoped, tag = 'scratch operand']
  #allocation3 [shape = 'f32[50,128]{1,0:T(8,128)}', space=vmem, size = 0x7000, scoped, tag = 'scratch operand']
  %s0 = inlined_call_operand.vmem [shape: f32[200,256], index: 0, kind: input, shape index: {}]
  %s1 = inlined_call_operand.vmem [shape: f32[256,128], index: 1, kind: input, shape index: {}]
  %s2 = inlined_call_operand.vmem [shape: f32[1,128], index: 2, kind: input, shape index: {}]
  %s3 = inlined_call_operand.vmem [shape: f32[2,25,128], index: 3, kind: output, shape index: {}]
  %s4 = sld [smem:[#allocation0]]
  $region22: #{net_forward.4} parent=0
    _
  %s6 = ssub.s32 1, %s4
  %s7 = scalar_select 0, %s6, %s4
  // Predicated region
  $region2: #{net_forward.4} parent=0 // pred_check
    _
  $region3: #{net_forward.4} parent=0 // pred_check_branch
    %9 = sbr.rel (0) target = $region5
  $region4: #{net_forward.4} parent=0 // pred_region
    _
  $region5: #{net_forward.4} parent=0 // pred_fallthru
    _
  // Predicated region
  $region6: #{net_forward.4} parent=0 // pred_check
    _
  $region7: #{net_forward.4} parent=0 // pred_check_branch
    %11 = sbr.rel (0) target = $region9
  $region8: #{net_forward.4} parent=0 // pred_region
    _
  $region9: #{net_forward.4} parent=0 // pred_fallthru
    _
  // Predicated region
  $region10: #{net_forward.4} parent=0 // pred_check
    _
  $region11: #{net_forward.4} parent=0 // pred_check_branch
    %13 = sbr.rel (0) target = $region13
  $region12: #{net_forward.4} parent=0 // pred_region
    _
  $region13: #{net_forward.4} parent=0 // pred_fallthru
    _
  %v14 = vld [vmem:[%s0] sm:$0xff]
  %v15 = vld [vmem:[%s0 + $0x8] sm:$0xff]
  %v16 = vld [vmem:[%s0 + $0x10] sm:$0xff]
  %v17 = vld [vmem:[%s0 + $0x18] sm:$0xff]
  %v18 = vld [vmem:[%s0 + $0x20] sm:$0xff]
  %v19 = vld [vmem:[%s0 + $0x28] sm:$0xff]
  %v20 = vld [vmem:[%s0 + $0x30] sm:$0xff]
  %v21 = vld [vmem:[%s0 + $0x38] sm:$0xff]
  %v22 = vld [vmem:[%s0 + $0x40] sm:$0xff]
  %v23 = vld [vmem:[%s0 + $0x48] sm:$0xff]
  %v24 = vld [vmem:[%s0 + $0x50] sm:$0xff]
  %v25 = vld [vmem:[%s0 + $0x58] sm:$0xff]
  %v26 = vld [vmem:[%s0 + $0x60] sm:$0xff]
  %v27 = vld [vmem:[%s0 + $0x68] sm:$0xff]
  %v28 = vld [vmem:[%s0 + $0x70] sm:$0xff]
  %v29 = vld [vmem:[%s0 + $0x78] sm:$0xff]
  %v30 = vld [vmem:[%s0 + $0x80] sm:$0xff]
  %v31 = vld [vmem:[%s0 + $0x88] sm:$0xff]
  %v32 = vld [vmem:[%s0 + $0x90] sm:$0xff]
  %v33 = vld [vmem:[%s0 + $0x98] sm:$0xff]
  %v34 = vld [vmem:[%s0 + $0xa0] sm:$0xff]
  %v35 = vld [vmem:[%s0 + $0xa8] sm:$0xff]
  %v36 = vld [vmem:[%s0 + $0xb0] sm:$0xff]
  %v37 = vld [vmem:[%s0 + $0xb8] sm:$0xff]
  %v38 = vld [vmem:[%s0 + $0xc0] sm:$0xff]
  %v39 = vld [vmem:[%s0 + $0xc8] sm:$0xff]
  %v40 = vld [vmem:[%s0 + $0xd0] sm:$0xff]
  %v41 = vld [vmem:[%s0 + $0xd8] sm:$0xff]
  %v42 = vld [vmem:[%s0 + $0xe0] sm:$0xff]
  %v43 = vld [vmem:[%s0 + $0xe8] sm:$0xff]
  %v44 = vld [vmem:[%s0 + $0xf0] sm:$0xff]
  %v45 = vld [vmem:[%s0 + $0xf8] sm:$0xff]
  %v46 = vld [vmem:[%s0 + $0x100] sm:$0xff]
  %v47 = vld [vmem:[%s0 + $0x108] sm:$0xff]
  %v48 = vld [vmem:[%s0 + $0x110] sm:$0xff]
  %v49 = vld [vmem:[%s0 + $0x118] sm:$0xff]
  %v50 = vld [vmem:[%s0 + $0x120] sm:$0xff]
  %v51 = vld [vmem:[%s0 + $0x128] sm:$0xff]
  %v52 = vld [vmem:[%s0 + $0x130] sm:$0xff]
  %v53 = vld [vmem:[%s0 + $0x138] sm:$0xff]
  %v54 = vld [vmem:[%s0 + $0x140] sm:$0xff]
  %v55 = vld [vmem:[%s0 + $0x148] sm:$0xff]
  %v56 = vld [vmem:[%s0 + $0x150] sm:$0xff]
  %v57 = vld [vmem:[%s0 + $0x158] sm:$0xff]
  %v58 = vld [vmem:[%s0 + $0x160] sm:$0xff]
  %v59 = vld [vmem:[%s0 + $0x168] sm:$0xff]
  %v60 = vld [vmem:[%s0 + $0x170] sm:$0xff]
  %v61 = vld [vmem:[%s0 + $0x178] sm:$0xff]
  %v62 = vld [vmem:[%s0 + $0x180] sm:$0xff]
  %v63 = vld [vmem:[%s0 + $0x188] sm:$0xff]
  %v64 = vld [vmem:[%s1] sm:$0xff]
  %v65 = vld [vmem:[%s1 + $0x8] sm:$0xff]
  %v66 = vld [vmem:[%s1 + $0x10] sm:$0xff]
  %v67 = vld [vmem:[%s1 + $0x18] sm:$0xff]
  %v68 = vld [vmem:[%s1 + $0x20] sm:$0xff]
  %v69 = vld [vmem:[%s1 + $0x28] sm:$0xff]
  %v70 = vld [vmem:[%s1 + $0x30] sm:$0xff]
  %v71 = vld [vmem:[%s1 + $0x38] sm:$0xff]
  %v72 = vld [vmem:[%s1 + $0x40] sm:$0xff]
  %v73 = vld [vmem:[%s1 + $0x48] sm:$0xff]
  %v74 = vld [vmem:[%s1 + $0x50] sm:$0xff]
  %v75 = vld [vmem:[%s1 + $0x58] sm:$0xff]
  %v76 = vld [vmem:[%s1 + $0x60] sm:$0xff]
  %v77 = vld [vmem:[%s1 + $0x68] sm:$0xff]
  %v78 = vld [vmem:[%s1 + $0x70] sm:$0xff]
  %v79 = vld [vmem:[%s1 + $0x78] sm:$0xff]
  %v80 = vld [vmem:[%s1 + $0x80] sm:$0xff]
  %v81 = vld [vmem:[%s1 + $0x88] sm:$0xff]
  %v82 = vld [vmem:[%s1 + $0x90] sm:$0xff]
  %v83 = vld [vmem:[%s1 + $0x98] sm:$0xff]
  %v84 = vld [vmem:[%s1 + $0xa0] sm:$0xff]
  %v85 = vld [vmem:[%s1 + $0xa8] sm:$0xff]
  %v86 = vld [vmem:[%s1 + $0xb0] sm:$0xff]
  %v87 = vld [vmem:[%s1 + $0xb8] sm:$0xff]
  %v88 = vld [vmem:[%s1 + $0xc0] sm:$0xff]
  %v89 = vld [vmem:[%s1 + $0xc8] sm:$0xff]
  %v90 = vld [vmem:[%s1 + $0xd0] sm:$0xff]
  %v91 = vld [vmem:[%s1 + $0xd8] sm:$0xff]
  %v92 = vld [vmem:[%s1 + $0xe0] sm:$0xff]
  %v93 = vld [vmem:[%s1 + $0xe8] sm:$0xff]
  %v94 = vld [vmem:[%s1 + $0xf0] sm:$0xff]
  %v95 = vld [vmem:[%s1 + $0xf8] sm:$0xff]
  %96 = vmatpush.msra.mxu0 %v79
  %97 = vmatpush.msra.mxu0 %v78
  %98 = vmatpush.msra.mxu0 %v77
  %99 = vmatpush.msra.mxu0 %v76
  %100 = vmatpush.msra.mxu0 %v75
  %101 = vmatpush.msra.mxu0 %v74
  %102 = vmatpush.msra.mxu0 %v73
  %103 = vmatpush.msra.mxu0 %v72
  %104 = vmatpush.msra.mxu0 %v71
  %105 = vmatpush.msra.mxu0 %v70
  %106 = vmatpush.msra.mxu0 %v69
  %107 = vmatpush.msra.mxu0 %v68
  %108 = vmatpush.msra.mxu0 %v67
  %109 = vmatpush.msra.mxu0 %v66
  %110 = vmatpush.msra.mxu0 %v65
  %111 = vmatpush.msra.mxu0 %v64
  %112 = vmatmul.f32.gmra.mxu0 %v14
  %v113 = vpop.f32.mrf.mxu0
  %v114 = vadd.f32 0.0, %v113
  %115 = vmatmul.f32.gmra.mxu0 %v16
  %v116 = vpop.f32.mrf.mxu0
  %v117 = vadd.f32 0.0, %v116
  %118 = vmatmul.f32.gmra.mxu0 %v18
  %v119 = vpop.f32.mrf.mxu0
  %v120 = vadd.f32 0.0, %v119
  %121 = vmatmul.f32.gmra.mxu0 %v20
  %v122 = vpop.f32.mrf.mxu0
  %v123 = vadd.f32 0.0, %v122
  %124 = vmatmul.f32.gmra.mxu0 %v22
  %v125 = vpop.f32.mrf.mxu0
  %v126 = vadd.f32 0.0, %v125
  %127 = vmatmul.f32.gmra.mxu0 %v24
  %v128 = vpop.f32.mrf.mxu0
  %v129 = vadd.f32 0.0, %v128
  %130 = vmatmul.f32.gmra.mxu0 %v26
  %v131 = vpop.f32.mrf.mxu0
  %v132 = vadd.f32 0.0, %v131
  %133 = vmatmul.f32.gmra.mxu0 %v28
  %v134 = vpop.f32.mrf.mxu0
  %v135 = vadd.f32 0.0, %v134
  %136 = vmatmul.f32.gmra.mxu0 %v30
  %v137 = vpop.f32.mrf.mxu0
  %v138 = vadd.f32 0.0, %v137
  %139 = vmatmul.f32.gmra.mxu0 %v32
  %v140 = vpop.f32.mrf.mxu0
  %v141 = vadd.f32 0.0, %v140
  %142 = vmatmul.f32.gmra.mxu0 %v34
  %v143 = vpop.f32.mrf.mxu0
  %v144 = vadd.f32 0.0, %v143
  %145 = vmatmul.f32.gmra.mxu0 %v36
  %v146 = vpop.f32.mrf.mxu0
  %v147 = vadd.f32 0.0, %v146
  %148 = vmatmul.f32.gmra.mxu0 %v38
  %v149 = vpop.f32.mrf.mxu0
  %v150 = vadd.f32 0.0, %v149
  %151 = vmatmul.f32.gmra.mxu0 %v40
  %v152 = vpop.f32.mrf.mxu0
  %v153 = vadd.f32 0.0, %v152
  %154 = vmatmul.f32.gmra.mxu0 %v42
  %v155 = vpop.f32.mrf.mxu0
  %v156 = vadd.f32 0.0, %v155
  %157 = vmatmul.f32.gmra.mxu0 %v44
  %v158 = vpop.f32.mrf.mxu0
  %v159 = vadd.f32 0.0, %v158
  %160 = vmatmul.f32.gmra.mxu0 %v46
  %v161 = vpop.f32.mrf.mxu0
  %v162 = vadd.f32 0.0, %v161
  %163 = vmatmul.f32.gmra.mxu0 %v48
  %v164 = vpop.f32.mrf.mxu0
  %v165 = vadd.f32 0.0, %v164
  %166 = vmatmul.f32.gmra.mxu0 %v50
  %v167 = vpop.f32.mrf.mxu0
  %v168 = vadd.f32 0.0, %v167
  %169 = vmatmul.f32.gmra.mxu0 %v52
  %v170 = vpop.f32.mrf.mxu0
  %v171 = vadd.f32 0.0, %v170
  %172 = vmatmul.f32.gmra.mxu0 %v54
  %v173 = vpop.f32.mrf.mxu0
  %v174 = vadd.f32 0.0, %v173
  %175 = vmatmul.f32.gmra.mxu0 %v56
  %v176 = vpop.f32.mrf.mxu0
  %v177 = vadd.f32 0.0, %v176
  %178 = vmatmul.f32.gmra.mxu0 %v58
  %v179 = vpop.f32.mrf.mxu0
  %v180 = vadd.f32 0.0, %v179
  %181 = vmatmul.f32.gmra.mxu0 %v60
  %v182 = vpop.f32.mrf.mxu0
  %v183 = vadd.f32 0.0, %v182
  %184 = vmatmul.f32.gmra.mxu0 %v62
  %v185 = vpop.f32.mrf.mxu0
  %v186 = vadd.f32 0.0, %v185
  %187 = vdwg.mxu0
  %188 = vmatpush.msra.mxu0 %v95
  %189 = vmatpush.msra.mxu0 %v94
  %190 = vmatpush.msra.mxu0 %v93
  %191 = vmatpush.msra.mxu0 %v92
  %192 = vmatpush.msra.mxu0 %v91
  %193 = vmatpush.msra.mxu0 %v90
  %194 = vmatpush.msra.mxu0 %v89
  %195 = vmatpush.msra.mxu0 %v88
  %196 = vmatpush.msra.mxu0 %v87
  %197 = vmatpush.msra.mxu0 %v86
  %198 = vmatpush.msra.mxu0 %v85
  %199 = vmatpush.msra.mxu0 %v84
  %200 = vmatpush.msra.mxu0 %v83
  %201 = vmatpush.msra.mxu0 %v82
  %202 = vmatpush.msra.mxu0 %v81
  %203 = vmatpush.msra.mxu0 %v80
  %204 = vmatmul.f32.gmra.mxu0 %v15
  %v205 = vpop.f32.mrf.mxu0
  %v206 = vadd.f32 %v114, %v205
  %207 = vmatmul.f32.gmra.mxu0 %v17
  %v208 = vpop.f32.mrf.mxu0
  %v209 = vadd.f32 %v117, %v208
  %210 = vmatmul.f32.gmra.mxu0 %v19
  %v211 = vpop.f32.mrf.mxu0
  %v212 = vadd.f32 %v120, %v211
  %213 = vmatmul.f32.gmra.mxu0 %v21
  %v214 = vpop.f32.mrf.mxu0
  %v215 = vadd.f32 %v123, %v214
  %216 = vmatmul.f32.gmra.mxu0 %v23
  %v217 = vpop.f32.mrf.mxu0
  %v218 = vadd.f32 %v126, %v217
  %219 = vmatmul.f32.gmra.mxu0 %v25
  %v220 = vpop.f32.mrf.mxu0
  %v221 = vadd.f32 %v129, %v220
  %222 = vmatmul.f32.gmra.mxu0 %v27
  %v223 = vpop.f32.mrf.mxu0
  %v224 = vadd.f32 %v132, %v223
  %225 = vmatmul.f32.gmra.mxu0 %v29
  %v226 = vpop.f32.mrf.mxu0
  %v227 = vadd.f32 %v135, %v226
  %228 = vmatmul.f32.gmra.mxu0 %v31
  %v229 = vpop.f32.mrf.mxu0
  %v230 = vadd.f32 %v138, %v229
  %231 = vmatmul.f32.gmra.mxu0 %v33
  %v232 = vpop.f32.mrf.mxu0
  %v233 = vadd.f32 %v141, %v232
  %234 = vmatmul.f32.gmra.mxu0 %v35
  %v235 = vpop.f32.mrf.mxu0
  %v236 = vadd.f32 %v144, %v235
  %237 = vmatmul.f32.gmra.mxu0 %v37
  %v238 = vpop.f32.mrf.mxu0
  %v239 = vadd.f32 %v147, %v238
  %240 = vmatmul.f32.gmra.mxu0 %v39
  %v241 = vpop.f32.mrf.mxu0
  %v242 = vadd.f32 %v150, %v241
  %243 = vmatmul.f32.gmra.mxu0 %v41
  %v244 = vpop.f32.mrf.mxu0
  %v245 = vadd.f32 %v153, %v244
  %246 = vmatmul.f32.gmra.mxu0 %v43
  %v247 = vpop.f32.mrf.mxu0
  %v248 = vadd.f32 %v156, %v247
  %249 = vmatmul.f32.gmra.mxu0 %v45
  %v250 = vpop.f32.mrf.mxu0
  %v251 = vadd.f32 %v159, %v250
  %252 = vmatmul.f32.gmra.mxu0 %v47
  %v253 = vpop.f32.mrf.mxu0
  %v254 = vadd.f32 %v162, %v253
  %255 = vmatmul.f32.gmra.mxu0 %v49
  %v256 = vpop.f32.mrf.mxu0
  %v257 = vadd.f32 %v165, %v256
  %258 = vmatmul.f32.gmra.mxu0 %v51
  %v259 = vpop.f32.mrf.mxu0
  %v260 = vadd.f32 %v168, %v259
  %261 = vmatmul.f32.gmra.mxu0 %v53
  %v262 = vpop.f32.mrf.mxu0
  %v263 = vadd.f32 %v171, %v262
  %264 = vmatmul.f32.gmra.mxu0 %v55
  %v265 = vpop.f32.mrf.mxu0
  %v266 = vadd.f32 %v174, %v265
  %267 = vmatmul.f32.gmra.mxu0 %v57
  %v268 = vpop.f32.mrf.mxu0
  %v269 = vadd.f32 %v177, %v268
  %270 = vmatmul.f32.gmra.mxu0 %v59
  %v271 = vpop.f32.mrf.mxu0
  %v272 = vadd.f32 %v180, %v271
  %273 = vmatmul.f32.gmra.mxu0 %v61
  %v274 = vpop.f32.mrf.mxu0
  %v275 = vadd.f32 %v183, %v274
  %276 = vmatmul.f32.gmra.mxu0 %v63
  %v277 = vpop.f32.mrf.mxu0
  %v278 = vadd.f32 %v186, %v277
  %279 = vdwg.mxu0
  %280 = vst [vmem:[#allocation2] sm:$0xff] %v206
  %281 = vst [vmem:[#allocation2 + $0x8] sm:$0xff] %v209
  %282 = vst [vmem:[#allocation2 + $0x10] sm:$0xff] %v212
  %283 = vst [vmem:[#allocation2 + $0x18] sm:$0xff] %v215
  %284 = vst [vmem:[#allocation2 + $0x20] sm:$0xff] %v218
  %285 = vst [vmem:[#allocation2 + $0x28] sm:$0xff] %v221
  %286 = vst [vmem:[#allocation2 + $0x30] sm:$0xff] %v224
  %287 = vst [vmem:[#allocation2 + $0x38] sm:$0xff] %v227
  %288 = vst [vmem:[#allocation2 + $0x40] sm:$0xff] %v230
  %289 = vst [vmem:[#allocation2 + $0x48] sm:$0xff] %v233
  %290 = vst [vmem:[#allocation2 + $0x50] sm:$0xff] %v236
  %291 = vst [vmem:[#allocation2 + $0x58] sm:$0xff] %v239
  %292 = vst [vmem:[#allocation2 + $0x60] sm:$0xff] %v242
  %293 = vst [vmem:[#allocation2 + $0x68] sm:$0xff] %v245
  %294 = vst [vmem:[#allocation2 + $0x70] sm:$0xff] %v248
  %295 = vst [vmem:[#allocation2 + $0x78] sm:$0xff] %v251
  %296 = vst [vmem:[#allocation2 + $0x80] sm:$0xff] %v254
  %297 = vst [vmem:[#allocation2 + $0x88] sm:$0xff] %v257
  %298 = vst [vmem:[#allocation2 + $0x90] sm:$0xff] %v260
  %299 = vst [vmem:[#allocation2 + $0x98] sm:$0xff] %v263
  %300 = vst [vmem:[#allocation2 + $0xa0] sm:$0xff] %v266
  %301 = vst [vmem:[#allocation2 + $0xa8] sm:$0xff] %v269
  %302 = vst [vmem:[#allocation2 + $0xb0] sm:$0xff] %v272
  %303 = vst [vmem:[#allocation2 + $0xb8] sm:$0xff] %v275
  %304 = vst [vmem:[#allocation2 + $0xc0] sm:$0xff] %v278
  %v305 = vld [vmem:[%s2] sm:$0x1]
  %v306 = vld [vmem:[#allocation2] sm:$0xff]
  %v307 = vld [vmem:[#allocation2 + $0x8] sm:$0x3]
  %v308 = vld [vmem:[#allocation2 + $0xa] sm:$0xff]
  %v309 = vld [vmem:[#allocation2 + $0x12] sm:$0x3]
  %v310 = vmax.f32 %v306, %v308
  %v311 = vmax.f32 %v307, %v309
  %312 = vst [vmem:[#allocation3] sm:$0xff] %v310
  %313 = vst [vmem:[#allocation3 + $0x8] sm:$0x3] %v311
  %v314 = vld [vmem:[#allocation2 + $0x14] sm:$0xff]
  %v315 = vld [vmem:[#allocation2 + $0x1c] sm:$0x3]
  %v316 = vld [vmem:[#allocation2 + $0x1e] sm:$0xff]
  %v317 = vld [vmem:[#allocation2 + $0x26] sm:$0x3]
  %v318 = vmax.f32 %v314, %v316
  %v319 = vmax.f32 %v315, %v317
  %320 = vst [vmem:[#allocation3 + $0xa] sm:$0xff] %v318
  %321 = vst [vmem:[#allocation3 + $0x12] sm:$0x3] %v319
  %v322 = vld [vmem:[#allocation2 + $0x28] sm:$0xff]
  %v323 = vld [vmem:[#allocation2 + $0x30] sm:$0x3]
  %v324 = vld [vmem:[#allocation2 + $0x32] sm:$0xff]
  %v325 = vld [vmem:[#allocation2 + $0x3a] sm:$0x3]
  %v326 = vmax.f32 %v322, %v324
  %v327 = vmax.f32 %v323, %v325
  %328 = vst [vmem:[#allocation3 + $0x14] sm:$0xff] %v326
  %329 = vst [vmem:[#allocation3 + $0x1c] sm:$0x3] %v327
  %v330 = vld [vmem:[#allocation2 + $0x3c] sm:$0xff]
  %v331 = vld [vmem:[#allocation2 + $0x44] sm:$0x3]
  %v332 = vld [vmem:[#allocation2 + $0x46] sm:$0xff]
  %v333 = vld [vmem:[#allocation2 + $0x4e] sm:$0x3]
  %v334 = vmax.f32 %v330, %v332
  %v335 = vmax.f32 %v331, %v333
  %336 = vst [vmem:[#allocation3 + $0x1e] sm:$0xff] %v334
  %337 = vst [vmem:[#allocation3 + $0x26] sm:$0x3] %v335
  %v338 = vld [vmem:[#allocation2 + $0x50] sm:$0xff]
  %v339 = vld [vmem:[#allocation2 + $0x58] sm:$0x3]
  %v340 = vld [vmem:[#allocation2 + $0x5a] sm:$0xff]
  %v341 = vld [vmem:[#allocation2 + $0x62] sm:$0x3]
  %v342 = vmax.f32 %v338, %v340
  %v343 = vmax.f32 %v339, %v341
  %344 = vst [vmem:[#allocation3 + $0x28] sm:$0xff] %v342
  %345 = vst [vmem:[#allocation3 + $0x30] sm:$0x3] %v343
  %v346 = vld [vmem:[#allocation3] ss:$2 sm:$0xff]
  %s347 = scalar_lea.vmem [#allocation3], 16
  %v348 = vld [vmem:[%s347] ss:$2 sm:$0xff]
  %s349 = scalar_lea.vmem [#allocation3], 32
  %v350 = vld [vmem:[%s349] ss:$2 sm:$0xff]
  %s351 = scalar_lea.vmem [#allocation3], 48
  %v352 = vld [vmem:[%s351] ss:$2 sm:$0x1]
  %s353 = scalar_lea.vmem [#allocation3], 1
  %v354 = vld [vmem:[%s353] ss:$2 sm:$0xff]
  %s355 = scalar_lea.vmem [#allocation3], 17
  %v356 = vld [vmem:[%s355] ss:$2 sm:$0xff]
  %s357 = scalar_lea.vmem [#allocation3], 33
  %v358 = vld [vmem:[%s357] ss:$2 sm:$0xff]
  %s359 = scalar_lea.vmem [#allocation3], 49
  %v360 = vld [vmem:[%s359] ss:$2 sm:$0x1]
  %v361 = vmax.f32 %v346, %v354
  %v362 = vmax.f32 %v348, %v356
  %v363 = vmax.f32 %v350, %v358
  %v364 = vmax.f32 %v352, %v360
  %v366 = vperm.slane %v305, 0
  %v368 = vadd.f32 %v361, %v366
  %v369 = vadd.f32 %v362, %v366
  %v370 = vadd.f32 %v363, %v366
  %v371 = vadd.f32 %v364, %v366
  %v372 = vmax.f32 %v368, 0.0
  %v373 = vmax.f32 %v369, 0.0
  %v374 = vmax.f32 %v370, 0.0
  %v375 = vmax.f32 %v371, 0.0
  %376 = vst [vmem:[%s3] sm:$0xff] %v372
  %377 = vst [vmem:[%s3 + $0x8] sm:$0xff] %v373
  %378 = vst [vmem:[%s3 + $0x10] sm:$0xff] %v374
  %379 = vst [vmem:[%s3 + $0x18] sm:$0x1] %v375
  %v380 = vld [vmem:[#allocation2 + $0x64] sm:$0xff]
  %v381 = vld [vmem:[#allocation2 + $0x6c] sm:$0x3]
  %v382 = vld [vmem:[#allocation2 + $0x6e] sm:$0xff]
  %v383 = vld [vmem:[#allocation2 + $0x76] sm:$0x3]
  %v384 = vmax.f32 %v380, %v382
  %v385 = vmax.f32 %v381, %v383
  %386 = vst [vmem:[#allocation3] sm:$0xff] %v384
  %387 = vst [vmem:[#allocation3 + $0x8] sm:$0x3] %v385
  %v388 = vld [vmem:[#allocation2 + $0x78] sm:$0xff]
  %v389 = vld [vmem:[#allocation2 + $0x80] sm:$0x3]
  %v390 = vld [vmem:[#allocation2 + $0x82] sm:$0xff]
  %v391 = vld [vmem:[#allocation2 + $0x8a] sm:$0x3]
  %v392 = vmax.f32 %v388, %v390
  %v393 = vmax.f32 %v389, %v391
  %394 = vst [vmem:[#allocation3 + $0xa] sm:$0xff] %v392
  %395 = vst [vmem:[#allocation3 + $0x12] sm:$0x3] %v393
  %v396 = vld [vmem:[#allocation2 + $0x8c] sm:$0xff]
  %v397 = vld [vmem:[#allocation2 + $0x94] sm:$0x3]
  %v398 = vld [vmem:[#allocation2 + $0x96] sm:$0xff]
  %v399 = vld [vmem:[#allocation2 + $0x9e] sm:$0x3]
  %v400 = vmax.f32 %v396, %v398
  %v401 = vmax.f32 %v397, %v399
  %402 = vst [vmem:[#allocation3 + $0x14] sm:$0xff] %v400
  %403 = vst [vmem:[#allocation3 + $0x1c] sm:$0x3] %v401
  %v404 = vld [vmem:[#allocation2 + $0xa0] sm:$0xff]
  %v405 = vld [vmem:[#allocation2 + $0xa8] sm:$0x3]
  %v406 = vld [vmem:[#allocation2 + $0xaa] sm:$0xff]
  %v407 = vld [vmem:[#allocation2 + $0xb2] sm:$0x3]
  %v408 = vmax.f32 %v404, %v406
  %v409 = vmax.f32 %v405, %v407
  %410 = vst [vmem:[#allocation3 + $0x1e] sm:$0xff] %v408
  %411 = vst [vmem:[#allocation3 + $0x26] sm:$0x3] %v409
  %v412 = vld [vmem:[#allocation2 + $0xb4] sm:$0xff]
  %v413 = vld [vmem:[#allocation2 + $0xbc] sm:$0x3]
  %v414 = vld [vmem:[#allocation2 + $0xbe] sm:$0xff]
  %v415 = vld [vmem:[#allocation2 + $0xc6] sm:$0x3]
  %v416 = vmax.f32 %v412, %v414
  %v417 = vmax.f32 %v413, %v415
  %418 = vst [vmem:[#allocation3 + $0x28] sm:$0xff] %v416
  %419 = vst [vmem:[#allocation3 + $0x30] sm:$0x3] %v417
  %v420 = vld [vmem:[#allocation3] ss:$2 sm:$0xff]
  %v421 = vld [vmem:[%s347] ss:$2 sm:$0xff]
  %v422 = vld [vmem:[%s349] ss:$2 sm:$0xff]
  %v423 = vld [vmem:[%s351] ss:$2 sm:$0x1]
  %v424 = vld [vmem:[%s353] ss:$2 sm:$0xff]
  %v425 = vld [vmem:[%s355] ss:$2 sm:$0xff]
  %v426 = vld [vmem:[%s357] ss:$2 sm:$0xff]
  %v427 = vld [vmem:[%s359] ss:$2 sm:$0x1]
  %v428 = vmax.f32 %v420, %v424
  %v429 = vmax.f32 %v421, %v425
  %v430 = vmax.f32 %v422, %v426
  %v431 = vmax.f32 %v423, %v427
  %v432 = vadd.f32 %v428, %v366
  %v433 = vadd.f32 %v429, %v366
  %v434 = vadd.f32 %v430, %v366
  %v435 = vadd.f32 %v431, %v366
  %v436 = vmax.f32 %v432, 0.0
  %v437 = vmax.f32 %v433, 0.0
  %v438 = vmax.f32 %v434, 0.0
  %v439 = vmax.f32 %v435, 0.0
  %s440 = scalar_lea.vmem %s3, 32
  %441 = vst [vmem:[%s440] sm:$0xff] %v436
  %442 = vst [vmem:[%s440 + $0x8] sm:$0xff] %v437
  %443 = vst [vmem:[%s440 + $0x10] sm:$0xff] %v438
  %444 = vst [vmem:[%s440 + $0x18] sm:$0x1] %v439
  // Predicated region
  $region14: #{net_forward.4} parent=0 // pred_check
    _
  $region15: #{net_forward.4} parent=0 // pred_check_branch
    %446 = sbr.rel (0) target = $region17
  $region16: #{net_forward.4} parent=0 // pred_region
    _
  $region17: #{net_forward.4} parent=0 // pred_fallthru
    _
  // Predicated region
  $region18: #{net_forward.4} parent=0 // pred_check
    _
  $region19: #{net_forward.4} parent=0 // pred_check_branch
    %448 = sbr.rel (0) target = $region21
  $region20: #{net_forward.4} parent=0 // pred_region
    _
  $region21: #{net_forward.4} parent=0 // pred_fallthru
    _

// kernel: net_forward.5
$region0: #{net_forward.5}
  #allocation0 [shape = 'u32[]', space=smem, size = 0x4, offset = 0x4, fixed_abs, tag = 'smem constant byte address 0x4 - core index']
  #allocation1 [shape = 'u32[72,128]{1,0:T(1,128)}', space=vmem, size = 0x9000, scoped, tag = 'internal scratch']
  %s0 = inlined_call_operand.vmem [shape: f32[2,512], index: 0, kind: input, shape index: {}]
  %s1 = inlined_call_operand.vmem [shape: f32[512,128], index: 1, kind: input, shape index: {}]
  %s2 = inlined_call_operand.vmem [shape: f32[1,128], index: 2, kind: input, shape index: {}]
  %s3 = inlined_call_operand.vmem [shape: f32[128,128], index: 3, kind: input, shape index: {}]
  %s4 = inlined_call_operand.vmem [shape: f32[1,128], index: 4, kind: input, shape index: {}]
  %s5 = inlined_call_operand.vmem [shape: f32[128,128], index: 5, kind: input, shape index: {}]
  %s6 = inlined_call_operand.vmem [shape: f32[1,128], index: 6, kind: input, shape index: {}]
  %s7 = inlined_call_operand.hbm [shape: f32[2,128], index: 7, kind: output, shape index: {}]
  %s8 = sld [smem:[#allocation0]]
  $region38: #{net_forward.5} parent=0
    _
  %s10 = ssub.s32 1, %s8
  %s11 = scalar_select 0, %s10, %s8
  $region1: #{net_forward.5} parent=0
    #allocation2 [shape = 'u8[1024]{0}', space=vmem, size = 0x400, scoped, tag = 'output window, operand 0, single buffered']
    #allocation3 [shape = 's32[1]{0}', space=sflag, size = 0x4, scoped, tag = 'scoped memory for net_forward.5']
    %12 = vsyncpa [#allocation3], 0
    // Predicated region
    $region2: #{net_forward.5} parent=1 // pred_check
      _
    $region3: #{net_forward.5} parent=1 // pred_check_branch
      %14 = sbr.rel (0) target = $region5
    $region4: #{net_forward.5} parent=1 // pred_region
      _
    $region5: #{net_forward.5} parent=1 // pred_fallthru
      _
    // Predicated region
    $region6: #{net_forward.5} parent=1 // pred_check
      _
    $region7: #{net_forward.5} parent=1 // pred_check_branch
      %16 = sbr.rel (0) target = $region9
    $region8: #{net_forward.5} parent=1 // pred_region
      _
    $region9: #{net_forward.5} parent=1 // pred_fallthru
      _
    // Predicated region
    $region10: #{net_forward.5} parent=1 // pred_check
      _
    $region11: #{net_forward.5} parent=1 // pred_check_branch
      %18 = sbr.rel (0) target = $region13
    $region12: #{net_forward.5} parent=1 // pred_region
      _
    $region13: #{net_forward.5} parent=1 // pred_fallthru
      _
    // Predicated region
    $region14: #{net_forward.5} parent=1 // pred_check
      _
    $region15: #{net_forward.5} parent=1 // pred_check_branch
      %20 = sbr.rel (0) target = $region17
    $region16: #{net_forward.5} parent=1 // pred_region
      _
    $region17: #{net_forward.5} parent=1 // pred_fallthru
      _
    // Predicated region
    $region18: #{net_forward.5} parent=1 // pred_check
      _
    $region19: #{net_forward.5} parent=1 // pred_check_branch
      %22 = sbr.rel (0) target = $region21
    $region20: #{net_forward.5} parent=1 // pred_region
      _
    $region21: #{net_forward.5} parent=1 // pred_fallthru
      _
    // Predicated region
    $region22: #{net_forward.5} parent=1 // pred_check
      _
    $region23: #{net_forward.5} parent=1 // pred_check_branch
      %24 = sbr.rel (0) target = $region25
    $region24: #{net_forward.5} parent=1 // pred_region
      _
    $region25: #{net_forward.5} parent=1 // pred_fallthru
      _
    // Predicated region
    $region26: #{net_forward.5} parent=1 // pred_check
      _
    $region27: #{net_forward.5} parent=1 // pred_check_branch
      %26 = sbr.rel (0) target = $region29
    $region28: #{net_forward.5} parent=1 // pred_region
      _
    $region29: #{net_forward.5} parent=1 // pred_fallthru
      _
    %v27 = vld [vmem:[%s0] sm:$0xff]
    %v28 = vld [vmem:[%s1] sm:$0xff]
    %v29 = vld [vmem:[%s1 + $0x8] sm:$0xff]
    %v30 = vld [vmem:[%s1 + $0x10] sm:$0xff]
    %v31 = vld [vmem:[%s1 + $0x18] sm:$0xff]
    %v32 = vld [vmem:[%s1 + $0x20] sm:$0xff]
    %v33 = vld [vmem:[%s1 + $0x28] sm:$0xff]
    %v34 = vld [vmem:[%s1 + $0x30] sm:$0xff]
    %v35 = vld [vmem:[%s1 + $0x38] sm:$0xff]
    %v36 = vld [vmem:[%s1 + $0x40] sm:$0xff]
    %v37 = vld [vmem:[%s1 + $0x48] sm:$0xff]
    %v38 = vld [vmem:[%s1 + $0x50] sm:$0xff]
    %v39 = vld [vmem:[%s1 + $0x58] sm:$0xff]
    %v40 = vld [vmem:[%s1 + $0x60] sm:$0xff]
    %v41 = vld [vmem:[%s1 + $0x68] sm:$0xff]
    %v42 = vld [vmem:[%s1 + $0x70] sm:$0xff]
    %v43 = vld [vmem:[%s1 + $0x78] sm:$0xff]
    %v44 = vld [vmem:[%s1 + $0x80] sm:$0xff]
    %v45 = vld [vmem:[%s1 + $0x88] sm:$0xff]
    %v46 = vld [vmem:[%s1 + $0x90] sm:$0xff]
    %v47 = vld [vmem:[%s1 + $0x98] sm:$0xff]
    %v48 = vld [vmem:[%s1 + $0xa0] sm:$0xff]
    %v49 = vld [vmem:[%s1 + $0xa8] sm:$0xff]
    %v50 = vld [vmem:[%s1 + $0xb0] sm:$0xff]
    %v51 = vld [vmem:[%s1 + $0xb8] sm:$0xff]
    %v52 = vld [vmem:[%s1 + $0xc0] sm:$0xff]
    %v53 = vld [vmem:[%s1 + $0xc8] sm:$0xff]
    %v54 = vld [vmem:[%s1 + $0xd0] sm:$0xff]
    %v55 = vld [vmem:[%s1 + $0xd8] sm:$0xff]
    %v56 = vld [vmem:[%s1 + $0xe0] sm:$0xff]
    %v57 = vld [vmem:[%s1 + $0xe8] sm:$0xff]
    %v58 = vld [vmem:[%s1 + $0xf0] sm:$0xff]
    %v59 = vld [vmem:[%s1 + $0xf8] sm:$0xff]
    %v60 = vld [vmem:[%s1 + $0x100] sm:$0xff]
    %v61 = vld [vmem:[%s1 + $0x108] sm:$0xff]
    %v62 = vld [vmem:[%s1 + $0x110] sm:$0xff]
    %v63 = vld [vmem:[%s1 + $0x118] sm:$0xff]
    %v64 = vld [vmem:[%s1 + $0x120] sm:$0xff]
    %v65 = vld [vmem:[%s1 + $0x128] sm:$0xff]
    %v66 = vld [vmem:[%s1 + $0x130] sm:$0xff]
    %v67 = vld [vmem:[%s1 + $0x138] sm:$0xff]
    %v68 = vld [vmem:[%s1 + $0x140] sm:$0xff]
    %v69 = vld [vmem:[%s1 + $0x148] sm:$0xff]
    %v70 = vld [vmem:[%s1 + $0x150] sm:$0xff]
    %v71 = vld [vmem:[%s1 + $0x158] sm:$0xff]
    %v72 = vld [vmem:[%s1 + $0x160] sm:$0xff]
    %v73 = vld [vmem:[%s1 + $0x168] sm:$0xff]
    %v74 = vld [vmem:[%s1 + $0x170] sm:$0xff]
    %v75 = vld [vmem:[%s1 + $0x178] sm:$0xff]
    %v76 = vld [vmem:[%s1 + $0x180] sm:$0xff]
    %v77 = vld [vmem:[%s1 + $0x188] sm:$0xff]
    %v78 = vld [vmem:[%s1 + $0x190] sm:$0xff]
    %v79 = vld [vmem:[%s1 + $0x198] sm:$0xff]
    %v80 = vld [vmem:[%s1 + $0x1a0] sm:$0xff]
    %v81 = vld [vmem:[%s1 + $0x1a8] sm:$0xff]
    %v82 = vld [vmem:[%s1 + $0x1b0] sm:$0xff]
    %v83 = vld [vmem:[%s1 + $0x1b8] sm:$0xff]
    %v84 = vld [vmem:[%s1 + $0x1c0] sm:$0xff]
    %v85 = vld [vmem:[%s1 + $0x1c8] sm:$0xff]
    %v86 = vld [vmem:[%s1 + $0x1d0] sm:$0xff]
    %v87 = vld [vmem:[%s1 + $0x1d8] sm:$0xff]
    %v88 = vld [vmem:[%s1 + $0x1e0] sm:$0xff]
    %v89 = vld [vmem:[%s1 + $0x1e8] sm:$0xff]
    %v90 = vld [vmem:[%s1 + $0x1f0] sm:$0xff]
    %v91 = vld [vmem:[%s1 + $0x1f8] sm:$0xff]
    %v92 = vld [vmem:[%s2] sm:$0x1]
    %v94 = vperm.slane %v92, 0
    %97 = vst [vmem:[#allocation1] ss:$4 sm:$0xff] %v27
    %v98 = vld.sshfl [vmem:[#allocation1] sm:$0xff pattern:$0x73625140]
    %v99 = vld.sshfl [vmem:[#allocation1 + $0x8] sm:$0xff pattern:$0x73625140]
    %v100 = vld.sshfl [vmem:[#allocation1 + $0x10] sm:$0xff pattern:$0x73625140]
    %v101 = vld.sshfl [vmem:[#allocation1 + $0x18] sm:$0xff pattern:$0x73625140]
    %106 = vmatpush.msra.mxu0 %v43
    %107 = vmatpush.msra.mxu0 %v42
    %108 = vmatpush.msra.mxu0 %v41
    %109 = vmatpush.msra.mxu0 %v40
    %110 = vmatpush.msra.mxu0 %v39
    %111 = vmatpush.msra.mxu0 %v38
    %112 = vmatpush.msra.mxu0 %v37
    %113 = vmatpush.msra.mxu0 %v36
    %114 = vmatpush.msra.mxu0 %v35
    %115 = vmatpush.msra.mxu0 %v34
    %116 = vmatpush.msra.mxu0 %v33
    %117 = vmatpush.msra.mxu0 %v32
    %118 = vmatpush.msra.mxu0 %v31
    %119 = vmatpush.msra.mxu0 %v30
    %120 = vmatpush.msra.mxu0 %v29
    %121 = vmatpush.msra.mxu0 %v28
    %122 = vmatmul.f32.gmra.mxu0 %v98
    %v123 = vpop.f32.mrf.mxu0
    %v124 = vadd.f32 %v94, %v123
    %125 = vdwg.mxu0
    %126 = vmatpush.msra.mxu0 %v59
    %127 = vmatpush.msra.mxu0 %v58
    %128 = vmatpush.msra.mxu0 %v57
    %129 = vmatpush.msra.mxu0 %v56
    %130 = vmatpush.msra.mxu0 %v55
    %131 = vmatpush.msra.mxu0 %v54
    %132 = vmatpush.msra.mxu0 %v53
    %133 = vmatpush.msra.mxu0 %v52
    %134 = vmatpush.msra.mxu0 %v51
    %135 = vmatpush.msra.mxu0 %v50
    %136 = vmatpush.msra.mxu0 %v49
    %137 = vmatpush.msra.mxu0 %v48
    %138 = vmatpush.msra.mxu0 %v47
    %139 = vmatpush.msra.mxu0 %v46
    %140 = vmatpush.msra.mxu0 %v45
    %141 = vmatpush.msra.mxu0 %v44
    %142 = vmatmul.f32.gmra.mxu0 %v99
    %v143 = vpop.f32.mrf.mxu0
    %v144 = vadd.f32 %v124, %v143
    %145 = vdwg.mxu0
    %146 = vmatpush.msra.mxu0 %v75
    %147 = vmatpush.msra.mxu0 %v74
    %148 = vmatpush.msra.mxu0 %v73
    %149 = vmatpush.msra.mxu0 %v72
    %150 = vmatpush.msra.mxu0 %v71
    %151 = vmatpush.msra.mxu0 %v70
    %152 = vmatpush.msra.mxu0 %v69
    %153 = vmatpush.msra.mxu0 %v68
    %154 = vmatpush.msra.mxu0 %v67
    %155 = vmatpush.msra.mxu0 %v66
    %156 = vmatpush.msra.mxu0 %v65
    %157 = vmatpush.msra.mxu0 %v64
    %158 = vmatpush.msra.mxu0 %v63
    %159 = vmatpush.msra.mxu0 %v62
    %160 = vmatpush.msra.mxu0 %v61
    %161 = vmatpush.msra.mxu0 %v60
    %162 = vmatmul.f32.gmra.mxu0 %v100
    %v163 = vpop.f32.mrf.mxu0
    %v164 = vadd.f32 %v144, %v163
    %165 = vdwg.mxu0
    %166 = vmatpush.msra.mxu0 %v91
    %167 = vmatpush.msra.mxu0 %v90
    %168 = vmatpush.msra.mxu0 %v89
    %169 = vmatpush.msra.mxu0 %v88
    %170 = vmatpush.msra.mxu0 %v87
    %171 = vmatpush.msra.mxu0 %v86
    %172 = vmatpush.msra.mxu0 %v85
    %173 = vmatpush.msra.mxu0 %v84
    %174 = vmatpush.msra.mxu0 %v83
    %175 = vmatpush.msra.mxu0 %v82
    %176 = vmatpush.msra.mxu0 %v81
    %177 = vmatpush.msra.mxu0 %v80
    %178 = vmatpush.msra.mxu0 %v79
    %179 = vmatpush.msra.mxu0 %v78
    %180 = vmatpush.msra.mxu0 %v77
    %181 = vmatpush.msra.mxu0 %v76
    %182 = vmatmul.f32.gmra.mxu0 %v101
    %v183 = vpop.f32.mrf.mxu0
    %v184 = vadd.f32 %v164, %v183
    %185 = vdwg.mxu0
    %v186 = vmax.f32 %v184, 0.0
    %v187 = vld [vmem:[%s3] sm:$0xff]
    %v188 = vld [vmem:[%s3 + $0x8] sm:$0xff]
    %v189 = vld [vmem:[%s3 + $0x10] sm:$0xff]
    %v190 = vld [vmem:[%s3 + $0x18] sm:$0xff]
    %v191 = vld [vmem:[%s3 + $0x20] sm:$0xff]
    %v192 = vld [vmem:[%s3 + $0x28] sm:$0xff]
    %v193 = vld [vmem:[%s3 + $0x30] sm:$0xff]
    %v194 = vld [vmem:[%s3 + $0x38] sm:$0xff]
    %v195 = vld [vmem:[%s3 + $0x40] sm:$0xff]
    %v196 = vld [vmem:[%s3 + $0x48] sm:$0xff]
    %v197 = vld [vmem:[%s3 + $0x50] sm:$0xff]
    %v198 = vld [vmem:[%s3 + $0x58] sm:$0xff]
    %v199 = vld [vmem:[%s3 + $0x60] sm:$0xff]
    %v200 = vld [vmem:[%s3 + $0x68] sm:$0xff]
    %v201 = vld [vmem:[%s3 + $0x70] sm:$0xff]
    %v202 = vld [vmem:[%s3 + $0x78] sm:$0xff]
    %v203 = vld [vmem:[%s4] sm:$0x1]
    %v205 = vperm.slane %v203, 0
    %207 = vmatpush.msra.mxu0 %v202
    %208 = vmatpush.msra.mxu0 %v201
    %209 = vmatpush.msra.mxu0 %v200
    %210 = vmatpush.msra.mxu0 %v199
    %211 = vmatpush.msra.mxu0 %v198
    %212 = vmatpush.msra.mxu0 %v197
    %213 = vmatpush.msra.mxu0 %v196
    %214 = vmatpush.msra.mxu0 %v195
    %215 = vmatpush.msra.mxu0 %v194
    %216 = vmatpush.msra.mxu0 %v193
    %217 = vmatpush.msra.mxu0 %v192
    %218 = vmatpush.msra.mxu0 %v191
    %219 = vmatpush.msra.mxu0 %v190
    %220 = vmatpush.msra.mxu0 %v189
    %221 = vmatpush.msra.mxu0 %v188
    %222 = vmatpush.msra.mxu0 %v187
    %223 = vmatmul.f32.gmra.mxu0 %v186
    %v224 = vpop.f32.mrf.mxu0
    %v225 = vadd.f32 %v205, %v224
    %226 = vdwg.mxu0
    %v227 = vmax.f32 %v225, 0.0
    %v228 = vld [vmem:[%s5] sm:$0xff]
    %v229 = vld [vmem:[%s5 + $0x8] sm:$0xff]
    %v230 = vld [vmem:[%s5 + $0x10] sm:$0xff]
    %v231 = vld [vmem:[%s5 + $0x18] sm:$0xff]
    %v232 = vld [vmem:[%s5 + $0x20] sm:$0xff]
    %v233 = vld [vmem:[%s5 + $0x28] sm:$0xff]
    %v234 = vld [vmem:[%s5 + $0x30] sm:$0xff]
    %v235 = vld [vmem:[%s5 + $0x38] sm:$0xff]
    %v236 = vld [vmem:[%s5 + $0x40] sm:$0xff]
    %v237 = vld [vmem:[%s5 + $0x48] sm:$0xff]
    %v238 = vld [vmem:[%s5 + $0x50] sm:$0xff]
    %v239 = vld [vmem:[%s5 + $0x58] sm:$0xff]
    %v240 = vld [vmem:[%s5 + $0x60] sm:$0xff]
    %v241 = vld [vmem:[%s5 + $0x68] sm:$0xff]
    %v242 = vld [vmem:[%s5 + $0x70] sm:$0xff]
    %v243 = vld [vmem:[%s5 + $0x78] sm:$0xff]
    %v244 = vld [vmem:[%s6] sm:$0x1]
    %v246 = vperm.slane %v244, 0
    %248 = vmatpush.msra.mxu0 %v243
    %249 = vmatpush.msra.mxu0 %v242
    %250 = vmatpush.msra.mxu0 %v241
    %251 = vmatpush.msra.mxu0 %v240
    %252 = vmatpush.msra.mxu0 %v239
    %253 = vmatpush.msra.mxu0 %v238
    %254 = vmatpush.msra.mxu0 %v237
    %255 = vmatpush.msra.mxu0 %v236
    %256 = vmatpush.msra.mxu0 %v235
    %257 = vmatpush.msra.mxu0 %v234
    %258 = vmatpush.msra.mxu0 %v233
    %259 = vmatpush.msra.mxu0 %v232
    %260 = vmatpush.msra.mxu0 %v231
    %261 = vmatpush.msra.mxu0 %v230
    %262 = vmatpush.msra.mxu0 %v229
    %263 = vmatpush.msra.mxu0 %v228
    %264 = vmatmul.f32.gmra.mxu0 %v227
    %v265 = vpop.f32.mrf.mxu0
    %v266 = vadd.f32 %v246, %v265
    %267 = vdwg.mxu0
    %268 = vst [vmem:[#allocation2] sm:$0x3] %v266
    // Predicated region
    $region30: #{net_forward.5} parent=1 // pred_check
      _
    $region31: #{net_forward.5} parent=1 // pred_check_branch
      %270 = sbr.rel (0) target = $region33
    $region32: #{net_forward.5} parent=1 // pred_region
      %272 = vsyncadd [#allocation3], 0
      %s274 = sshll.u32 [#allocation2], 4
      %s275 = int_to_ptr.vmem [resolvable:$true] %s274
      %s276 = sshll.u32 %s7, 4
      %s277 = int_to_ptr.hbm [resolvable:$true] %s276
      %279 = dma.vmem_to_hbm [thread:$0]  %s275, 32, %s277, [#allocation3]
    $region33: #{net_forward.5} parent=1 // pred_fallthru
      _
    // Predicated region
    $region34: #{net_forward.5} parent=1 // pred_check
      _
    $region35: #{net_forward.5} parent=1 // pred_check_branch
      %281 = sbr.rel (0) target = $region37
    $region36: #{net_forward.5} parent=1 // pred_region
      %283 = dma.done [#allocation3], 32
    $region37: #{net_forward.5} parent=1 // pred_fallthru
      _
    %284 = vsyncpa [#allocation3], 1

</llo_original>
